<compile_context>
chip_gen: v7x
topology: tpu7x:2x2x1
jax: 0.10.0
libtpu: 0.0.40
codegen_flags: <defaults>
</compile_context>

<pallas_src>
import math
import numpy as np
import jax
import jax.numpy as jnp
from jax.experimental import pallas as pl
from jax.experimental.pallas import tpu as pltpu

# Sizes implied by the module (opt.n_classes is a free hyper-parameter).
N_CLASSES = 10
L_IN = 1024          # 32 * 32 : length of the conv1 input signal
L1 = 256             # length after conv1 (stride 2) + maxpool(2)
L2 = 64              # length after conv2 (stride 2) + maxpool(2)
C1 = 64              # conv1 output channels
C2 = 128             # conv2 output channels
K = 4                # conv kernel size
# conv2 (k=4, s=2, p=1) fused with maxpool(2) only ever reads the pooled conv1
# signal at positions 4*j + off, off in {-1,..,4}.
OFFSETS = np.array([-1, 0, 1, 2, 3, 4])
N_OFF = 6
BLK_B = 32           # batch elements per grid step (tunable)


def _disc_kernel(x_ref, w1_ref, b1_ref, w2_ref, b2_ref, woutt_ref, sel_ref,
                 bout_ref, o_ref, p1s_ref):
    """One grid step = blk_b batch elements; nb = blk_b * 64.

    x_ref    : (1, 6, 8, 2*nb) bf16  conv1 im2col taps
               [_, offset-block k, in_chan*4+tap, pool_half*nb + b*64 + j]
    w1_ref   : (64, 8)    bf16       conv1 weight, col = c*4 + t
    b1_ref   : (64, 1)    f32
    w2_ref   : (128, 256) bf16       conv2 weight, col = t*64 + c
    b2_ref   : (128, 1)   f32
    woutt_ref: (128, nb)  f32        ln1 weight (C2, L2) tiled blk_b x on lanes
    sel_ref  : (nb, 128)  f32        sel[b*64+j, b] = 1 (segmented-reduce selector)
    bout_ref : (1, 1)     f32
    o_ref    : (1, 8, 128) f32       lane b = logit of local batch element b
    p1s_ref  : (384, nb)  bf16       scratch: 6 offset-blocks of the pooled
                                     conv1 output, row = k*64 + chan
    """
    nb = p1s_ref.shape[1]

    w1 = w1_ref[...]
    b1 = b1_ref[...]
    # lane position within each batch element's 64-wide group
    jmod = jax.lax.broadcasted_iota(jnp.int32, (1, nb), 1) % L2

    # ---- conv1 + bias + ReLU + MaxPool(2), at the 6 offsets conv2 reads ----
    # Even/odd pool halves are folded into the lane axis: one (64,8)@(8,2*nb)
    # matmul per offset, then a vreg-aligned lane-half max.
    for k in range(N_OFF):
        res = jnp.dot(w1, x_ref[0, k], preferred_element_type=jnp.float32)
        blk = jnp.maximum(jnp.maximum(res[:, :nb], res[:, nb:]) + b1, 0.0)
        # offset -1 at j=0 and offset +4 at j=63 fall outside the pooled
        # conv1 signal -> conv2's zero padding.
        if k == 0:
            blk = jnp.where(jmod == 0, 0.0, blk)
        if k == N_OFF - 1:
            blk = jnp.where(jmod == L2 - 1, 0.0, blk)
        p1s_ref[k * C1:(k + 1) * C1, :] = blk.astype(jnp.bfloat16)

    # ---- conv2 + bias + ReLU + MaxPool(2), block-wide ----
    # Even windows read offsets {-1,0,1,2} = scratch rows 0:256; odd windows
    # read offsets {1,2,3,4} = rows 128:384; identical rows for every batch
    # element, so two matmuls cover the whole block.
    w2 = w2_ref[...]
    h2e = jnp.dot(w2, p1s_ref[0:4 * C1, :], preferred_element_type=jnp.float32)
    h2o = jnp.dot(w2, p1s_ref[2 * C1:6 * C1, :], preferred_element_type=jnp.float32)
    p2 = jnp.maximum(jnp.maximum(h2e, h2o) + b2_ref[...], 0.0)       # (128, nb) f32

    # ---- Linear(8192, 1), block-wide ----
    s = p2 * woutt_ref[...]                                          # (128, nb) f32
    colsum = jnp.sum(s, axis=0, keepdims=True)                       # (1, nb)
    seg = jnp.dot(colsum, sel_ref[...],
                  preferred_element_type=jnp.float32)                # (1, 128)
    o_ref[0] = jnp.broadcast_to(seg + bout_ref[0, 0], (8, 128))


def _round_up(n, m):
    return ((n + m - 1) // m) * m


def _pick_blk_b(batch, blk_b):
    """Multiple of 8, <= requested, and (for batch >= 16) small enough to keep
    at least 2 grid steps so both v7x TensorCores get work."""
    blk_b = max(8, _round_up(min(blk_b, max(batch, 1)), 8))
    b8 = _round_up(batch, 8)
    if b8 >= 16:
        blk_b = min(blk_b, _round_up(b8 // 2, 8))
    else:
        blk_b = 8
    return blk_b


def _conv1_taps(x, blk_b):
    """im2col for conv1, at the 6 pooled-output offsets conv2 needs.

    x: (Bp, 2, 1024) bf16 -> (G, 6, 8, 2*blk_b*64) bf16 with
      out[g, k, c*4+t, h*nb + b*64 + j] =
          x[g*blk_b + b, c, 16*j + 4*OFFSETS[k] + t - 1 + 2*h]
    (zero where the index falls outside [0, 1024) = conv1's zero padding).
    """
    Bp = x.shape[0]
    G = Bp // blk_b
    j = np.arange(L2)
    t = np.arange(K)
    h = np.arange(2)
    idx = (16 * j[None, None, None, :] + 4 * OFFSETS[None, :, None, None]
           + t[None, None, :, None] - 1 + 2 * h[:, None, None, None])  # (2,6,4,64)
    valid = jnp.asarray((idx >= 0) & (idx < L_IN))
    idxc = np.clip(idx, 0, L_IN - 1)
    xg = x[:, :, idxc]                               # (Bp, 2, 2, 6, 4, 64) [b,c,h,k,t,j]
    xg = jnp.where(valid[None, None], xg, jnp.zeros((), x.dtype))
    xg = xg.reshape(G, blk_b, 2, 2, N_OFF, K, L2)    # (g, b, c, h, k, t, j)
    xg = jnp.transpose(xg, (0, 4, 2, 5, 3, 1, 6))    # (g, k, c, t, h, b, j)
    return xg.reshape(G, N_OFF, 2 * K, 2 * blk_b * L2)


def discriminator_forward(ts, labels, params, blk_b=BLK_B):
    B = ts.shape[0]
    ts = ts.reshape(B, L_IN).astype(jnp.float32)

    # --- glue: embedding gather + label Linear as one batched XLA matmul ---
    emb = params["emb_w"][labels].astype(jnp.float32)              # (B, n_classes)
    y = emb @ params["ln_w"].T.astype(jnp.float32) + params["ln_b"]
    x = jnp.stack([ts, y], axis=1)                                 # (B, 2, 1024)

    blk_b = _pick_blk_b(B, blk_b)
    Bp = _round_up(B, blk_b)
    G = Bp // blk_b
    nb = blk_b * L2

    if Bp != B:
        x = jnp.concatenate([x, jnp.zeros((Bp - B, 2, L_IN), x.dtype)], axis=0)
    # cast before the gather/transpose glue: halves the strided wrapper bytes
    xg = _conv1_taps(x.astype(jnp.bfloat16), blk_b)                # (G, 6, 8, 2*nb)

    w1f = params["c1_w"].reshape(C1, 2 * K).astype(jnp.bfloat16)
    b1 = params["c1_b"].reshape(C1, 1).astype(jnp.float32)
    w2f = jnp.transpose(params["c2_w"], (0, 2, 1)).reshape(C2, K * C1)
    w2f = w2f.astype(jnp.bfloat16)
    b2 = params["c2_b"].reshape(C2, 1).astype(jnp.float32)
    wout = params["ln1_w"].reshape(C2, L2).astype(jnp.float32)
    wout_t = jnp.tile(wout, (1, blk_b))                            # (128, nb) f32
    bout = params["ln1_b"].reshape(1, 1).astype(jnp.float32)
    # block-diagonal selector: lane group b*64..b*64+63 -> output lane b
    sel = jnp.asarray(
        np.arange(nb)[:, None] // L2 == np.arange(128)[None, :],
        dtype=jnp.float32)                                         # (nb, 128)

    const2 = lambda i: (0, 0)

    out = pl.pallas_call(
        _disc_kernel,
        out_shape=jax.ShapeDtypeStruct((G, 8, 128), jnp.float32),
        grid_spec=pltpu.PrefetchScalarGridSpec(
            num_scalar_prefetch=0,
            grid=(G,),
            in_specs=[
                pl.BlockSpec((1, N_OFF, 2 * K, 2 * nb), lambda i: (i, 0, 0, 0)),
                pl.BlockSpec((C1, 2 * K), const2),
                pl.BlockSpec((C1, 1), const2),
                pl.BlockSpec((C2, K * C1), const2),
                pl.BlockSpec((C2, 1), const2),
                pl.BlockSpec((C2, nb), const2),
                pl.BlockSpec((nb, 128), const2),
                pl.BlockSpec((1, 1), const2),
            ],
            out_specs=pl.BlockSpec((1, 8, 128), lambda i: (i, 0, 0)),
            scratch_shapes=[pltpu.VMEM((N_OFF * C1, nb), jnp.bfloat16)],
        ),
        compiler_params=pltpu.CompilerParams(
            dimension_semantics=("parallel",),
            vmem_limit_bytes=32 * 1024 * 1024),
    )(xg, w1f, b1, w2f, b2, wout_t, sel, bout)

    return out[:, 0, :blk_b].reshape(Bp)[:B].reshape(B, 1)          # (B, 1)


def discriminator_reference(ts, labels, params):
    """Pure-JAX replica of the PyTorch forward, for a correctness check."""
    B = ts.shape[0]
    emb = params["emb_w"][labels]
    y = emb @ params["ln_w"].T + params["ln_b"]                    # (B, 1024)
    x = jnp.stack([ts.reshape(B, L_IN), y], axis=1)                # (B, 2, 1024)

    def conv1d(x, w, b):
        out = jax.lax.conv_general_dilated(
            x, w, window_strides=(2,), padding=[(1, 1)],
            dimension_numbers=("NCH", "OIH", "NCH"))
        return out + b[None, :, None]

    h = jax.nn.relu(conv1d(x, params["c1_w"], params["c1_b"]))
    h = jax.lax.reduce_window(h, -jnp.inf, jax.lax.max, (1, 1, 2), (1, 1, 2), "VALID")
    h = jax.nn.relu(conv1d(h, params["c2_w"], params["c2_b"]))
    h = jax.lax.reduce_window(h, -jnp.inf, jax.lax.max, (1, 1, 2), (1, 1, 2), "VALID")
    flat = h.reshape(B, -1)                                        # (C2, L2) flatten
    return flat @ params["ln1_w"].T + params["ln1_b"]              # (B, 1)


if __name__ == "__main__":
    key = jax.random.PRNGKey(0)
    ks = jax.random.split(key, 11)

    def u(k, shape, fan_in):
        b = 1.0 / math.sqrt(fan_in)
        return jax.random.uniform(k, shape, jnp.float32, -b, b)

    params = {
        "emb_w": jax.random.normal(ks[0], (N_CLASSES, N_CLASSES), jnp.float32),
        "ln_w":  u(ks[1], (L_IN, N_CLASSES), N_CLASSES),
        "ln_b":  u(ks[2], (L_IN,), N_CLASSES),
        "c1_w":  u(ks[3], (C1, 2, K), 2 * K),
        "c1_b":  u(ks[4], (C1,), 2 * K),
        "c2_w":  u(ks[5], (C2, C1, K), C1 * K),
        "c2_b":  u(ks[6], (C2,), C1 * K),
        "ln1_w": u(ks[7], (1, C2 * L2), C2 * L2),
        "ln1_b": u(ks[8], (1,), C2 * L2),
    }

    B = 4
    ts = jax.random.normal(ks[9], (B, L_IN), jnp.float32)
    labels = jax.random.randint(ks[10], (B,), 0, N_CLASSES)

    out = discriminator_forward(ts, labels, params)
    out = jax.block_until_ready(out)
    assert out.shape == (B, 1)

    ref = discriminator_reference(ts, labels, params)
    if not np.allclose(np.asarray(out), np.asarray(ref), rtol=2e-2, atol=2e-2):
        raise AssertionError(f"mismatch: kernel={np.asarray(out)} ref={np.asarray(ref)}")

    print("KERNEL_OK")
</pallas_src>

<mosaic_0001>
module attributes {stable_mosaic.version = 11 : i64} {
  func.func @_disc_kernel(%arg0: i32, %arg1: memref<1x6x8x1024xbf16, #tpu.memory_space<vmem>>, %arg2: memref<64x8xbf16, #tpu.memory_space<vmem>>, %arg3: memref<64x1xf32, #tpu.memory_space<vmem>>, %arg4: memref<128x256xbf16, #tpu.memory_space<vmem>>, %arg5: memref<128x1xf32, #tpu.memory_space<vmem>>, %arg6: memref<128x512xf32, #tpu.memory_space<vmem>>, %arg7: memref<512x128xf32, #tpu.memory_space<vmem>>, %arg8: memref<1x1xf32, #tpu.memory_space<vmem>>, %arg9: memref<1x8x128xf32, #tpu.memory_space<vmem>>, %arg10: memref<384x512xbf16, #tpu.memory_space<vmem>>) attributes {dimension_semantics = [#tpu.dimension_semantics<parallel>], iteration_bounds = array<i64: 1>, scalar_prefetch = 0 : i64, scratch_operands = 1 : i64, tpu.core_type = #tpu.core_type<tc>, window_params = [{transform_indices = @transform_0, window_bounds = array<i64: 1, 6, 8, 1024>}, {pipeline_mode = #tpu.pipeline_mode<synchronous>, transform_indices = @transform_1, window_bounds = array<i64: 64, 8>}, {pipeline_mode = #tpu.pipeline_mode<synchronous>, transform_indices = @transform_2, window_bounds = array<i64: 64, 1>}, {pipeline_mode = #tpu.pipeline_mode<synchronous>, transform_indices = @transform_3, window_bounds = array<i64: 128, 256>}, {pipeline_mode = #tpu.pipeline_mode<synchronous>, transform_indices = @transform_4, window_bounds = array<i64: 128, 1>}, {pipeline_mode = #tpu.pipeline_mode<synchronous>, transform_indices = @transform_5, window_bounds = array<i64: 128, 512>}, {pipeline_mode = #tpu.pipeline_mode<synchronous>, transform_indices = @transform_6, window_bounds = array<i64: 512, 128>}, {pipeline_mode = #tpu.pipeline_mode<synchronous>, transform_indices = @transform_7, window_bounds = array<i64: 1, 1>}, {transform_indices = @transform_8, window_bounds = array<i64: 1, 8, 128>}]} {
    %c0 = arith.constant 0 : index
    %c0_0 = arith.constant 0 : index
    %0 = vector.load %arg2[%c0, %c0_0] : memref<64x8xbf16, #tpu.memory_space<vmem>>, vector<64x8xbf16>
    %c0_1 = arith.constant 0 : index
    %c0_2 = arith.constant 0 : index
    %1 = vector.load %arg3[%c0_1, %c0_2] : memref<64x1xf32, #tpu.memory_space<vmem>>, vector<64x1xf32>
    %2 = tpu.iota {dimensions = array<i32: 1>} : vector<1x512xi32>
    %c64_i32 = arith.constant 64 : i32
    %c0_i32 = arith.constant 0 : i32
    %3 = arith.cmpi eq, %c64_i32, %c0_i32 : i32
    %c1_i32 = arith.constant 1 : i32
    %4 = arith.select %3, %c1_i32, %c64_i32 : i32
    %5 = vector.broadcast %4 : i32 to vector<1x512xi32>
    %6 = arith.remsi %2, %5 : vector<1x512xi32>
    %c0_i32_3 = arith.constant 0 : i32
    %7 = vector.broadcast %c0_i32_3 : i32 to vector<1x512xi32>
    %8 = arith.cmpi ne, %6, %7 : vector<1x512xi32>
    %c0_i32_4 = arith.constant 0 : i32
    %9 = vector.broadcast %c0_i32_4 : i32 to vector<1x512xi32>
    %10 = arith.cmpi slt, %6, %9 : vector<1x512xi32>
    %c0_i32_5 = arith.constant 0 : i32
    %11 = arith.cmpi slt, %4, %c0_i32_5 : i32
    %12 = vector.broadcast %11 : i1 to vector<1x512xi1>
    %13 = vector.broadcast %12 : vector<1x512xi1> to vector<1x512xi1>
    %14 = arith.xori %10, %13 : vector<1x512xi1>
    %15 = arith.andi %14, %8 : vector<1x512xi1>
    %16 = vector.broadcast %4 : i32 to vector<1x512xi32>
    %17 = arith.addi %6, %16 : vector<1x512xi32>
    %18 = arith.select %15, %17, %6 : vector<1x512xi1>, vector<1x512xi32>
    %c0_6 = arith.constant 0 : index
    %c0_7 = arith.constant 0 : index
    %c0_8 = arith.constant 0 : index
    %c0_9 = arith.constant 0 : index
    %19 = vector.load %arg1[%c0_6, %c0_7, %c0_8, %c0_9] : memref<1x6x8x1024xbf16, #tpu.memory_space<vmem>>, vector<1x1x8x1024xbf16>
    %20 = vector.shape_cast %19 : vector<1x1x8x1024xbf16> to vector<8x1024xbf16>
    %cst = arith.constant dense<0.000000e+00> : vector<64x1024xf32>
    %21 = tpu.matmul %0, %20, %cst {dimension_numbers = #tpu.dot_dimension_numbers<[1], [0], [0], [1], [0, 0, 1, 1], [], []>} : vector<64x8xbf16>, vector<8x1024xbf16>, vector<64x1024xf32> -> vector<64x1024xf32>
    %22 = vector.extract_strided_slice %21 {offsets = [0, 0], sizes = [64, 512], strides = [1, 1]} : vector<64x1024xf32> to vector<64x512xf32>
    %23 = vector.extract_strided_slice %21 {offsets = [0, 512], sizes = [64, 512], strides = [1, 1]} : vector<64x1024xf32> to vector<64x512xf32>
    %24 = arith.maximumf %22, %23 : vector<64x512xf32>
    %25 = vector.broadcast %1 : vector<64x1xf32> to vector<64x512xf32>
    %26 = arith.addf %24, %25 : vector<64x512xf32>
    %cst_10 = arith.constant 0.000000e+00 : f32
    %27 = vector.broadcast %cst_10 : f32 to vector<64x512xf32>
    %28 = arith.maximumf %26, %27 : vector<64x512xf32>
    %c0_i32_11 = arith.constant 0 : i32
    %29 = vector.broadcast %c0_i32_11 : i32 to vector<1x512xi32>
    %30 = arith.cmpi eq, %18, %29 : vector<1x512xi32>
    %cst_12 = arith.constant 0.000000e+00 : f32
    %31 = vector.shape_cast %30 : vector<1x512xi1> to vector<1x512xi1>
    %32 = vector.broadcast %31 : vector<1x512xi1> to vector<64x512xi1>
    %33 = vector.broadcast %cst_12 : f32 to vector<64x512xf32>
    %34 = arith.select %32, %33, %28 : vector<64x512xi1>, vector<64x512xf32>
    %35 = arith.truncf %34 : vector<64x512xf32> to vector<64x512xbf16>
    %c0_13 = arith.constant 0 : index
    %c0_14 = arith.constant 0 : index
    %36 = vector.load %arg10[%c0_13, %c0_14] : memref<384x512xbf16, #tpu.memory_space<vmem>>, vector<64x512xbf16>
    tpu.vector_store %arg10[%c0_13, %c0_14], %35 {strides = array<i32>} : memref<384x512xbf16, #tpu.memory_space<vmem>>, vector<64x512xbf16>,
    %c0_15 = arith.constant 0 : index
    %c1 = arith.constant 1 : index
    %c0_16 = arith.constant 0 : index
    %c0_17 = arith.constant 0 : index
    %37 = vector.load %arg1[%c0_15, %c1, %c0_16, %c0_17] : memref<1x6x8x1024xbf16, #tpu.memory_space<vmem>>, vector<1x1x8x1024xbf16>
    %38 = vector.shape_cast %37 : vector<1x1x8x1024xbf16> to vector<8x1024xbf16>
    %cst_18 = arith.constant dense<0.000000e+00> : vector<64x1024xf32>
    %39 = tpu.matmul %0, %38, %cst_18 {dimension_numbers = #tpu.dot_dimension_numbers<[1], [0], [0], [1], [0, 0, 1, 1], [], []>} : vector<64x8xbf16>, vector<8x1024xbf16>, vector<64x1024xf32> -> vector<64x1024xf32>
    %40 = vector.extract_strided_slice %39 {offsets = [0, 0], sizes = [64, 512], strides = [1, 1]} : vector<64x1024xf32> to vector<64x512xf32>
    %41 = vector.extract_strided_slice %39 {offsets = [0, 512], sizes = [64, 512], strides = [1, 1]} : vector<64x1024xf32> to vector<64x512xf32>
    %42 = arith.maximumf %40, %41 : vector<64x512xf32>
    %43 = vector.broadcast %1 : vector<64x1xf32> to vector<64x512xf32>
    %44 = arith.addf %42, %43 : vector<64x512xf32>
    %cst_19 = arith.constant 0.000000e+00 : f32
    %45 = vector.broadcast %cst_19 : f32 to vector<64x512xf32>
    %46 = arith.maximumf %44, %45 : vector<64x512xf32>
    %47 = arith.truncf %46 : vector<64x512xf32> to vector<64x512xbf16>
    %c64 = arith.constant 64 : index
    %c0_20 = arith.constant 0 : index
    %48 = vector.load %arg10[%c64, %c0_20] : memref<384x512xbf16, #tpu.memory_space<vmem>>, vector<64x512xbf16>
    tpu.vector_store %arg10[%c64, %c0_20], %47 {strides = array<i32>} : memref<384x512xbf16, #tpu.memory_space<vmem>>, vector<64x512xbf16>,
    %c0_21 = arith.constant 0 : index
    %c2 = arith.constant 2 : index
    %c0_22 = arith.constant 0 : index
    %c0_23 = arith.constant 0 : index
    %49 = vector.load %arg1[%c0_21, %c2, %c0_22, %c0_23] : memref<1x6x8x1024xbf16, #tpu.memory_space<vmem>>, vector<1x1x8x1024xbf16>
    %50 = vector.shape_cast %49 : vector<1x1x8x1024xbf16> to vector<8x1024xbf16>
    %cst_24 = arith.constant dense<0.000000e+00> : vector<64x1024xf32>
    %51 = tpu.matmul %0, %50, %cst_24 {dimension_numbers = #tpu.dot_dimension_numbers<[1], [0], [0], [1], [0, 0, 1, 1], [], []>} : vector<64x8xbf16>, vector<8x1024xbf16>, vector<64x1024xf32> -> vector<64x1024xf32>
    %52 = vector.extract_strided_slice %51 {offsets = [0, 0], sizes = [64, 512], strides = [1, 1]} : vector<64x1024xf32> to vector<64x512xf32>
    %53 = vector.extract_strided_slice %51 {offsets = [0, 512], sizes = [64, 512], strides = [1, 1]} : vector<64x1024xf32> to vector<64x512xf32>
    %54 = arith.maximumf %52, %53 : vector<64x512xf32>
    %55 = vector.broadcast %1 : vector<64x1xf32> to vector<64x512xf32>
    %56 = arith.addf %54, %55 : vector<64x512xf32>
    %cst_25 = arith.constant 0.000000e+00 : f32
    %57 = vector.broadcast %cst_25 : f32 to vector<64x512xf32>
    %58 = arith.maximumf %56, %57 : vector<64x512xf32>
    %59 = arith.truncf %58 : vector<64x512xf32> to vector<64x512xbf16>
    %c128 = arith.constant 128 : index
    %c0_26 = arith.constant 0 : index
    %60 = vector.load %arg10[%c128, %c0_26] : memref<384x512xbf16, #tpu.memory_space<vmem>>, vector<64x512xbf16>
    tpu.vector_store %arg10[%c128, %c0_26], %59 {strides = array<i32>} : memref<384x512xbf16, #tpu.memory_space<vmem>>, vector<64x512xbf16>,
    %c0_27 = arith.constant 0 : index
    %c3 = arith.constant 3 : index
    %c0_28 = arith.constant 0 : index
    %c0_29 = arith.constant 0 : index
    %61 = vector.load %arg1[%c0_27, %c3, %c0_28, %c0_29] : memref<1x6x8x1024xbf16, #tpu.memory_space<vmem>>, vector<1x1x8x1024xbf16>
    %62 = vector.shape_cast %61 : vector<1x1x8x1024xbf16> to vector<8x1024xbf16>
    %cst_30 = arith.constant dense<0.000000e+00> : vector<64x1024xf32>
    %63 = tpu.matmul %0, %62, %cst_30 {dimension_numbers = #tpu.dot_dimension_numbers<[1], [0], [0], [1], [0, 0, 1, 1], [], []>} : vector<64x8xbf16>, vector<8x1024xbf16>, vector<64x1024xf32> -> vector<64x1024xf32>
    %64 = vector.extract_strided_slice %63 {offsets = [0, 0], sizes = [64, 512], strides = [1, 1]} : vector<64x1024xf32> to vector<64x512xf32>
    %65 = vector.extract_strided_slice %63 {offsets = [0, 512], sizes = [64, 512], strides = [1, 1]} : vector<64x1024xf32> to vector<64x512xf32>
    %66 = arith.maximumf %64, %65 : vector<64x512xf32>
    %67 = vector.broadcast %1 : vector<64x1xf32> to vector<64x512xf32>
    %68 = arith.addf %66, %67 : vector<64x512xf32>
    %cst_31 = arith.constant 0.000000e+00 : f32
    %69 = vector.broadcast %cst_31 : f32 to vector<64x512xf32>
    %70 = arith.maximumf %68, %69 : vector<64x512xf32>
    %71 = arith.truncf %70 : vector<64x512xf32> to vector<64x512xbf16>
    %c192 = arith.constant 192 : index
    %c0_32 = arith.constant 0 : index
    %72 = vector.load %arg10[%c192, %c0_32] : memref<384x512xbf16, #tpu.memory_space<vmem>>, vector<64x512xbf16>
    tpu.vector_store %arg10[%c192, %c0_32], %71 {strides = array<i32>} : memref<384x512xbf16, #tpu.memory_space<vmem>>, vector<64x512xbf16>,
    %c0_33 = arith.constant 0 : index
    %c4 = arith.constant 4 : index
    %c0_34 = arith.constant 0 : index
    %c0_35 = arith.constant 0 : index
    %73 = vector.load %arg1[%c0_33, %c4, %c0_34, %c0_35] : memref<1x6x8x1024xbf16, #tpu.memory_space<vmem>>, vector<1x1x8x1024xbf16>
    %74 = vector.shape_cast %73 : vector<1x1x8x1024xbf16> to vector<8x1024xbf16>
    %cst_36 = arith.constant dense<0.000000e+00> : vector<64x1024xf32>
    %75 = tpu.matmul %0, %74, %cst_36 {dimension_numbers = #tpu.dot_dimension_numbers<[1], [0], [0], [1], [0, 0, 1, 1], [], []>} : vector<64x8xbf16>, vector<8x1024xbf16>, vector<64x1024xf32> -> vector<64x1024xf32>
    %76 = vector.extract_strided_slice %75 {offsets = [0, 0], sizes = [64, 512], strides = [1, 1]} : vector<64x1024xf32> to vector<64x512xf32>
    %77 = vector.extract_strided_slice %75 {offsets = [0, 512], sizes = [64, 512], strides = [1, 1]} : vector<64x1024xf32> to vector<64x512xf32>
    %78 = arith.maximumf %76, %77 : vector<64x512xf32>
    %79 = vector.broadcast %1 : vector<64x1xf32> to vector<64x512xf32>
    %80 = arith.addf %78, %79 : vector<64x512xf32>
    %cst_37 = arith.constant 0.000000e+00 : f32
    %81 = vector.broadcast %cst_37 : f32 to vector<64x512xf32>
    %82 = arith.maximumf %80, %81 : vector<64x512xf32>
    %83 = arith.truncf %82 : vector<64x512xf32> to vector<64x512xbf16>
    %c256 = arith.constant 256 : index
    %c0_38 = arith.constant 0 : index
    %84 = vector.load %arg10[%c256, %c0_38] : memref<384x512xbf16, #tpu.memory_space<vmem>>, vector<64x512xbf16>
    tpu.vector_store %arg10[%c256, %c0_38], %83 {strides = array<i32>} : memref<384x512xbf16, #tpu.memory_space<vmem>>, vector<64x512xbf16>,
    %c0_39 = arith.constant 0 : index
    %c5 = arith.constant 5 : index
    %c0_40 = arith.constant 0 : index
    %c0_41 = arith.constant 0 : index
    %85 = vector.load %arg1[%c0_39, %c5, %c0_40, %c0_41] : memref<1x6x8x1024xbf16, #tpu.memory_space<vmem>>, vector<1x1x8x1024xbf16>
    %86 = vector.shape_cast %85 : vector<1x1x8x1024xbf16> to vector<8x1024xbf16>
    %cst_42 = arith.constant dense<0.000000e+00> : vector<64x1024xf32>
    %87 = tpu.matmul %0, %86, %cst_42 {dimension_numbers = #tpu.dot_dimension_numbers<[1], [0], [0], [1], [0, 0, 1, 1], [], []>} : vector<64x8xbf16>, vector<8x1024xbf16>, vector<64x1024xf32> -> vector<64x1024xf32>
    %88 = vector.extract_strided_slice %87 {offsets = [0, 0], sizes = [64, 512], strides = [1, 1]} : vector<64x1024xf32> to vector<64x512xf32>
    %89 = vector.extract_strided_slice %87 {offsets = [0, 512], sizes = [64, 512], strides = [1, 1]} : vector<64x1024xf32> to vector<64x512xf32>
    %90 = arith.maximumf %88, %89 : vector<64x512xf32>
    %91 = vector.broadcast %1 : vector<64x1xf32> to vector<64x512xf32>
    %92 = arith.addf %90, %91 : vector<64x512xf32>
    %cst_43 = arith.constant 0.000000e+00 : f32
    %93 = vector.broadcast %cst_43 : f32 to vector<64x512xf32>
    %94 = arith.maximumf %92, %93 : vector<64x512xf32>
    %c63_i32 = arith.constant 63 : i32
    %95 = vector.broadcast %c63_i32 : i32 to vector<1x512xi32>
    %96 = arith.cmpi eq, %18, %95 : vector<1x512xi32>
    %cst_44 = arith.constant 0.000000e+00 : f32
    %97 = vector.shape_cast %96 : vector<1x512xi1> to vector<1x512xi1>
    %98 = vector.broadcast %97 : vector<1x512xi1> to vector<64x512xi1>
    %99 = vector.broadcast %cst_44 : f32 to vector<64x512xf32>
    %100 = arith.select %98, %99, %94 : vector<64x512xi1>, vector<64x512xf32>
    %101 = arith.truncf %100 : vector<64x512xf32> to vector<64x512xbf16>
    %c320 = arith.constant 320 : index
    %c0_45 = arith.constant 0 : index
    %102 = vector.load %arg10[%c320, %c0_45] : memref<384x512xbf16, #tpu.memory_space<vmem>>, vector<64x512xbf16>
    tpu.vector_store %arg10[%c320, %c0_45], %101 {strides = array<i32>} : memref<384x512xbf16, #tpu.memory_space<vmem>>, vector<64x512xbf16>,
    %c0_46 = arith.constant 0 : index
    %c0_47 = arith.constant 0 : index
    %103 = vector.load %arg4[%c0_46, %c0_47] : memref<128x256xbf16, #tpu.memory_space<vmem>>, vector<128x256xbf16>
    %c0_48 = arith.constant 0 : index
    %c0_49 = arith.constant 0 : index
    %104 = vector.load %arg10[%c0_48, %c0_49] : memref<384x512xbf16, #tpu.memory_space<vmem>>, vector<256x512xbf16>
    %cst_50 = arith.constant dense<0.000000e+00> : vector<128x512xf32>
    %105 = tpu.matmul %103, %104, %cst_50 {dimension_numbers = #tpu.dot_dimension_numbers<[1], [0], [0], [1], [0, 0, 1, 1], [], []>} : vector<128x256xbf16>, vector<256x512xbf16>, vector<128x512xf32> -> vector<128x512xf32>
    %c128_51 = arith.constant 128 : index
    %c0_52 = arith.constant 0 : index
    %106 = vector.load %arg10[%c128_51, %c0_52] : memref<384x512xbf16, #tpu.memory_space<vmem>>, vector<256x512xbf16>
    %cst_53 = arith.constant dense<0.000000e+00> : vector<128x512xf32>
    %107 = tpu.matmul %103, %106, %cst_53 {dimension_numbers = #tpu.dot_dimension_numbers<[1], [0], [0], [1], [0, 0, 1, 1], [], []>} : vector<128x256xbf16>, vector<256x512xbf16>, vector<128x512xf32> -> vector<128x512xf32>
    %108 = arith.maximumf %105, %107 : vector<128x512xf32>
    %c0_54 = arith.constant 0 : index
    %c0_55 = arith.constant 0 : index
    %109 = vector.load %arg5[%c0_54, %c0_55] : memref<128x1xf32, #tpu.memory_space<vmem>>, vector<128x1xf32>
    %110 = vector.broadcast %109 : vector<128x1xf32> to vector<128x512xf32>
    %111 = arith.addf %108, %110 : vector<128x512xf32>
    %cst_56 = arith.constant 0.000000e+00 : f32
    %112 = vector.broadcast %cst_56 : f32 to vector<128x512xf32>
    %113 = arith.maximumf %111, %112 : vector<128x512xf32>
    %c0_57 = arith.constant 0 : index
    %c0_58 = arith.constant 0 : index
    %114 = vector.load %arg6[%c0_57, %c0_58] : memref<128x512xf32, #tpu.memory_space<vmem>>, vector<128x512xf32>
    %115 = arith.mulf %113, %114 : vector<128x512xf32>
    %cst_59 = arith.constant dense<0.000000e+00> : vector<512xf32>
    %116 = vector.multi_reduction <add>, %115, %cst_59 [0] : vector<128x512xf32> to vector<512xf32>
    %117 = vector.shape_cast %116 : vector<512xf32> to vector<1x512xf32>
    %c0_60 = arith.constant 0 : index
    %c0_61 = arith.constant 0 : index
    %118 = vector.load %arg7[%c0_60, %c0_61] : memref<512x128xf32, #tpu.memory_space<vmem>>, vector<512x128xf32>
    %cst_62 = arith.constant dense<0.000000e+00> : vector<1x128xf32>
    %119 = tpu.matmul %117, %118, %cst_62 {dimension_numbers = #tpu.dot_dimension_numbers<[1], [0], [0], [1], [0, 0, 1, 1], [], []>} : vector<1x512xf32>, vector<512x128xf32>, vector<1x128xf32> -> vector<1x128xf32>
    %c0_63 = arith.constant 0 : index
    %c0_64 = arith.constant 0 : index
    %120 = vector.load %arg8[%c0_63, %c0_64] : memref<1x1xf32, #tpu.memory_space<vmem>>, vector<1x1xf32>
    %121 = vector.extract %120[0, 0] : f32 from vector<1x1xf32>
    %122 = vector.broadcast %121 : f32 to vector<1x128xf32>
    %123 = arith.addf %119, %122 : vector<1x128xf32>
    %124 = vector.shape_cast %123 : vector<1x128xf32> to vector<1x128xf32>
    %125 = vector.broadcast %124 : vector<1x128xf32> to vector<8x128xf32>
    %c0_65 = arith.constant 0 : index
    %c0_66 = arith.constant 0 : index
    %c0_67 = arith.constant 0 : index
    %126 = vector.load %arg9[%c0_65, %c0_66, %c0_67] : memref<1x8x128xf32, #tpu.memory_space<vmem>>, vector<1x8x128xf32>
    %127 = vector.shape_cast %126 : vector<1x8x128xf32> to vector<8x128xf32>
    %128 = vector.shape_cast %125 : vector<8x128xf32> to vector<1x8x128xf32>
    tpu.vector_store %arg9[%c0_65, %c0_66, %c0_67], %128 {strides = array<i32>} : memref<1x8x128xf32, #tpu.memory_space<vmem>>, vector<1x8x128xf32>,
    return
  }
  func.func @transform_0(%arg0: i32) -> (i32, i32, i32, i32) {
    %c0_i32 = arith.constant 0 : i32
    %c0_i32_0 = arith.constant 0 : i32
    %c0_i32_1 = arith.constant 0 : i32
    %c0_i32_2 = arith.constant 0 : i32
    return %arg0, %c0_i32, %c0_i32_0, %c0_i32_1 : i32, i32, i32, i32
  }
  func.func @transform_1(%arg0: i32) -> (i32, i32) {
    %c0_i32 = arith.constant 0 : i32
    %c0_i32_0 = arith.constant 0 : i32
    %c0_i32_1 = arith.constant 0 : i32
    return %c0_i32, %c0_i32_0 : i32, i32
  }
  func.func @transform_2(%arg0: i32) -> (i32, i32) {
    %c0_i32 = arith.constant 0 : i32
    %c0_i32_0 = arith.constant 0 : i32
    %c0_i32_1 = arith.constant 0 : i32
    return %c0_i32, %c0_i32_0 : i32, i32
  }
  func.func @transform_3(%arg0: i32) -> (i32, i32) {
    %c0_i32 = arith.constant 0 : i32
    %c0_i32_0 = arith.constant 0 : i32
    %c0_i32_1 = arith.constant 0 : i32
    return %c0_i32, %c0_i32_0 : i32, i32
  }
  func.func @transform_4(%arg0: i32) -> (i32, i32) {
    %c0_i32 = arith.constant 0 : i32
    %c0_i32_0 = arith.constant 0 : i32
    %c0_i32_1 = arith.constant 0 : i32
    return %c0_i32, %c0_i32_0 : i32, i32
  }
  func.func @transform_5(%arg0: i32) -> (i32, i32) {
    %c0_i32 = arith.constant 0 : i32
    %c0_i32_0 = arith.constant 0 : i32
    %c0_i32_1 = arith.constant 0 : i32
    return %c0_i32, %c0_i32_0 : i32, i32
  }
  func.func @transform_6(%arg0: i32) -> (i32, i32) {
    %c0_i32 = arith.constant 0 : i32
    %c0_i32_0 = arith.constant 0 : i32
    %c0_i32_1 = arith.constant 0 : i32
    return %c0_i32, %c0_i32_0 : i32, i32
  }
  func.func @transform_7(%arg0: i32) -> (i32, i32) {
    %c0_i32 = arith.constant 0 : i32
    %c0_i32_0 = arith.constant 0 : i32
    %c0_i32_1 = arith.constant 0 : i32
    return %c0_i32, %c0_i32_0 : i32, i32
  }
  func.func @transform_8(%arg0: i32) -> (i32, i32, i32) {
    %c0_i32 = arith.constant 0 : i32
    %c0_i32_0 = arith.constant 0 : i32
    %c0_i32_1 = arith.constant 0 : i32
    return %arg0, %c0_i32, %c0_i32_0 : i32, i32, i32
  }
}

</mosaic_0001>

<llo_original>
// kernel: tpu_custom_call.1
$region0: #{tpu_custom_call.1}
  #allocation0 [shape = 'u32[]', space=smem, size = 0x4, offset = 0x4, fixed_abs, tag = 'smem constant byte address 0x4 - core index']
  #allocation1 [shape = 'u32[144,128]{1,0:T(1,128)}', space=vmem, size = 0x12000, scoped, tag = 'internal scratch']
  #allocation2 [shape = 'bf16[384,512]{1,0:T(16,128)(2,1)}', space=vmem, size = 0x60000, scoped, tag = 'scratch operand']
  #allocation3 [shape = 'f32[1,1]{1,0:T(1,128)S(1)}', space=vmem, size = 0x200, scoped, tag = 'scoped memory for tpu_custom_call.1']
  %s0 = inlined_call_operand.vmem [shape: bf16[1,6,8,1024], index: 0, kind: input, shape index: {}]
  %s1 = inlined_call_operand.vmem [shape: bf16[64,8], index: 1, kind: input, shape index: {}]
  %s2 = inlined_call_operand.vmem [shape: f32[64,1], index: 2, kind: input, shape index: {}]
  %s3 = inlined_call_operand.hbm [shape: bf16[128,256], index: 3, kind: input, shape index: {}]
  %s4 = inlined_call_operand.vmem [shape: f32[128,1], index: 4, kind: input, shape index: {}]
  %s5 = inlined_call_operand.hbm [shape: f32[128,512], index: 5, kind: input, shape index: {}]
  %s6 = inlined_call_operand.hbm [shape: f32[512,128], index: 6, kind: input, shape index: {}]
  %s7 = inlined_call_operand.<no memory space> [shape: f32[1,1], index: 7, kind: input, shape index: {}]
  %s8 = inlined_call_operand.hbm [shape: f32[1,8,128], index: 8, kind: output, shape index: {}]
  %s9 = sld [smem:[#allocation0]]
  $region54: #{tpu_custom_call.1} parent=0
    _
  %s11 = ssub.s32 1, %s9
  %s12 = scalar_select 0, %s11, %s9
  %v13 = vstv %s7
  %14 = vst [vmem:[#allocation3] sm:$0x1] %v13
  $region1: #{tpu_custom_call.1} parent=0
    #allocation4 [shape = 'u8[65536]{0}', space=vmem, size = 0x10000, scoped, tag = 'input window, operand 3, single buffered']
    #allocation5 [shape = 's32[1]{0}', space=sflag, size = 0x4, scoped, tag = 'scoped memory for tpu_custom_call.1']
    #allocation6 [shape = 's32[1]{0}', space=sflag, size = 0x4, scoped, tag = 'scoped memory for tpu_custom_call.1']
    #allocation7 [shape = 'u8[262144]{0}', space=vmem, size = 0x40000, scoped, tag = 'input window, operand 5, single buffered']
    #allocation8 [shape = 's32[1]{0}', space=sflag, size = 0x4, scoped, tag = 'scoped memory for tpu_custom_call.1']
    #allocation9 [shape = 'u8[262144]{0}', space=vmem, size = 0x40000, scoped, tag = 'input window, operand 6, single buffered']
    #allocation10 [shape = 'u8[4096]{0}', space=vmem, size = 0x1000, scoped, tag = 'output window, operand 0, single buffered']
    %15 = vsyncpa [#allocation5], 0
    %16 = vsyncpa [#allocation8], 0
    %17 = vsyncpa [#allocation6], 0
    // Predicated region
    $region2: #{tpu_custom_call.1} parent=1 // pred_check
      _
    $region3: #{tpu_custom_call.1} parent=1 // pred_check_branch
      %19 = sbr.rel (0) target = $region5
    $region4: #{tpu_custom_call.1} parent=1 // pred_region
      _
    $region5: #{tpu_custom_call.1} parent=1 // pred_fallthru
      _
    // Predicated region
    $region6: #{tpu_custom_call.1} parent=1 // pred_check
      _
    $region7: #{tpu_custom_call.1} parent=1 // pred_check_branch
      %21 = sbr.rel (0) target = $region9
    $region8: #{tpu_custom_call.1} parent=1 // pred_region
      _
    $region9: #{tpu_custom_call.1} parent=1 // pred_fallthru
      _
    // Predicated region
    $region10: #{tpu_custom_call.1} parent=1 // pred_check
      _
    $region11: #{tpu_custom_call.1} parent=1 // pred_check_branch
      %23 = sbr.rel (0) target = $region13
    $region12: #{tpu_custom_call.1} parent=1 // pred_region
      _
    $region13: #{tpu_custom_call.1} parent=1 // pred_fallthru
      _
    // Predicated region
    $region14: #{tpu_custom_call.1} parent=1 // pred_check
      _
    $region15: #{tpu_custom_call.1} parent=1 // pred_check_branch
      %25 = sbr.rel (0) target = $region17
    $region16: #{tpu_custom_call.1} parent=1 // pred_region
      %s27 = ssub.s32 2048, 2048
      %28 = vsyncadd [#allocation5], %s27
      %s29 = sshll.u32 [#allocation4], 4
      %s30 = int_to_ptr.vmem [resolvable:$true] %s29
      %35 = dma.hbm_to_vmem [thread:$0]  %s3, 2048, %s30, [#allocation5], 128, 128, 8
    $region17: #{tpu_custom_call.1} parent=1 // pred_fallthru
      _
    // Predicated region
    $region18: #{tpu_custom_call.1} parent=1 // pred_check
      _
    $region19: #{tpu_custom_call.1} parent=1 // pred_check_branch
      %37 = sbr.rel (0) target = $region21
    $region20: #{tpu_custom_call.1} parent=1 // pred_region
      _
    $region21: #{tpu_custom_call.1} parent=1 // pred_fallthru
      _
    // Predicated region
    $region22: #{tpu_custom_call.1} parent=1 // pred_check
      _
    $region23: #{tpu_custom_call.1} parent=1 // pred_check_branch
      %39 = sbr.rel (0) target = $region25
    $region24: #{tpu_custom_call.1} parent=1 // pred_region
      %s41 = ssub.s32 8192, 8192
      %42 = vsyncadd [#allocation8], %s41
      %s43 = sshll.u32 [#allocation7], 4
      %s44 = int_to_ptr.vmem [resolvable:$true] %s43
      %49 = dma.hbm_to_vmem [thread:$0]  %s5, 8192, %s44, [#allocation8], 512, 512, 32
    $region25: #{tpu_custom_call.1} parent=1 // pred_fallthru
      _
    // Predicated region
    $region26: #{tpu_custom_call.1} parent=1 // pred_check
      _
    $region27: #{tpu_custom_call.1} parent=1 // pred_check_branch
      %51 = sbr.rel (0) target = $region29
    $region28: #{tpu_custom_call.1} parent=1 // pred_region
      %s53 = ssub.s32 8192, 8192
      %54 = vsyncadd [#allocation8], %s53
      %s55 = sshll.u32 [#allocation9], 4
      %s56 = int_to_ptr.vmem [resolvable:$true] %s55
      %61 = dma.hbm_to_vmem [thread:$0]  %s6, 8192, %s56, [#allocation8], 128, 128, 8
    $region29: #{tpu_custom_call.1} parent=1 // pred_fallthru
      _
    // Predicated region
    $region30: #{tpu_custom_call.1} parent=1 // pred_check
      _
    $region31: #{tpu_custom_call.1} parent=1 // pred_check_branch
      %63 = sbr.rel (0) target = $region33
    $region32: #{tpu_custom_call.1} parent=1 // pred_region
      _
    $region33: #{tpu_custom_call.1} parent=1 // pred_fallthru
      _
    // Predicated region
    $region34: #{tpu_custom_call.1} parent=1 // pred_check
      _
    $region35: #{tpu_custom_call.1} parent=1 // pred_check_branch
      %65 = sbr.rel (0) target = $region37
    $region36: #{tpu_custom_call.1} parent=1 // pred_region
      %66 = dma.done [#allocation5], 2048
    $region37: #{tpu_custom_call.1} parent=1 // pred_fallthru
      _
    // Predicated region
    $region38: #{tpu_custom_call.1} parent=1 // pred_check
      _
    $region39: #{tpu_custom_call.1} parent=1 // pred_check_branch
      %68 = sbr.rel (0) target = $region41
    $region40: #{tpu_custom_call.1} parent=1 // pred_region
      %69 = dma.done [#allocation8], 8192
    $region41: #{tpu_custom_call.1} parent=1 // pred_fallthru
      _
    // Predicated region
    $region42: #{tpu_custom_call.1} parent=1 // pred_check
      _
    $region43: #{tpu_custom_call.1} parent=1 // pred_check_branch
      %71 = sbr.rel (0) target = $region45
    $region44: #{tpu_custom_call.1} parent=1 // pred_region
      %72 = dma.done [#allocation8], 8192
    $region45: #{tpu_custom_call.1} parent=1 // pred_fallthru
      _
    %v74 = vld [vmem:[%s1] sm:$0xf]
    %v75 = vld [vmem:[%s1 + $0x4] sm:$0xf]
    %v76 = vld [vmem:[%s1 + $0x8] sm:$0xf]
    %v77 = vld [vmem:[%s1 + $0xc] sm:$0xf]
    %v78 = vld [vmem:[%s1 + $0x10] sm:$0xf]
    %v79 = vld [vmem:[%s1 + $0x14] sm:$0xf]
    %v80 = vld [vmem:[%s1 + $0x18] sm:$0xf]
    %v81 = vld [vmem:[%s1 + $0x1c] sm:$0xf]
    %v82 = vld [vmem:[%s2] sm:$0xff]
    %v83 = vld [vmem:[%s2 + $0x8] sm:$0xff]
    %v84 = vld [vmem:[%s2 + $0x10] sm:$0xff]
    %v85 = vld [vmem:[%s2 + $0x18] sm:$0xff]
    %v86 = vld [vmem:[%s2 + $0x20] sm:$0xff]
    %v87 = vld [vmem:[%s2 + $0x28] sm:$0xff]
    %v88 = vld [vmem:[%s2 + $0x30] sm:$0xff]
    %v89 = vld [vmem:[%s2 + $0x38] sm:$0xff]
    %v90 = vlaneseq
    %v91 = vand.u32 %v90, 127
    %v92 = vadd.s32 %v91, 128
    %v93 = vadd.s32 %v91, 256
    %v94 = vadd.s32 %v91, 384
    %vm95 = vcmp.lt.s32.totalorder %v91, 0
    %v96 = vsub.s32 0, %v91
    %v97 = vsel %vm95, %v96, %v91
    %v98 = vshrl.u32 %v97, 6
    %v99 = vand.u32 %v97, 63
    %v100 = vsub.s32 0, %v99
    %v101 = vsel %vm95, %v100, %v99
    %vm102 = vcmp.lt.s32.totalorder %v92, 0
    %v103 = vsub.s32 0, %v92
    %v104 = vsel %vm102, %v103, %v92
    %v105 = vshrl.u32 %v104, 6
    %v106 = vand.u32 %v104, 63
    %v107 = vsub.s32 0, %v106
    %v108 = vsel %vm102, %v107, %v106
    %vm109 = vcmp.lt.s32.totalorder %v93, 0
    %v110 = vsub.s32 0, %v93
    %v111 = vsel %vm109, %v110, %v93
    %v112 = vshrl.u32 %v111, 6
    %v113 = vand.u32 %v111, 63
    %v114 = vsub.s32 0, %v113
    %v115 = vsel %vm109, %v114, %v113
    %vm116 = vcmp.lt.s32.totalorder %v94, 0
    %v117 = vsub.s32 0, %v94
    %v118 = vsel %vm116, %v117, %v94
    %v119 = vshrl.u32 %v118, 6
    %v120 = vand.u32 %v118, 63
    %v121 = vsub.s32 0, %v120
    %v122 = vsel %vm116, %v121, %v120
    %vm123 = vcmp.ne.s32.totalorder %v101, 0
    %vm124 = vcmp.ne.s32.totalorder %v108, 0
    %vm125 = vcmp.ne.s32.totalorder %v115, 0
    %vm126 = vcmp.ne.s32.totalorder %v122, 0
    %vm127 = vcmp.lt.s32.totalorder %v101, 0
    %vm128 = vcmp.lt.s32.totalorder %v108, 0
    %vm129 = vcmp.lt.s32.totalorder %v115, 0
    %vm130 = vcmp.lt.s32.totalorder %v122, 0
    %vm131 = vmand %vm127, %vm123
    %vm132 = vmand %vm128, %vm124
    %vm133 = vmand %vm129, %vm125
    %vm134 = vmand %vm130, %vm126
    %v135 = vadd.s32 %v101, 64
    %v136 = vadd.s32 %v108, 64
    %v137 = vadd.s32 %v115, 64
    %v138 = vadd.s32 %v122, 64
    %v139 = vsel %vm131, %v135, %v101
    %v140 = vsel %vm132, %v136, %v108
    %v141 = vsel %vm133, %v137, %v115
    %v142 = vsel %vm134, %v138, %v122
    %v143 = vld [vmem:[%s0] sm:$0xff]
    %v144 = vld [vmem:[%s0 + $0x8] sm:$0xff]
    %v145 = vld [vmem:[%s0 + $0x10] sm:$0xff]
    %v146 = vld [vmem:[%s0 + $0x18] sm:$0xff]
    %v155 = vunpack.c.l.b16 %v74
    %v156 = vunpack.c.l.b16 %v75
    %v157 = vunpack.c.l.b16 %v76
    %v158 = vunpack.c.l.b16 %v77
    %v159 = vunpack.c.l.b16 %v78
    %v160 = vunpack.c.l.b16 %v79
    %v161 = vunpack.c.l.b16 %v80
    %v162 = vunpack.c.l.b16 %v81
    %v163 = vpack.c.b16 %v156, %v155
    %v164 = vpack.c.b16 %v158, %v157
    %v165 = vpack.c.b16 %v160, %v159
    %v166 = vpack.c.b16 %v162, %v161
    %v171 = vunpack.c.l.b16 %v143
    %v172 = vunpack.c.h.b16 %v143
    %v173 = vunpack.c.l.b16 %v144
    %v174 = vunpack.c.h.b16 %v144
    %v175 = vunpack.c.l.b16 %v145
    %v176 = vunpack.c.h.b16 %v145
    %v177 = vunpack.c.l.b16 %v146
    %v178 = vunpack.c.h.b16 %v146
    %v179 = vpack.c.b16 %v171, %v171
    %v180 = vpack.c.b16 %v172, %v172
    %v181 = vpack.c.b16 %v173, %v173
    %v182 = vpack.c.b16 %v174, %v174
    %v183 = vpack.c.b16 %v175, %v175
    %v184 = vpack.c.b16 %v176, %v176
    %v185 = vpack.c.b16 %v177, %v177
    %v186 = vpack.c.b16 %v178, %v178
    %vm187 = vcmask 64512
    %v189 = vsel %vm187, %v163, 0
    %v192 = vsel %vm187, %v164, 0
    %v195 = vsel %vm187, %v165, 0
    %v198 = vsel %vm187, %v166, 0
    %vm200 = vcmask 1043456
    %v202 = vsel %vm200, %v179, 0
    %v205 = vsel %vm200, %v180, 0
    %v208 = vsel %vm200, %v181, 0
    %v211 = vsel %vm200, %v182, 0
    %v214 = vsel %vm200, %v183, 0
    %v217 = vsel %vm200, %v184, 0
    %v220 = vsel %vm200, %v185, 0
    %v223 = vsel %vm200, %v186, 0
    %225 = vmatprep.subr.bf16.mxu0 %v205
    %226 = vmatpush1.bf16.msra.mxu0 %v202
    %227 = vmatprep.subr.bf16.mxu0 0
    %228 = vmatpush1.bf16.msra.mxu0 0
    %229 = vmatprep.subr.bf16.mxu0 0
    %230 = vmatpush1.bf16.msra.mxu0 0
    %231 = vmatprep.subr.bf16.mxu0 0
    %232 = vmatpush1.bf16.msra.mxu0 0
    %233 = vmatprep.subr.bf16.mxu0 0
    %234 = vmatpush1.bf16.msra.mxu0 0
    %235 = vmatprep.subr.bf16.mxu0 0
    %236 = vmatpush1.bf16.msra.mxu0 0
    %237 = vmatprep.subr.bf16.mxu0 0
    %238 = vmatpush1.bf16.msra.mxu0 0
    %239 = vmatprep.subr.bf16.mxu0 0
    %240 = vmatpush1.bf16.msra.mxu0 0
    %241 = vmatprep.subr.bf16.mxu0 0
    %242 = vmatpush1.bf16.msra.mxu0 0
    %243 = vmatprep.subr.bf16.mxu0 0
    %244 = vmatpush1.bf16.msra.mxu0 0
    %245 = vmatprep.subr.bf16.mxu0 0
    %246 = vmatpush1.bf16.msra.mxu0 0
    %247 = vmatprep.subr.bf16.mxu0 0
    %248 = vmatpush1.bf16.msra.mxu0 0
    %249 = vmatprep.subr.bf16.mxu0 0
    %250 = vmatpush1.bf16.msra.mxu0 0
    %251 = vmatprep.subr.bf16.mxu0 0
    %252 = vmatpush1.bf16.msra.mxu0 0
    %253 = vmatprep.subr.bf16.mxu0 0
    %254 = vmatpush1.bf16.msra.mxu0 0
    %255 = vmatprep.subr.bf16.mxu0 0
    %256 = vmatpush1.bf16.msra.mxu0 0
    %257 = vmatprep.mubr.bf16.mxu0 0
    %258 = vmatmul.mubr.bf16.gmra.mrb[0].mxu0 %v189
    %v259 = vpop.f32.mrb[0].mxu0
    %v260 = vadd.f32 0.0, %v259
    %v261 = vpop.f32.mrb[0].mxu0
    %v262 = vadd.f32 0.0, %v261
    %v263 = vpop.f32.mrb[0].mxu0
    %v264 = vadd.f32 0.0, %v263
    %v265 = vpop.f32.mrb[0].mxu0
    %v266 = vadd.f32 0.0, %v265
    %267 = vmatprep.mubr.bf16.mxu0 0
    %268 = vmatmul.mubr.bf16.gmra.mrb[0].mxu0 %v192
    %v269 = vpop.f32.mrb[0].mxu0
    %v270 = vadd.f32 0.0, %v269
    %v271 = vpop.f32.mrb[0].mxu0
    %v272 = vadd.f32 0.0, %v271
    %v273 = vpop.f32.mrb[0].mxu0
    %v274 = vadd.f32 0.0, %v273
    %v275 = vpop.f32.mrb[0].mxu0
    %v276 = vadd.f32 0.0, %v275
    %277 = vmatprep.mubr.bf16.mxu0 0
    %278 = vmatmul.mubr.bf16.gmra.mrb[0].mxu0 %v195
    %v279 = vpop.f32.mrb[0].mxu0
    %v280 = vadd.f32 0.0, %v279
    %v281 = vpop.f32.mrb[0].mxu0
    %v282 = vadd.f32 0.0, %v281
    %v283 = vpop.f32.mrb[0].mxu0
    %v284 = vadd.f32 0.0, %v283
    %v285 = vpop.f32.mrb[0].mxu0
    %v286 = vadd.f32 0.0, %v285
    %287 = vmatprep.mubr.bf16.mxu0 0
    %288 = vmatmul.mubr.bf16.gmra.mrb[0].mxu0 %v198
    %v289 = vpop.f32.mrb[0].mxu0
    %v290 = vadd.f32 0.0, %v289
    %v291 = vpop.f32.mrb[0].mxu0
    %v292 = vadd.f32 0.0, %v291
    %v293 = vpop.f32.mrb[0].mxu0
    %v294 = vadd.f32 0.0, %v293
    %v295 = vpop.f32.mrb[0].mxu0
    %v296 = vadd.f32 0.0, %v295
    %297 = vdwg.mxu0
    %298 = vmatprep.subr.bf16.mxu0 %v211
    %299 = vmatpush1.bf16.msra.mxu0 %v208
    %300 = vmatprep.subr.bf16.mxu0 0
    %301 = vmatpush1.bf16.msra.mxu0 0
    %302 = vmatprep.subr.bf16.mxu0 0
    %303 = vmatpush1.bf16.msra.mxu0 0
    %304 = vmatprep.subr.bf16.mxu0 0
    %305 = vmatpush1.bf16.msra.mxu0 0
    %306 = vmatprep.subr.bf16.mxu0 0
    %307 = vmatpush1.bf16.msra.mxu0 0
    %308 = vmatprep.subr.bf16.mxu0 0
    %309 = vmatpush1.bf16.msra.mxu0 0
    %310 = vmatprep.subr.bf16.mxu0 0
    %311 = vmatpush1.bf16.msra.mxu0 0
    %312 = vmatprep.subr.bf16.mxu0 0
    %313 = vmatpush1.bf16.msra.mxu0 0
    %314 = vmatprep.subr.bf16.mxu0 0
    %315 = vmatpush1.bf16.msra.mxu0 0
    %316 = vmatprep.subr.bf16.mxu0 0
    %317 = vmatpush1.bf16.msra.mxu0 0
    %318 = vmatprep.subr.bf16.mxu0 0
    %319 = vmatpush1.bf16.msra.mxu0 0
    %320 = vmatprep.subr.bf16.mxu0 0
    %321 = vmatpush1.bf16.msra.mxu0 0
    %322 = vmatprep.subr.bf16.mxu0 0
    %323 = vmatpush1.bf16.msra.mxu0 0
    %324 = vmatprep.subr.bf16.mxu0 0
    %325 = vmatpush1.bf16.msra.mxu0 0
    %326 = vmatprep.subr.bf16.mxu0 0
    %327 = vmatpush1.bf16.msra.mxu0 0
    %328 = vmatprep.subr.bf16.mxu0 0
    %329 = vmatpush1.bf16.msra.mxu0 0
    %330 = vmatprep.mubr.bf16.mxu0 0
    %331 = vmatmul.mubr.bf16.gmra.mrb[0].mxu0 %v189
    %v332 = vpop.f32.mrb[0].mxu0
    %v333 = vadd.f32 0.0, %v332
    %v334 = vpop.f32.mrb[0].mxu0
    %v335 = vadd.f32 0.0, %v334
    %v336 = vpop.f32.mrb[0].mxu0
    %v337 = vadd.f32 0.0, %v336
    %v338 = vpop.f32.mrb[0].mxu0
    %v339 = vadd.f32 0.0, %v338
    %340 = vmatprep.mubr.bf16.mxu0 0
    %341 = vmatmul.mubr.bf16.gmra.mrb[0].mxu0 %v192
    %v342 = vpop.f32.mrb[0].mxu0
    %v343 = vadd.f32 0.0, %v342
    %v344 = vpop.f32.mrb[0].mxu0
    %v345 = vadd.f32 0.0, %v344
    %v346 = vpop.f32.mrb[0].mxu0
    %v347 = vadd.f32 0.0, %v346
    %v348 = vpop.f32.mrb[0].mxu0
    %v349 = vadd.f32 0.0, %v348
    %350 = vmatprep.mubr.bf16.mxu0 0
    %351 = vmatmul.mubr.bf16.gmra.mrb[0].mxu0 %v195
    %v352 = vpop.f32.mrb[0].mxu0
    %v353 = vadd.f32 0.0, %v352
    %v354 = vpop.f32.mrb[0].mxu0
    %v355 = vadd.f32 0.0, %v354
    %v356 = vpop.f32.mrb[0].mxu0
    %v357 = vadd.f32 0.0, %v356
    %v358 = vpop.f32.mrb[0].mxu0
    %v359 = vadd.f32 0.0, %v358
    %360 = vmatprep.mubr.bf16.mxu0 0
    %361 = vmatmul.mubr.bf16.gmra.mrb[0].mxu0 %v198
    %v362 = vpop.f32.mrb[0].mxu0
    %v363 = vadd.f32 0.0, %v362
    %v364 = vpop.f32.mrb[0].mxu0
    %v365 = vadd.f32 0.0, %v364
    %v366 = vpop.f32.mrb[0].mxu0
    %v367 = vadd.f32 0.0, %v366
    %v368 = vpop.f32.mrb[0].mxu0
    %v369 = vadd.f32 0.0, %v368
    %370 = vdwg.mxu0
    %371 = vmatprep.subr.bf16.mxu0 %v217
    %372 = vmatpush1.bf16.msra.mxu0 %v214
    %373 = vmatprep.subr.bf16.mxu0 0
    %374 = vmatpush1.bf16.msra.mxu0 0
    %375 = vmatprep.subr.bf16.mxu0 0
    %376 = vmatpush1.bf16.msra.mxu0 0
    %377 = vmatprep.subr.bf16.mxu0 0
    %378 = vmatpush1.bf16.msra.mxu0 0
    %379 = vmatprep.subr.bf16.mxu0 0
    %380 = vmatpush1.bf16.msra.mxu0 0
    %381 = vmatprep.subr.bf16.mxu0 0
    %382 = vmatpush1.bf16.msra.mxu0 0
    %383 = vmatprep.subr.bf16.mxu0 0
    %384 = vmatpush1.bf16.msra.mxu0 0
    %385 = vmatprep.subr.bf16.mxu0 0
    %386 = vmatpush1.bf16.msra.mxu0 0
    %387 = vmatprep.subr.bf16.mxu0 0
    %388 = vmatpush1.bf16.msra.mxu0 0
    %389 = vmatprep.subr.bf16.mxu0 0
    %390 = vmatpush1.bf16.msra.mxu0 0
    %391 = vmatprep.subr.bf16.mxu0 0
    %392 = vmatpush1.bf16.msra.mxu0 0
    %393 = vmatprep.subr.bf16.mxu0 0
    %394 = vmatpush1.bf16.msra.mxu0 0
    %395 = vmatprep.subr.bf16.mxu0 0
    %396 = vmatpush1.bf16.msra.mxu0 0
    %397 = vmatprep.subr.bf16.mxu0 0
    %398 = vmatpush1.bf16.msra.mxu0 0
    %399 = vmatprep.subr.bf16.mxu0 0
    %400 = vmatpush1.bf16.msra.mxu0 0
    %401 = vmatprep.subr.bf16.mxu0 0
    %402 = vmatpush1.bf16.msra.mxu0 0
    %403 = vmatprep.mubr.bf16.mxu0 0
    %404 = vmatmul.mubr.bf16.gmra.mrb[0].mxu0 %v189
    %v405 = vpop.f32.mrb[0].mxu0
    %v406 = vadd.f32 0.0, %v405
    %v407 = vpop.f32.mrb[0].mxu0
    %v408 = vadd.f32 0.0, %v407
    %v409 = vpop.f32.mrb[0].mxu0
    %v410 = vadd.f32 0.0, %v409
    %v411 = vpop.f32.mrb[0].mxu0
    %v412 = vadd.f32 0.0, %v411
    %413 = vmatprep.mubr.bf16.mxu0 0
    %414 = vmatmul.mubr.bf16.gmra.mrb[0].mxu0 %v192
    %v415 = vpop.f32.mrb[0].mxu0
    %v416 = vadd.f32 0.0, %v415
    %v417 = vpop.f32.mrb[0].mxu0
    %v418 = vadd.f32 0.0, %v417
    %v419 = vpop.f32.mrb[0].mxu0
    %v420 = vadd.f32 0.0, %v419
    %v421 = vpop.f32.mrb[0].mxu0
    %v422 = vadd.f32 0.0, %v421
    %423 = vmatprep.mubr.bf16.mxu0 0
    %424 = vmatmul.mubr.bf16.gmra.mrb[0].mxu0 %v195
    %v425 = vpop.f32.mrb[0].mxu0
    %v426 = vadd.f32 0.0, %v425
    %v427 = vpop.f32.mrb[0].mxu0
    %v428 = vadd.f32 0.0, %v427
    %v429 = vpop.f32.mrb[0].mxu0
    %v430 = vadd.f32 0.0, %v429
    %v431 = vpop.f32.mrb[0].mxu0
    %v432 = vadd.f32 0.0, %v431
    %433 = vmatprep.mubr.bf16.mxu0 0
    %434 = vmatmul.mubr.bf16.gmra.mrb[0].mxu0 %v198
    %v435 = vpop.f32.mrb[0].mxu0
    %v436 = vadd.f32 0.0, %v435
    %v437 = vpop.f32.mrb[0].mxu0
    %v438 = vadd.f32 0.0, %v437
    %v439 = vpop.f32.mrb[0].mxu0
    %v440 = vadd.f32 0.0, %v439
    %v441 = vpop.f32.mrb[0].mxu0
    %v442 = vadd.f32 0.0, %v441
    %443 = vdwg.mxu0
    %444 = vmatprep.subr.bf16.mxu0 %v223
    %445 = vmatpush1.bf16.msra.mxu0 %v220
    %446 = vmatprep.subr.bf16.mxu0 0
    %447 = vmatpush1.bf16.msra.mxu0 0
    %448 = vmatprep.subr.bf16.mxu0 0
    %449 = vmatpush1.bf16.msra.mxu0 0
    %450 = vmatprep.subr.bf16.mxu0 0
    %451 = vmatpush1.bf16.msra.mxu0 0
    %452 = vmatprep.subr.bf16.mxu0 0
    %453 = vmatpush1.bf16.msra.mxu0 0
    %454 = vmatprep.subr.bf16.mxu0 0
    %455 = vmatpush1.bf16.msra.mxu0 0
    %456 = vmatprep.subr.bf16.mxu0 0
    %457 = vmatpush1.bf16.msra.mxu0 0
    %458 = vmatprep.subr.bf16.mxu0 0
    %459 = vmatpush1.bf16.msra.mxu0 0
    %460 = vmatprep.subr.bf16.mxu0 0
    %461 = vmatpush1.bf16.msra.mxu0 0
    %462 = vmatprep.subr.bf16.mxu0 0
    %463 = vmatpush1.bf16.msra.mxu0 0
    %464 = vmatprep.subr.bf16.mxu0 0
    %465 = vmatpush1.bf16.msra.mxu0 0
    %466 = vmatprep.subr.bf16.mxu0 0
    %467 = vmatpush1.bf16.msra.mxu0 0
    %468 = vmatprep.subr.bf16.mxu0 0
    %469 = vmatpush1.bf16.msra.mxu0 0
    %470 = vmatprep.subr.bf16.mxu0 0
    %471 = vmatpush1.bf16.msra.mxu0 0
    %472 = vmatprep.subr.bf16.mxu0 0
    %473 = vmatpush1.bf16.msra.mxu0 0
    %474 = vmatprep.subr.bf16.mxu0 0
    %475 = vmatpush1.bf16.msra.mxu0 0
    %476 = vmatprep.mubr.bf16.mxu0 0
    %477 = vmatmul.mubr.bf16.gmra.mrb[0].mxu0 %v189
    %v478 = vpop.f32.mrb[0].mxu0
    %v479 = vadd.f32 0.0, %v478
    %v480 = vpop.f32.mrb[0].mxu0
    %v481 = vadd.f32 0.0, %v480
    %v482 = vpop.f32.mrb[0].mxu0
    %v483 = vadd.f32 0.0, %v482
    %v484 = vpop.f32.mrb[0].mxu0
    %v485 = vadd.f32 0.0, %v484
    %486 = vmatprep.mubr.bf16.mxu0 0
    %487 = vmatmul.mubr.bf16.gmra.mrb[0].mxu0 %v192
    %v488 = vpop.f32.mrb[0].mxu0
    %v489 = vadd.f32 0.0, %v488
    %v490 = vpop.f32.mrb[0].mxu0
    %v491 = vadd.f32 0.0, %v490
    %v492 = vpop.f32.mrb[0].mxu0
    %v493 = vadd.f32 0.0, %v492
    %v494 = vpop.f32.mrb[0].mxu0
    %v495 = vadd.f32 0.0, %v494
    %496 = vmatprep.mubr.bf16.mxu0 0
    %497 = vmatmul.mubr.bf16.gmra.mrb[0].mxu0 %v195
    %v498 = vpop.f32.mrb[0].mxu0
    %v499 = vadd.f32 0.0, %v498
    %v500 = vpop.f32.mrb[0].mxu0
    %v501 = vadd.f32 0.0, %v500
    %v502 = vpop.f32.mrb[0].mxu0
    %v503 = vadd.f32 0.0, %v502
    %v504 = vpop.f32.mrb[0].mxu0
    %v505 = vadd.f32 0.0, %v504
    %506 = vmatprep.mubr.bf16.mxu0 0
    %507 = vmatmul.mubr.bf16.gmra.mrb[0].mxu0 %v198
    %v508 = vpop.f32.mrb[0].mxu0
    %v509 = vadd.f32 0.0, %v508
    %v510 = vpop.f32.mrb[0].mxu0
    %v511 = vadd.f32 0.0, %v510
    %v512 = vpop.f32.mrb[0].mxu0
    %v513 = vadd.f32 0.0, %v512
    %v514 = vpop.f32.mrb[0].mxu0
    %v515 = vadd.f32 0.0, %v514
    %516 = vdwg.mxu0
    %v517 = vmax.f32 %v260, %v406
    %v518 = vmax.f32 %v262, %v408
    %v519 = vmax.f32 %v333, %v479
    %v520 = vmax.f32 %v335, %v481
    %v521 = vmax.f32 %v264, %v410
    %v522 = vmax.f32 %v266, %v412
    %v523 = vmax.f32 %v337, %v483
    %v524 = vmax.f32 %v339, %v485
    %v525 = vmax.f32 %v270, %v416
    %v526 = vmax.f32 %v272, %v418
    %v527 = vmax.f32 %v343, %v489
    %v528 = vmax.f32 %v345, %v491
    %v529 = vmax.f32 %v274, %v420
    %v530 = vmax.f32 %v276, %v422
    %v531 = vmax.f32 %v347, %v493
    %v532 = vmax.f32 %v349, %v495
    %v533 = vmax.f32 %v280, %v426
    %v534 = vmax.f32 %v282, %v428
    %v535 = vmax.f32 %v353, %v499
    %v536 = vmax.f32 %v355, %v501
    %v537 = vmax.f32 %v284, %v430
    %v538 = vmax.f32 %v286, %v432
    %v539 = vmax.f32 %v357, %v503
    %v540 = vmax.f32 %v359, %v505
    %v541 = vmax.f32 %v290, %v436
    %v542 = vmax.f32 %v292, %v438
    %v543 = vmax.f32 %v363, %v509
    %v544 = vmax.f32 %v365, %v511
    %v545 = vmax.f32 %v294, %v440
    %v546 = vmax.f32 %v296, %v442
    %v547 = vmax.f32 %v367, %v513
    %v548 = vmax.f32 %v369, %v515
    %550 = vset.pattern.permute.xlu0 0
    %551 = vperm.xlu0 %550, %v82
    %v552 = vpop.permute.xlu0 %551
    %555 = vset.pattern.permute.xlu0 0
    %556 = vperm.xlu0 %555, %v83
    %v557 = vpop.permute.xlu0 %556
    %560 = vset.pattern.permute.xlu0 0
    %561 = vperm.xlu0 %560, %v84
    %v562 = vpop.permute.xlu0 %561
    %565 = vset.pattern.permute.xlu0 0
    %566 = vperm.xlu0 %565, %v85
    %v567 = vpop.permute.xlu0 %566
    %570 = vset.pattern.permute.xlu0 0
    %571 = vperm.xlu0 %570, %v86
    %v572 = vpop.permute.xlu0 %571
    %575 = vset.pattern.permute.xlu0 0
    %576 = vperm.xlu0 %575, %v87
    %v577 = vpop.permute.xlu0 %576
    %580 = vset.pattern.permute.xlu0 0
    %581 = vperm.xlu0 %580, %v88
    %v582 = vpop.permute.xlu0 %581
    %585 = vset.pattern.permute.xlu0 0
    %586 = vperm.xlu0 %585, %v89
    %v587 = vpop.permute.xlu0 %586
    %v589 = vadd.f32 %v517, %v552
    %v590 = vadd.f32 %v518, %v552
    %v591 = vadd.f32 %v519, %v552
    %v592 = vadd.f32 %v520, %v552
    %v593 = vadd.f32 %v521, %v557
    %v594 = vadd.f32 %v522, %v557
    %v595 = vadd.f32 %v523, %v557
    %v596 = vadd.f32 %v524, %v557
    %v597 = vadd.f32 %v525, %v562
    %v598 = vadd.f32 %v526, %v562
    %v599 = vadd.f32 %v527, %v562
    %v600 = vadd.f32 %v528, %v562
    %v601 = vadd.f32 %v529, %v567
    %v602 = vadd.f32 %v530, %v567
    %v603 = vadd.f32 %v531, %v567
    %v604 = vadd.f32 %v532, %v567
    %v605 = vadd.f32 %v533, %v572
    %v606 = vadd.f32 %v534, %v572
    %v607 = vadd.f32 %v535, %v572
    %v608 = vadd.f32 %v536, %v572
    %v609 = vadd.f32 %v537, %v577
    %v610 = vadd.f32 %v538, %v577
    %v611 = vadd.f32 %v539, %v577
    %v612 = vadd.f32 %v540, %v577
    %v613 = vadd.f32 %v541, %v582
    %v614 = vadd.f32 %v542, %v582
    %v615 = vadd.f32 %v543, %v582
    %v616 = vadd.f32 %v544, %v582
    %v617 = vadd.f32 %v545, %v587
    %v618 = vadd.f32 %v546, %v587
    %v619 = vadd.f32 %v547, %v587
    %v620 = vadd.f32 %v548, %v587
    %v621 = vmax.f32 %v589, 0.0
    %v622 = vmax.f32 %v590, 0.0
    %v623 = vmax.f32 %v591, 0.0
    %v624 = vmax.f32 %v592, 0.0
    %v625 = vmax.f32 %v593, 0.0
    %v626 = vmax.f32 %v594, 0.0
    %v627 = vmax.f32 %v595, 0.0
    %v628 = vmax.f32 %v596, 0.0
    %v629 = vmax.f32 %v597, 0.0
    %v630 = vmax.f32 %v598, 0.0
    %v631 = vmax.f32 %v599, 0.0
    %v632 = vmax.f32 %v600, 0.0
    %v633 = vmax.f32 %v601, 0.0
    %v634 = vmax.f32 %v602, 0.0
    %v635 = vmax.f32 %v603, 0.0
    %v636 = vmax.f32 %v604, 0.0
    %v637 = vmax.f32 %v605, 0.0
    %v638 = vmax.f32 %v606, 0.0
    %v639 = vmax.f32 %v607, 0.0
    %v640 = vmax.f32 %v608, 0.0
    %v641 = vmax.f32 %v609, 0.0
    %v642 = vmax.f32 %v610, 0.0
    %v643 = vmax.f32 %v611, 0.0
    %v644 = vmax.f32 %v612, 0.0
    %v645 = vmax.f32 %v613, 0.0
    %v646 = vmax.f32 %v614, 0.0
    %v647 = vmax.f32 %v615, 0.0
    %v648 = vmax.f32 %v616, 0.0
    %v649 = vmax.f32 %v617, 0.0
    %v650 = vmax.f32 %v618, 0.0
    %v651 = vmax.f32 %v619, 0.0
    %v652 = vmax.f32 %v620, 0.0
    %vm653 = vcmp.eq.s32.totalorder %v139, 0
    %vm654 = vcmp.eq.s32.totalorder %v140, 0
    %vm655 = vcmp.eq.s32.totalorder %v141, 0
    %vm656 = vcmp.eq.s32.totalorder %v142, 0
    %v657 = vsel %vm653, 1, 0
    %v658 = vsel %vm654, 1, 0
    %v659 = vsel %vm655, 1, 0
    %v660 = vsel %vm656, 1, 0
    %vm661 = vcmp.eq.s32.totalorder %v657, 1
    %vm662 = vcmp.eq.s32.totalorder %v658, 1
    %vm663 = vcmp.eq.s32.totalorder %v659, 1
    %vm664 = vcmp.eq.s32.totalorder %v660, 1
    %v665 = vsel %vm661, 0.0, %v621
    %v666 = vsel %vm662, 0.0, %v622
    %v667 = vsel %vm663, 0.0, %v623
    %v668 = vsel %vm664, 0.0, %v624
    %v669 = vsel %vm661, 0.0, %v625
    %v670 = vsel %vm662, 0.0, %v626
    %v671 = vsel %vm663, 0.0, %v627
    %v672 = vsel %vm664, 0.0, %v628
    %v673 = vsel %vm661, 0.0, %v629
    %v674 = vsel %vm662, 0.0, %v630
    %v675 = vsel %vm663, 0.0, %v631
    %v676 = vsel %vm664, 0.0, %v632
    %v677 = vsel %vm661, 0.0, %v633
    %v678 = vsel %vm662, 0.0, %v634
    %v679 = vsel %vm663, 0.0, %v635
    %v680 = vsel %vm664, 0.0, %v636
    %v681 = vsel %vm661, 0.0, %v637
    %v682 = vsel %vm662, 0.0, %v638
    %v683 = vsel %vm663, 0.0, %v639
    %v684 = vsel %vm664, 0.0, %v640
    %v685 = vsel %vm661, 0.0, %v641
    %v686 = vsel %vm662, 0.0, %v642
    %v687 = vsel %vm663, 0.0, %v643
    %v688 = vsel %vm664, 0.0, %v644
    %v689 = vsel %vm661, 0.0, %v645
    %v690 = vsel %vm662, 0.0, %v646
    %v691 = vsel %vm663, 0.0, %v647
    %v692 = vsel %vm664, 0.0, %v648
    %v693 = vsel %vm661, 0.0, %v649
    %v694 = vsel %vm662, 0.0, %v650
    %v695 = vsel %vm663, 0.0, %v651
    %v696 = vsel %vm664, 0.0, %v652
    %v697 = vpack.c.bf16 %v669, %v665
    %v698 = vpack.c.bf16 %v670, %v666
    %v699 = vpack.c.bf16 %v671, %v667
    %v700 = vpack.c.bf16 %v672, %v668
    %v701 = vpack.c.bf16 %v677, %v673
    %v702 = vpack.c.bf16 %v678, %v674
    %v703 = vpack.c.bf16 %v679, %v675
    %v704 = vpack.c.bf16 %v680, %v676
    %v705 = vpack.c.bf16 %v685, %v681
    %v706 = vpack.c.bf16 %v686, %v682
    %v707 = vpack.c.bf16 %v687, %v683
    %v708 = vpack.c.bf16 %v688, %v684
    %v709 = vpack.c.bf16 %v693, %v689
    %v710 = vpack.c.bf16 %v694, %v690
    %v711 = vpack.c.bf16 %v695, %v691
    %v712 = vpack.c.bf16 %v696, %v692
    %713 = vst [vmem:[#allocation2] sm:$0xff] %v697
    %714 = vst [vmem:[#allocation2 + $0x8] sm:$0xff] %v698
    %715 = vst [vmem:[#allocation2 + $0x10] sm:$0xff] %v699
    %716 = vst [vmem:[#allocation2 + $0x18] sm:$0xff] %v700
    %717 = vst [vmem:[#allocation2 + $0x20] sm:$0xff] %v701
    %718 = vst [vmem:[#allocation2 + $0x28] sm:$0xff] %v702
    %719 = vst [vmem:[#allocation2 + $0x30] sm:$0xff] %v703
    %720 = vst [vmem:[#allocation2 + $0x38] sm:$0xff] %v704
    %721 = vst [vmem:[#allocation2 + $0x40] sm:$0xff] %v705
    %722 = vst [vmem:[#allocation2 + $0x48] sm:$0xff] %v706
    %723 = vst [vmem:[#allocation2 + $0x50] sm:$0xff] %v707
    %724 = vst [vmem:[#allocation2 + $0x58] sm:$0xff] %v708
    %725 = vst [vmem:[#allocation2 + $0x60] sm:$0xff] %v709
    %726 = vst [vmem:[#allocation2 + $0x68] sm:$0xff] %v710
    %727 = vst [vmem:[#allocation2 + $0x70] sm:$0xff] %v711
    %728 = vst [vmem:[#allocation2 + $0x78] sm:$0xff] %v712
    %s729 = scalar_lea.vmem %s0, 32
    %v730 = vld [vmem:[%s729] sm:$0xff]
    %v731 = vld [vmem:[%s729 + $0x8] sm:$0xff]
    %v732 = vld [vmem:[%s729 + $0x10] sm:$0xff]
    %v733 = vld [vmem:[%s729 + $0x18] sm:$0xff]
    %v738 = vunpack.c.l.b16 %v730
    %v739 = vunpack.c.h.b16 %v730
    %v740 = vunpack.c.l.b16 %v731
    %v741 = vunpack.c.h.b16 %v731
    %v742 = vunpack.c.l.b16 %v732
    %v743 = vunpack.c.h.b16 %v732
    %v744 = vunpack.c.l.b16 %v733
    %v745 = vunpack.c.h.b16 %v733
    %v746 = vpack.c.b16 %v738, %v738
    %v747 = vpack.c.b16 %v739, %v739
    %v748 = vpack.c.b16 %v740, %v740
    %v749 = vpack.c.b16 %v741, %v741
    %v750 = vpack.c.b16 %v742, %v742
    %v751 = vpack.c.b16 %v743, %v743
    %v752 = vpack.c.b16 %v744, %v744
    %v753 = vpack.c.b16 %v745, %v745
    %v755 = vsel %vm200, %v746, 0
    %v758 = vsel %vm200, %v747, 0
    %v761 = vsel %vm200, %v748, 0
    %v764 = vsel %vm200, %v749, 0
    %v767 = vsel %vm200, %v750, 0
    %v770 = vsel %vm200, %v751, 0
    %v773 = vsel %vm200, %v752, 0
    %v776 = vsel %vm200, %v753, 0
    %778 = vmatprep.subr.bf16.mxu0 %v758
    %779 = vmatpush1.bf16.msra.mxu0 %v755
    %780 = vmatprep.subr.bf16.mxu0 0
    %781 = vmatpush1.bf16.msra.mxu0 0
    %782 = vmatprep.subr.bf16.mxu0 0
    %783 = vmatpush1.bf16.msra.mxu0 0
    %784 = vmatprep.subr.bf16.mxu0 0
    %785 = vmatpush1.bf16.msra.mxu0 0
    %786 = vmatprep.subr.bf16.mxu0 0
    %787 = vmatpush1.bf16.msra.mxu0 0
    %788 = vmatprep.subr.bf16.mxu0 0
    %789 = vmatpush1.bf16.msra.mxu0 0
    %790 = vmatprep.subr.bf16.mxu0 0
    %791 = vmatpush1.bf16.msra.mxu0 0
    %792 = vmatprep.subr.bf16.mxu0 0
    %793 = vmatpush1.bf16.msra.mxu0 0
    %794 = vmatprep.subr.bf16.mxu0 0
    %795 = vmatpush1.bf16.msra.mxu0 0
    %796 = vmatprep.subr.bf16.mxu0 0
    %797 = vmatpush1.bf16.msra.mxu0 0
    %798 = vmatprep.subr.bf16.mxu0 0
    %799 = vmatpush1.bf16.msra.mxu0 0
    %800 = vmatprep.subr.bf16.mxu0 0
    %801 = vmatpush1.bf16.msra.mxu0 0
    %802 = vmatprep.subr.bf16.mxu0 0
    %803 = vmatpush1.bf16.msra.mxu0 0
    %804 = vmatprep.subr.bf16.mxu0 0
    %805 = vmatpush1.bf16.msra.mxu0 0
    %806 = vmatprep.subr.bf16.mxu0 0
    %807 = vmatpush1.bf16.msra.mxu0 0
    %808 = vmatprep.subr.bf16.mxu0 0
    %809 = vmatpush1.bf16.msra.mxu0 0
    %810 = vmatprep.mubr.bf16.mxu0 0
    %811 = vmatmul.mubr.bf16.gmra.mrb[0].mxu0 %v189
    %v812 = vpop.f32.mrb[0].mxu0
    %v813 = vadd.f32 0.0, %v812
    %v814 = vpop.f32.mrb[0].mxu0
    %v815 = vadd.f32 0.0, %v814
    %v816 = vpop.f32.mrb[0].mxu0
    %v817 = vadd.f32 0.0, %v816
    %v818 = vpop.f32.mrb[0].mxu0
    %v819 = vadd.f32 0.0, %v818
    %820 = vmatprep.mubr.bf16.mxu0 0
    %821 = vmatmul.mubr.bf16.gmra.mrb[0].mxu0 %v192
    %v822 = vpop.f32.mrb[0].mxu0
    %v823 = vadd.f32 0.0, %v822
    %v824 = vpop.f32.mrb[0].mxu0
    %v825 = vadd.f32 0.0, %v824
    %v826 = vpop.f32.mrb[0].mxu0
    %v827 = vadd.f32 0.0, %v826
    %v828 = vpop.f32.mrb[0].mxu0
    %v829 = vadd.f32 0.0, %v828
    %830 = vmatprep.mubr.bf16.mxu0 0
    %831 = vmatmul.mubr.bf16.gmra.mrb[0].mxu0 %v195
    %v832 = vpop.f32.mrb[0].mxu0
    %v833 = vadd.f32 0.0, %v832
    %v834 = vpop.f32.mrb[0].mxu0
    %v835 = vadd.f32 0.0, %v834
    %v836 = vpop.f32.mrb[0].mxu0
    %v837 = vadd.f32 0.0, %v836
    %v838 = vpop.f32.mrb[0].mxu0
    %v839 = vadd.f32 0.0, %v838
    %840 = vmatprep.mubr.bf16.mxu0 0
    %841 = vmatmul.mubr.bf16.gmra.mrb[0].mxu0 %v198
    %v842 = vpop.f32.mrb[0].mxu0
    %v843 = vadd.f32 0.0, %v842
    %v844 = vpop.f32.mrb[0].mxu0
    %v845 = vadd.f32 0.0, %v844
    %v846 = vpop.f32.mrb[0].mxu0
    %v847 = vadd.f32 0.0, %v846
    %v848 = vpop.f32.mrb[0].mxu0
    %v849 = vadd.f32 0.0, %v848
    %850 = vdwg.mxu0
    %851 = vmatprep.subr.bf16.mxu0 %v764
    %852 = vmatpush1.bf16.msra.mxu0 %v761
    %853 = vmatprep.subr.bf16.mxu0 0
    %854 = vmatpush1.bf16.msra.mxu0 0
    %855 = vmatprep.subr.bf16.mxu0 0
    %856 = vmatpush1.bf16.msra.mxu0 0
    %857 = vmatprep.subr.bf16.mxu0 0
    %858 = vmatpush1.bf16.msra.mxu0 0
    %859 = vmatprep.subr.bf16.mxu0 0
    %860 = vmatpush1.bf16.msra.mxu0 0
    %861 = vmatprep.subr.bf16.mxu0 0
    %862 = vmatpush1.bf16.msra.mxu0 0
    %863 = vmatprep.subr.bf16.mxu0 0
    %864 = vmatpush1.bf16.msra.mxu0 0
    %865 = vmatprep.subr.bf16.mxu0 0
    %866 = vmatpush1.bf16.msra.mxu0 0
    %867 = vmatprep.subr.bf16.mxu0 0
    %868 = vmatpush1.bf16.msra.mxu0 0
    %869 = vmatprep.subr.bf16.mxu0 0
    %870 = vmatpush1.bf16.msra.mxu0 0
    %871 = vmatprep.subr.bf16.mxu0 0
    %872 = vmatpush1.bf16.msra.mxu0 0
    %873 = vmatprep.subr.bf16.mxu0 0
    %874 = vmatpush1.bf16.msra.mxu0 0
    %875 = vmatprep.subr.bf16.mxu0 0
    %876 = vmatpush1.bf16.msra.mxu0 0
    %877 = vmatprep.subr.bf16.mxu0 0
    %878 = vmatpush1.bf16.msra.mxu0 0
    %879 = vmatprep.subr.bf16.mxu0 0
    %880 = vmatpush1.bf16.msra.mxu0 0
    %881 = vmatprep.subr.bf16.mxu0 0
    %882 = vmatpush1.bf16.msra.mxu0 0
    %883 = vmatprep.mubr.bf16.mxu0 0
    %884 = vmatmul.mubr.bf16.gmra.mrb[0].mxu0 %v189
    %v885 = vpop.f32.mrb[0].mxu0
    %v886 = vadd.f32 0.0, %v885
    %v887 = vpop.f32.mrb[0].mxu0
    %v888 = vadd.f32 0.0, %v887
    %v889 = vpop.f32.mrb[0].mxu0
    %v890 = vadd.f32 0.0, %v889
    %v891 = vpop.f32.mrb[0].mxu0
    %v892 = vadd.f32 0.0, %v891
    %893 = vmatprep.mubr.bf16.mxu0 0
    %894 = vmatmul.mubr.bf16.gmra.mrb[0].mxu0 %v192
    %v895 = vpop.f32.mrb[0].mxu0
    %v896 = vadd.f32 0.0, %v895
    %v897 = vpop.f32.mrb[0].mxu0
    %v898 = vadd.f32 0.0, %v897
    %v899 = vpop.f32.mrb[0].mxu0
    %v900 = vadd.f32 0.0, %v899
    %v901 = vpop.f32.mrb[0].mxu0
    %v902 = vadd.f32 0.0, %v901
    %903 = vmatprep.mubr.bf16.mxu0 0
    %904 = vmatmul.mubr.bf16.gmra.mrb[0].mxu0 %v195
    %v905 = vpop.f32.mrb[0].mxu0
    %v906 = vadd.f32 0.0, %v905
    %v907 = vpop.f32.mrb[0].mxu0
    %v908 = vadd.f32 0.0, %v907
    %v909 = vpop.f32.mrb[0].mxu0
    %v910 = vadd.f32 0.0, %v909
    %v911 = vpop.f32.mrb[0].mxu0
    %v912 = vadd.f32 0.0, %v911
    %913 = vmatprep.mubr.bf16.mxu0 0
    %914 = vmatmul.mubr.bf16.gmra.mrb[0].mxu0 %v198
    %v915 = vpop.f32.mrb[0].mxu0
    %v916 = vadd.f32 0.0, %v915
    %v917 = vpop.f32.mrb[0].mxu0
    %v918 = vadd.f32 0.0, %v917
    %v919 = vpop.f32.mrb[0].mxu0
    %v920 = vadd.f32 0.0, %v919
    %v921 = vpop.f32.mrb[0].mxu0
    %v922 = vadd.f32 0.0, %v921
    %923 = vdwg.mxu0
    %924 = vmatprep.subr.bf16.mxu0 %v770
    %925 = vmatpush1.bf16.msra.mxu0 %v767
    %926 = vmatprep.subr.bf16.mxu0 0
    %927 = vmatpush1.bf16.msra.mxu0 0
    %928 = vmatprep.subr.bf16.mxu0 0
    %929 = vmatpush1.bf16.msra.mxu0 0
    %930 = vmatprep.subr.bf16.mxu0 0
    %931 = vmatpush1.bf16.msra.mxu0 0
    %932 = vmatprep.subr.bf16.mxu0 0
    %933 = vmatpush1.bf16.msra.mxu0 0
    %934 = vmatprep.subr.bf16.mxu0 0
    %935 = vmatpush1.bf16.msra.mxu0 0
    %936 = vmatprep.subr.bf16.mxu0 0
    %937 = vmatpush1.bf16.msra.mxu0 0
    %938 = vmatprep.subr.bf16.mxu0 0
    %939 = vmatpush1.bf16.msra.mxu0 0
    %940 = vmatprep.subr.bf16.mxu0 0
    %941 = vmatpush1.bf16.msra.mxu0 0
    %942 = vmatprep.subr.bf16.mxu0 0
    %943 = vmatpush1.bf16.msra.mxu0 0
    %944 = vmatprep.subr.bf16.mxu0 0
    %945 = vmatpush1.bf16.msra.mxu0 0
    %946 = vmatprep.subr.bf16.mxu0 0
    %947 = vmatpush1.bf16.msra.mxu0 0
    %948 = vmatprep.subr.bf16.mxu0 0
    %949 = vmatpush1.bf16.msra.mxu0 0
    %950 = vmatprep.subr.bf16.mxu0 0
    %951 = vmatpush1.bf16.msra.mxu0 0
    %952 = vmatprep.subr.bf16.mxu0 0
    %953 = vmatpush1.bf16.msra.mxu0 0
    %954 = vmatprep.subr.bf16.mxu0 0
    %955 = vmatpush1.bf16.msra.mxu0 0
    %956 = vmatprep.mubr.bf16.mxu0 0
    %957 = vmatmul.mubr.bf16.gmra.mrb[0].mxu0 %v189
    %v958 = vpop.f32.mrb[0].mxu0
    %v959 = vadd.f32 0.0, %v958
    %v960 = vpop.f32.mrb[0].mxu0
    %v961 = vadd.f32 0.0, %v960
    %v962 = vpop.f32.mrb[0].mxu0
    %v963 = vadd.f32 0.0, %v962
    %v964 = vpop.f32.mrb[0].mxu0
    %v965 = vadd.f32 0.0, %v964
    %966 = vmatprep.mubr.bf16.mxu0 0
    %967 = vmatmul.mubr.bf16.gmra.mrb[0].mxu0 %v192
    %v968 = vpop.f32.mrb[0].mxu0
    %v969 = vadd.f32 0.0, %v968
    %v970 = vpop.f32.mrb[0].mxu0
    %v971 = vadd.f32 0.0, %v970
    %v972 = vpop.f32.mrb[0].mxu0
    %v973 = vadd.f32 0.0, %v972
    %v974 = vpop.f32.mrb[0].mxu0
    %v975 = vadd.f32 0.0, %v974
    %976 = vmatprep.mubr.bf16.mxu0 0
    %977 = vmatmul.mubr.bf16.gmra.mrb[0].mxu0 %v195
    %v978 = vpop.f32.mrb[0].mxu0
    %v979 = vadd.f32 0.0, %v978
    %v980 = vpop.f32.mrb[0].mxu0
    %v981 = vadd.f32 0.0, %v980
    %v982 = vpop.f32.mrb[0].mxu0
    %v983 = vadd.f32 0.0, %v982
    %v984 = vpop.f32.mrb[0].mxu0
    %v985 = vadd.f32 0.0, %v984
    %986 = vmatprep.mubr.bf16.mxu0 0
    %987 = vmatmul.mubr.bf16.gmra.mrb[0].mxu0 %v198
    %v988 = vpop.f32.mrb[0].mxu0
    %v989 = vadd.f32 0.0, %v988
    %v990 = vpop.f32.mrb[0].mxu0
    %v991 = vadd.f32 0.0, %v990
    %v992 = vpop.f32.mrb[0].mxu0
    %v993 = vadd.f32 0.0, %v992
    %v994 = vpop.f32.mrb[0].mxu0
    %v995 = vadd.f32 0.0, %v994
    %996 = vdwg.mxu0
    %997 = vmatprep.subr.bf16.mxu0 %v776
    %998 = vmatpush1.bf16.msra.mxu0 %v773
    %999 = vmatprep.subr.bf16.mxu0 0
    %1000 = vmatpush1.bf16.msra.mxu0 0
    %1001 = vmatprep.subr.bf16.mxu0 0
    %1002 = vmatpush1.bf16.msra.mxu0 0
    %1003 = vmatprep.subr.bf16.mxu0 0
    %1004 = vmatpush1.bf16.msra.mxu0 0
    %1005 = vmatprep.subr.bf16.mxu0 0
    %1006 = vmatpush1.bf16.msra.mxu0 0
    %1007 = vmatprep.subr.bf16.mxu0 0
    %1008 = vmatpush1.bf16.msra.mxu0 0
    %1009 = vmatprep.subr.bf16.mxu0 0
    %1010 = vmatpush1.bf16.msra.mxu0 0
    %1011 = vmatprep.subr.bf16.mxu0 0
    %1012 = vmatpush1.bf16.msra.mxu0 0
    %1013 = vmatprep.subr.bf16.mxu0 0
    %1014 = vmatpush1.bf16.msra.mxu0 0
    %1015 = vmatprep.subr.bf16.mxu0 0
    %1016 = vmatpush1.bf16.msra.mxu0 0
    %1017 = vmatprep.subr.bf16.mxu0 0
    %1018 = vmatpush1.bf16.msra.mxu0 0
    %1019 = vmatprep.subr.bf16.mxu0 0
    %1020 = vmatpush1.bf16.msra.mxu0 0
    %1021 = vmatprep.subr.bf16.mxu0 0
    %1022 = vmatpush1.bf16.msra.mxu0 0
    %1023 = vmatprep.subr.bf16.mxu0 0
    %1024 = vmatpush1.bf16.msra.mxu0 0
    %1025 = vmatprep.subr.bf16.mxu0 0
    %1026 = vmatpush1.bf16.msra.mxu0 0
    %1027 = vmatprep.subr.bf16.mxu0 0
    %1028 = vmatpush1.bf16.msra.mxu0 0
    %1029 = vmatprep.mubr.bf16.mxu0 0
    %1030 = vmatmul.mubr.bf16.gmra.mrb[0].mxu0 %v189
    %v1031 = vpop.f32.mrb[0].mxu0
    %v1032 = vadd.f32 0.0, %v1031
    %v1033 = vpop.f32.mrb[0].mxu0
    %v1034 = vadd.f32 0.0, %v1033
    %v1035 = vpop.f32.mrb[0].mxu0
    %v1036 = vadd.f32 0.0, %v1035
    %v1037 = vpop.f32.mrb[0].mxu0
    %v1038 = vadd.f32 0.0, %v1037
    %1039 = vmatprep.mubr.bf16.mxu0 0
    %1040 = vmatmul.mubr.bf16.gmra.mrb[0].mxu0 %v192
    %v1041 = vpop.f32.mrb[0].mxu0
    %v1042 = vadd.f32 0.0, %v1041
    %v1043 = vpop.f32.mrb[0].mxu0
    %v1044 = vadd.f32 0.0, %v1043
    %v1045 = vpop.f32.mrb[0].mxu0
    %v1046 = vadd.f32 0.0, %v1045
    %v1047 = vpop.f32.mrb[0].mxu0
    %v1048 = vadd.f32 0.0, %v1047
    %1049 = vmatprep.mubr.bf16.mxu0 0
    %1050 = vmatmul.mubr.bf16.gmra.mrb[0].mxu0 %v195
    %v1051 = vpop.f32.mrb[0].mxu0
    %v1052 = vadd.f32 0.0, %v1051
    %v1053 = vpop.f32.mrb[0].mxu0
    %v1054 = vadd.f32 0.0, %v1053
    %v1055 = vpop.f32.mrb[0].mxu0
    %v1056 = vadd.f32 0.0, %v1055
    %v1057 = vpop.f32.mrb[0].mxu0
    %v1058 = vadd.f32 0.0, %v1057
    %1059 = vmatprep.mubr.bf16.mxu0 0
    %1060 = vmatmul.mubr.bf16.gmra.mrb[0].mxu0 %v198
    %v1061 = vpop.f32.mrb[0].mxu0
    %v1062 = vadd.f32 0.0, %v1061
    %v1063 = vpop.f32.mrb[0].mxu0
    %v1064 = vadd.f32 0.0, %v1063
    %v1065 = vpop.f32.mrb[0].mxu0
    %v1066 = vadd.f32 0.0, %v1065
    %v1067 = vpop.f32.mrb[0].mxu0
    %v1068 = vadd.f32 0.0, %v1067
    %1069 = vdwg.mxu0
    %v1070 = vmax.f32 %v813, %v959
    %v1071 = vmax.f32 %v815, %v961
    %v1072 = vmax.f32 %v886, %v1032
    %v1073 = vmax.f32 %v888, %v1034
    %v1074 = vmax.f32 %v817, %v963
    %v1075 = vmax.f32 %v819, %v965
    %v1076 = vmax.f32 %v890, %v1036
    %v1077 = vmax.f32 %v892, %v1038
    %v1078 = vmax.f32 %v823, %v969
    %v1079 = vmax.f32 %v825, %v971
    %v1080 = vmax.f32 %v896, %v1042
    %v1081 = vmax.f32 %v898, %v1044
    %v1082 = vmax.f32 %v827, %v973
    %v1083 = vmax.f32 %v829, %v975
    %v1084 = vmax.f32 %v900, %v1046
    %v1085 = vmax.f32 %v902, %v1048
    %v1086 = vmax.f32 %v833, %v979
    %v1087 = vmax.f32 %v835, %v981
    %v1088 = vmax.f32 %v906, %v1052
    %v1089 = vmax.f32 %v908, %v1054
    %v1090 = vmax.f32 %v837, %v983
    %v1091 = vmax.f32 %v839, %v985
    %v1092 = vmax.f32 %v910, %v1056
    %v1093 = vmax.f32 %v912, %v1058
    %v1094 = vmax.f32 %v843, %v989
    %v1095 = vmax.f32 %v845, %v991
    %v1096 = vmax.f32 %v916, %v1062
    %v1097 = vmax.f32 %v918, %v1064
    %v1098 = vmax.f32 %v847, %v993
    %v1099 = vmax.f32 %v849, %v995
    %v1100 = vmax.f32 %v920, %v1066
    %v1101 = vmax.f32 %v922, %v1068
    %v1102 = vadd.f32 %v1070, %v552
    %v1103 = vadd.f32 %v1071, %v552
    %v1104 = vadd.f32 %v1072, %v552
    %v1105 = vadd.f32 %v1073, %v552
    %v1106 = vadd.f32 %v1074, %v557
    %v1107 = vadd.f32 %v1075, %v557
    %v1108 = vadd.f32 %v1076, %v557
    %v1109 = vadd.f32 %v1077, %v557
    %v1110 = vadd.f32 %v1078, %v562
    %v1111 = vadd.f32 %v1079, %v562
    %v1112 = vadd.f32 %v1080, %v562
    %v1113 = vadd.f32 %v1081, %v562
    %v1114 = vadd.f32 %v1082, %v567
    %v1115 = vadd.f32 %v1083, %v567
    %v1116 = vadd.f32 %v1084, %v567
    %v1117 = vadd.f32 %v1085, %v567
    %v1118 = vadd.f32 %v1086, %v572
    %v1119 = vadd.f32 %v1087, %v572
    %v1120 = vadd.f32 %v1088, %v572
    %v1121 = vadd.f32 %v1089, %v572
    %v1122 = vadd.f32 %v1090, %v577
    %v1123 = vadd.f32 %v1091, %v577
    %v1124 = vadd.f32 %v1092, %v577
    %v1125 = vadd.f32 %v1093, %v577
    %v1126 = vadd.f32 %v1094, %v582
    %v1127 = vadd.f32 %v1095, %v582
    %v1128 = vadd.f32 %v1096, %v582
    %v1129 = vadd.f32 %v1097, %v582
    %v1130 = vadd.f32 %v1098, %v587
    %v1131 = vadd.f32 %v1099, %v587
    %v1132 = vadd.f32 %v1100, %v587
    %v1133 = vadd.f32 %v1101, %v587
    %v1134 = vmax.f32 %v1102, 0.0
    %v1135 = vmax.f32 %v1103, 0.0
    %v1136 = vmax.f32 %v1104, 0.0
    %v1137 = vmax.f32 %v1105, 0.0
    %v1138 = vmax.f32 %v1106, 0.0
    %v1139 = vmax.f32 %v1107, 0.0
    %v1140 = vmax.f32 %v1108, 0.0
    %v1141 = vmax.f32 %v1109, 0.0
    %v1142 = vmax.f32 %v1110, 0.0
    %v1143 = vmax.f32 %v1111, 0.0
    %v1144 = vmax.f32 %v1112, 0.0
    %v1145 = vmax.f32 %v1113, 0.0
    %v1146 = vmax.f32 %v1114, 0.0
    %v1147 = vmax.f32 %v1115, 0.0
    %v1148 = vmax.f32 %v1116, 0.0
    %v1149 = vmax.f32 %v1117, 0.0
    %v1150 = vmax.f32 %v1118, 0.0
    %v1151 = vmax.f32 %v1119, 0.0
    %v1152 = vmax.f32 %v1120, 0.0
    %v1153 = vmax.f32 %v1121, 0.0
    %v1154 = vmax.f32 %v1122, 0.0
    %v1155 = vmax.f32 %v1123, 0.0
    %v1156 = vmax.f32 %v1124, 0.0
    %v1157 = vmax.f32 %v1125, 0.0
    %v1158 = vmax.f32 %v1126, 0.0
    %v1159 = vmax.f32 %v1127, 0.0
    %v1160 = vmax.f32 %v1128, 0.0
    %v1161 = vmax.f32 %v1129, 0.0
    %v1162 = vmax.f32 %v1130, 0.0
    %v1163 = vmax.f32 %v1131, 0.0
    %v1164 = vmax.f32 %v1132, 0.0
    %v1165 = vmax.f32 %v1133, 0.0
    %v1166 = vpack.c.bf16 %v1138, %v1134
    %v1167 = vpack.c.bf16 %v1139, %v1135
    %v1168 = vpack.c.bf16 %v1140, %v1136
    %v1169 = vpack.c.bf16 %v1141, %v1137
    %v1170 = vpack.c.bf16 %v1146, %v1142
    %v1171 = vpack.c.bf16 %v1147, %v1143
    %v1172 = vpack.c.bf16 %v1148, %v1144
    %v1173 = vpack.c.bf16 %v1149, %v1145
    %v1174 = vpack.c.bf16 %v1154, %v1150
    %v1175 = vpack.c.bf16 %v1155, %v1151
    %v1176 = vpack.c.bf16 %v1156, %v1152
    %v1177 = vpack.c.bf16 %v1157, %v1153
    %v1178 = vpack.c.bf16 %v1162, %v1158
    %v1179 = vpack.c.bf16 %v1163, %v1159
    %v1180 = vpack.c.bf16 %v1164, %v1160
    %v1181 = vpack.c.bf16 %v1165, %v1161
    %1182 = vst [vmem:[#allocation2 + $0x80] sm:$0xff] %v1166
    %1183 = vst [vmem:[#allocation2 + $0x88] sm:$0xff] %v1167
    %1184 = vst [vmem:[#allocation2 + $0x90] sm:$0xff] %v1168
    %1185 = vst [vmem:[#allocation2 + $0x98] sm:$0xff] %v1169
    %1186 = vst [vmem:[#allocation2 + $0xa0] sm:$0xff] %v1170
    %1187 = vst [vmem:[#allocation2 + $0xa8] sm:$0xff] %v1171
    %1188 = vst [vmem:[#allocation2 + $0xb0] sm:$0xff] %v1172
    %1189 = vst [vmem:[#allocation2 + $0xb8] sm:$0xff] %v1173
    %1190 = vst [vmem:[#allocation2 + $0xc0] sm:$0xff] %v1174
    %1191 = vst [vmem:[#allocation2 + $0xc8] sm:$0xff] %v1175
    %1192 = vst [vmem:[#allocation2 + $0xd0] sm:$0xff] %v1176
    %1193 = vst [vmem:[#allocation2 + $0xd8] sm:$0xff] %v1177
    %1194 = vst [vmem:[#allocation2 + $0xe0] sm:$0xff] %v1178
    %1195 = vst [vmem:[#allocation2 + $0xe8] sm:$0xff] %v1179
    %1196 = vst [vmem:[#allocation2 + $0xf0] sm:$0xff] %v1180
    %1197 = vst [vmem:[#allocation2 + $0xf8] sm:$0xff] %v1181
    %s1198 = scalar_lea.vmem %s0, 64
    %v1199 = vld [vmem:[%s1198] sm:$0xff]
    %v1200 = vld [vmem:[%s1198 + $0x8] sm:$0xff]
    %v1201 = vld [vmem:[%s1198 + $0x10] sm:$0xff]
    %v1202 = vld [vmem:[%s1198 + $0x18] sm:$0xff]
    %v1207 = vunpack.c.l.b16 %v1199
    %v1208 = vunpack.c.h.b16 %v1199
    %v1209 = vunpack.c.l.b16 %v1200
    %v1210 = vunpack.c.h.b16 %v1200
    %v1211 = vunpack.c.l.b16 %v1201
    %v1212 = vunpack.c.h.b16 %v1201
    %v1213 = vunpack.c.l.b16 %v1202
    %v1214 = vunpack.c.h.b16 %v1202
    %v1215 = vpack.c.b16 %v1207, %v1207
    %v1216 = vpack.c.b16 %v1208, %v1208
    %v1217 = vpack.c.b16 %v1209, %v1209
    %v1218 = vpack.c.b16 %v1210, %v1210
    %v1219 = vpack.c.b16 %v1211, %v1211
    %v1220 = vpack.c.b16 %v1212, %v1212
    %v1221 = vpack.c.b16 %v1213, %v1213
    %v1222 = vpack.c.b16 %v1214, %v1214
    %v1224 = vsel %vm200, %v1215, 0
    %v1227 = vsel %vm200, %v1216, 0
    %v1230 = vsel %vm200, %v1217, 0
    %v1233 = vsel %vm200, %v1218, 0
    %v1236 = vsel %vm200, %v1219, 0
    %v1239 = vsel %vm200, %v1220, 0
    %v1242 = vsel %vm200, %v1221, 0
    %v1245 = vsel %vm200, %v1222, 0
    %1247 = vmatprep.subr.bf16.mxu0 %v1227
    %1248 = vmatpush1.bf16.msra.mxu0 %v1224
    %1249 = vmatprep.subr.bf16.mxu0 0
    %1250 = vmatpush1.bf16.msra.mxu0 0
    %1251 = vmatprep.subr.bf16.mxu0 0
    %1252 = vmatpush1.bf16.msra.mxu0 0
    %1253 = vmatprep.subr.bf16.mxu0 0
    %1254 = vmatpush1.bf16.msra.mxu0 0
    %1255 = vmatprep.subr.bf16.mxu0 0
    %1256 = vmatpush1.bf16.msra.mxu0 0
    %1257 = vmatprep.subr.bf16.mxu0 0
    %1258 = vmatpush1.bf16.msra.mxu0 0
    %1259 = vmatprep.subr.bf16.mxu0 0
    %1260 = vmatpush1.bf16.msra.mxu0 0
    %1261 = vmatprep.subr.bf16.mxu0 0
    %1262 = vmatpush1.bf16.msra.mxu0 0
    %1263 = vmatprep.subr.bf16.mxu0 0
    %1264 = vmatpush1.bf16.msra.mxu0 0
    %1265 = vmatprep.subr.bf16.mxu0 0
    %1266 = vmatpush1.bf16.msra.mxu0 0
    %1267 = vmatprep.subr.bf16.mxu0 0
    %1268 = vmatpush1.bf16.msra.mxu0 0
    %1269 = vmatprep.subr.bf16.mxu0 0
    %1270 = vmatpush1.bf16.msra.mxu0 0
    %1271 = vmatprep.subr.bf16.mxu0 0
    %1272 = vmatpush1.bf16.msra.mxu0 0
    %1273 = vmatprep.subr.bf16.mxu0 0
    %1274 = vmatpush1.bf16.msra.mxu0 0
    %1275 = vmatprep.subr.bf16.mxu0 0
    %1276 = vmatpush1.bf16.msra.mxu0 0
    %1277 = vmatprep.subr.bf16.mxu0 0
    %1278 = vmatpush1.bf16.msra.mxu0 0
    %1279 = vmatprep.mubr.bf16.mxu0 0
    %1280 = vmatmul.mubr.bf16.gmra.mrb[0].mxu0 %v189
    %v1281 = vpop.f32.mrb[0].mxu0
    %v1282 = vadd.f32 0.0, %v1281
    %v1283 = vpop.f32.mrb[0].mxu0
    %v1284 = vadd.f32 0.0, %v1283
    %v1285 = vpop.f32.mrb[0].mxu0
    %v1286 = vadd.f32 0.0, %v1285
    %v1287 = vpop.f32.mrb[0].mxu0
    %v1288 = vadd.f32 0.0, %v1287
    %1289 = vmatprep.mubr.bf16.mxu0 0
    %1290 = vmatmul.mubr.bf16.gmra.mrb[0].mxu0 %v192
    %v1291 = vpop.f32.mrb[0].mxu0
    %v1292 = vadd.f32 0.0, %v1291
    %v1293 = vpop.f32.mrb[0].mxu0
    %v1294 = vadd.f32 0.0, %v1293
    %v1295 = vpop.f32.mrb[0].mxu0
    %v1296 = vadd.f32 0.0, %v1295
    %v1297 = vpop.f32.mrb[0].mxu0
    %v1298 = vadd.f32 0.0, %v1297
    %1299 = vmatprep.mubr.bf16.mxu0 0
    %1300 = vmatmul.mubr.bf16.gmra.mrb[0].mxu0 %v195
    %v1301 = vpop.f32.mrb[0].mxu0
    %v1302 = vadd.f32 0.0, %v1301
    %v1303 = vpop.f32.mrb[0].mxu0
    %v1304 = vadd.f32 0.0, %v1303
    %v1305 = vpop.f32.mrb[0].mxu0
    %v1306 = vadd.f32 0.0, %v1305
    %v1307 = vpop.f32.mrb[0].mxu0
    %v1308 = vadd.f32 0.0, %v1307
    %1309 = vmatprep.mubr.bf16.mxu0 0
    %1310 = vmatmul.mubr.bf16.gmra.mrb[0].mxu0 %v198
    %v1311 = vpop.f32.mrb[0].mxu0
    %v1312 = vadd.f32 0.0, %v1311
    %v1313 = vpop.f32.mrb[0].mxu0
    %v1314 = vadd.f32 0.0, %v1313
    %v1315 = vpop.f32.mrb[0].mxu0
    %v1316 = vadd.f32 0.0, %v1315
    %v1317 = vpop.f32.mrb[0].mxu0
    %v1318 = vadd.f32 0.0, %v1317
    %1319 = vdwg.mxu0
    %1320 = vmatprep.subr.bf16.mxu0 %v1233
    %1321 = vmatpush1.bf16.msra.mxu0 %v1230
    %1322 = vmatprep.subr.bf16.mxu0 0
    %1323 = vmatpush1.bf16.msra.mxu0 0
    %1324 = vmatprep.subr.bf16.mxu0 0
    %1325 = vmatpush1.bf16.msra.mxu0 0
    %1326 = vmatprep.subr.bf16.mxu0 0
    %1327 = vmatpush1.bf16.msra.mxu0 0
    %1328 = vmatprep.subr.bf16.mxu0 0
    %1329 = vmatpush1.bf16.msra.mxu0 0
    %1330 = vmatprep.subr.bf16.mxu0 0
    %1331 = vmatpush1.bf16.msra.mxu0 0
    %1332 = vmatprep.subr.bf16.mxu0 0
    %1333 = vmatpush1.bf16.msra.mxu0 0
    %1334 = vmatprep.subr.bf16.mxu0 0
    %1335 = vmatpush1.bf16.msra.mxu0 0
    %1336 = vmatprep.subr.bf16.mxu0 0
    %1337 = vmatpush1.bf16.msra.mxu0 0
    %1338 = vmatprep.subr.bf16.mxu0 0
    %1339 = vmatpush1.bf16.msra.mxu0 0
    %1340 = vmatprep.subr.bf16.mxu0 0
    %1341 = vmatpush1.bf16.msra.mxu0 0
    %1342 = vmatprep.subr.bf16.mxu0 0
    %1343 = vmatpush1.bf16.msra.mxu0 0
    %1344 = vmatprep.subr.bf16.mxu0 0
    %1345 = vmatpush1.bf16.msra.mxu0 0
    %1346 = vmatprep.subr.bf16.mxu0 0
    %1347 = vmatpush1.bf16.msra.mxu0 0
    %1348 = vmatprep.subr.bf16.mxu0 0
    %1349 = vmatpush1.bf16.msra.mxu0 0
    %1350 = vmatprep.subr.bf16.mxu0 0
    %1351 = vmatpush1.bf16.msra.mxu0 0
    %1352 = vmatprep.mubr.bf16.mxu0 0
    %1353 = vmatmul.mubr.bf16.gmra.mrb[0].mxu0 %v189
    %v1354 = vpop.f32.mrb[0].mxu0
    %v1355 = vadd.f32 0.0, %v1354
    %v1356 = vpop.f32.mrb[0].mxu0
    %v1357 = vadd.f32 0.0, %v1356
    %v1358 = vpop.f32.mrb[0].mxu0
    %v1359 = vadd.f32 0.0, %v1358
    %v1360 = vpop.f32.mrb[0].mxu0
    %v1361 = vadd.f32 0.0, %v1360
    %1362 = vmatprep.mubr.bf16.mxu0 0
    %1363 = vmatmul.mubr.bf16.gmra.mrb[0].mxu0 %v192
    %v1364 = vpop.f32.mrb[0].mxu0
    %v1365 = vadd.f32 0.0, %v1364
    %v1366 = vpop.f32.mrb[0].mxu0
    %v1367 = vadd.f32 0.0, %v1366
    %v1368 = vpop.f32.mrb[0].mxu0
    %v1369 = vadd.f32 0.0, %v1368
    %v1370 = vpop.f32.mrb[0].mxu0
    %v1371 = vadd.f32 0.0, %v1370
    %1372 = vmatprep.mubr.bf16.mxu0 0
    %1373 = vmatmul.mubr.bf16.gmra.mrb[0].mxu0 %v195
    %v1374 = vpop.f32.mrb[0].mxu0
    %v1375 = vadd.f32 0.0, %v1374
    %v1376 = vpop.f32.mrb[0].mxu0
    %v1377 = vadd.f32 0.0, %v1376
    %v1378 = vpop.f32.mrb[0].mxu0
    %v1379 = vadd.f32 0.0, %v1378
    %v1380 = vpop.f32.mrb[0].mxu0
    %v1381 = vadd.f32 0.0, %v1380
    %1382 = vmatprep.mubr.bf16.mxu0 0
    %1383 = vmatmul.mubr.bf16.gmra.mrb[0].mxu0 %v198
    %v1384 = vpop.f32.mrb[0].mxu0
    %v1385 = vadd.f32 0.0, %v1384
    %v1386 = vpop.f32.mrb[0].mxu0
    %v1387 = vadd.f32 0.0, %v1386
    %v1388 = vpop.f32.mrb[0].mxu0
    %v1389 = vadd.f32 0.0, %v1388
    %v1390 = vpop.f32.mrb[0].mxu0
    %v1391 = vadd.f32 0.0, %v1390
    %1392 = vdwg.mxu0
    %1393 = vmatprep.subr.bf16.mxu0 %v1239
    %1394 = vmatpush1.bf16.msra.mxu0 %v1236
    %1395 = vmatprep.subr.bf16.mxu0 0
    %1396 = vmatpush1.bf16.msra.mxu0 0
    %1397 = vmatprep.subr.bf16.mxu0 0
    %1398 = vmatpush1.bf16.msra.mxu0 0
    %1399 = vmatprep.subr.bf16.mxu0 0
    %1400 = vmatpush1.bf16.msra.mxu0 0
    %1401 = vmatprep.subr.bf16.mxu0 0
    %1402 = vmatpush1.bf16.msra.mxu0 0
    %1403 = vmatprep.subr.bf16.mxu0 0
    %1404 = vmatpush1.bf16.msra.mxu0 0
    %1405 = vmatprep.subr.bf16.mxu0 0
    %1406 = vmatpush1.bf16.msra.mxu0 0
    %1407 = vmatprep.subr.bf16.mxu0 0
    %1408 = vmatpush1.bf16.msra.mxu0 0
    %1409 = vmatprep.subr.bf16.mxu0 0
    %1410 = vmatpush1.bf16.msra.mxu0 0
    %1411 = vmatprep.subr.bf16.mxu0 0
    %1412 = vmatpush1.bf16.msra.mxu0 0
    %1413 = vmatprep.subr.bf16.mxu0 0
    %1414 = vmatpush1.bf16.msra.mxu0 0
    %1415 = vmatprep.subr.bf16.mxu0 0
    %1416 = vmatpush1.bf16.msra.mxu0 0
    %1417 = vmatprep.subr.bf16.mxu0 0
    %1418 = vmatpush1.bf16.msra.mxu0 0
    %1419 = vmatprep.subr.bf16.mxu0 0
    %1420 = vmatpush1.bf16.msra.mxu0 0
    %1421 = vmatprep.subr.bf16.mxu0 0
    %1422 = vmatpush1.bf16.msra.mxu0 0
    %1423 = vmatprep.subr.bf16.mxu0 0
    %1424 = vmatpush1.bf16.msra.mxu0 0
    %1425 = vmatprep.mubr.bf16.mxu0 0
    %1426 = vmatmul.mubr.bf16.gmra.mrb[0].mxu0 %v189
    %v1427 = vpop.f32.mrb[0].mxu0
    %v1428 = vadd.f32 0.0, %v1427
    %v1429 = vpop.f32.mrb[0].mxu0
    %v1430 = vadd.f32 0.0, %v1429
    %v1431 = vpop.f32.mrb[0].mxu0
    %v1432 = vadd.f32 0.0, %v1431
    %v1433 = vpop.f32.mrb[0].mxu0
    %v1434 = vadd.f32 0.0, %v1433
    %1435 = vmatprep.mubr.bf16.mxu0 0
    %1436 = vmatmul.mubr.bf16.gmra.mrb[0].mxu0 %v192
    %v1437 = vpop.f32.mrb[0].mxu0
    %v1438 = vadd.f32 0.0, %v1437
    %v1439 = vpop.f32.mrb[0].mxu0
    %v1440 = vadd.f32 0.0, %v1439
    %v1441 = vpop.f32.mrb[0].mxu0
    %v1442 = vadd.f32 0.0, %v1441
    %v1443 = vpop.f32.mrb[0].mxu0
    %v1444 = vadd.f32 0.0, %v1443
    %1445 = vmatprep.mubr.bf16.mxu0 0
    %1446 = vmatmul.mubr.bf16.gmra.mrb[0].mxu0 %v195
    %v1447 = vpop.f32.mrb[0].mxu0
    %v1448 = vadd.f32 0.0, %v1447
    %v1449 = vpop.f32.mrb[0].mxu0
    %v1450 = vadd.f32 0.0, %v1449
    %v1451 = vpop.f32.mrb[0].mxu0
    %v1452 = vadd.f32 0.0, %v1451
    %v1453 = vpop.f32.mrb[0].mxu0
    %v1454 = vadd.f32 0.0, %v1453
    %1455 = vmatprep.mubr.bf16.mxu0 0
    %1456 = vmatmul.mubr.bf16.gmra.mrb[0].mxu0 %v198
    %v1457 = vpop.f32.mrb[0].mxu0
    %v1458 = vadd.f32 0.0, %v1457
    %v1459 = vpop.f32.mrb[0].mxu0
    %v1460 = vadd.f32 0.0, %v1459
    %v1461 = vpop.f32.mrb[0].mxu0
    %v1462 = vadd.f32 0.0, %v1461
    %v1463 = vpop.f32.mrb[0].mxu0
    %v1464 = vadd.f32 0.0, %v1463
    %1465 = vdwg.mxu0
    %1466 = vmatprep.subr.bf16.mxu0 %v1245
    %1467 = vmatpush1.bf16.msra.mxu0 %v1242
    %1468 = vmatprep.subr.bf16.mxu0 0
    %1469 = vmatpush1.bf16.msra.mxu0 0
    %1470 = vmatprep.subr.bf16.mxu0 0
    %1471 = vmatpush1.bf16.msra.mxu0 0
    %1472 = vmatprep.subr.bf16.mxu0 0
    %1473 = vmatpush1.bf16.msra.mxu0 0
    %1474 = vmatprep.subr.bf16.mxu0 0
    %1475 = vmatpush1.bf16.msra.mxu0 0
    %1476 = vmatprep.subr.bf16.mxu0 0
    %1477 = vmatpush1.bf16.msra.mxu0 0
    %1478 = vmatprep.subr.bf16.mxu0 0
    %1479 = vmatpush1.bf16.msra.mxu0 0
    %1480 = vmatprep.subr.bf16.mxu0 0
    %1481 = vmatpush1.bf16.msra.mxu0 0
    %1482 = vmatprep.subr.bf16.mxu0 0
    %1483 = vmatpush1.bf16.msra.mxu0 0
    %1484 = vmatprep.subr.bf16.mxu0 0
    %1485 = vmatpush1.bf16.msra.mxu0 0
    %1486 = vmatprep.subr.bf16.mxu0 0
    %1487 = vmatpush1.bf16.msra.mxu0 0
    %1488 = vmatprep.subr.bf16.mxu0 0
    %1489 = vmatpush1.bf16.msra.mxu0 0
    %1490 = vmatprep.subr.bf16.mxu0 0
    %1491 = vmatpush1.bf16.msra.mxu0 0
    %1492 = vmatprep.subr.bf16.mxu0 0
    %1493 = vmatpush1.bf16.msra.mxu0 0
    %1494 = vmatprep.subr.bf16.mxu0 0
    %1495 = vmatpush1.bf16.msra.mxu0 0
    %1496 = vmatprep.subr.bf16.mxu0 0
    %1497 = vmatpush1.bf16.msra.mxu0 0
    %1498 = vmatprep.mubr.bf16.mxu0 0
    %1499 = vmatmul.mubr.bf16.gmra.mrb[0].mxu0 %v189
    %v1500 = vpop.f32.mrb[0].mxu0
    %v1501 = vadd.f32 0.0, %v1500
    %v1502 = vpop.f32.mrb[0].mxu0
    %v1503 = vadd.f32 0.0, %v1502
    %v1504 = vpop.f32.mrb[0].mxu0
    %v1505 = vadd.f32 0.0, %v1504
    %v1506 = vpop.f32.mrb[0].mxu0
    %v1507 = vadd.f32 0.0, %v1506
    %1508 = vmatprep.mubr.bf16.mxu0 0
    %1509 = vmatmul.mubr.bf16.gmra.mrb[0].mxu0 %v192
    %v1510 = vpop.f32.mrb[0].mxu0
    %v1511 = vadd.f32 0.0, %v1510
    %v1512 = vpop.f32.mrb[0].mxu0
    %v1513 = vadd.f32 0.0, %v1512
    %v1514 = vpop.f32.mrb[0].mxu0
    %v1515 = vadd.f32 0.0, %v1514
    %v1516 = vpop.f32.mrb[0].mxu0
    %v1517 = vadd.f32 0.0, %v1516
    %1518 = vmatprep.mubr.bf16.mxu0 0
    %1519 = vmatmul.mubr.bf16.gmra.mrb[0].mxu0 %v195
    %v1520 = vpop.f32.mrb[0].mxu0
    %v1521 = vadd.f32 0.0, %v1520
    %v1522 = vpop.f32.mrb[0].mxu0
    %v1523 = vadd.f32 0.0, %v1522
    %v1524 = vpop.f32.mrb[0].mxu0
    %v1525 = vadd.f32 0.0, %v1524
    %v1526 = vpop.f32.mrb[0].mxu0
    %v1527 = vadd.f32 0.0, %v1526
    %1528 = vmatprep.mubr.bf16.mxu0 0
    %1529 = vmatmul.mubr.bf16.gmra.mrb[0].mxu0 %v198
    %v1530 = vpop.f32.mrb[0].mxu0
    %v1531 = vadd.f32 0.0, %v1530
    %v1532 = vpop.f32.mrb[0].mxu0
    %v1533 = vadd.f32 0.0, %v1532
    %v1534 = vpop.f32.mrb[0].mxu0
    %v1535 = vadd.f32 0.0, %v1534
    %v1536 = vpop.f32.mrb[0].mxu0
    %v1537 = vadd.f32 0.0, %v1536
    %1538 = vdwg.mxu0
    %v1539 = vmax.f32 %v1282, %v1428
    %v1540 = vmax.f32 %v1284, %v1430
    %v1541 = vmax.f32 %v1355, %v1501
    %v1542 = vmax.f32 %v1357, %v1503
    %v1543 = vmax.f32 %v1286, %v1432
    %v1544 = vmax.f32 %v1288, %v1434
    %v1545 = vmax.f32 %v1359, %v1505
    %v1546 = vmax.f32 %v1361, %v1507
    %v1547 = vmax.f32 %v1292, %v1438
    %v1548 = vmax.f32 %v1294, %v1440
    %v1549 = vmax.f32 %v1365, %v1511
    %v1550 = vmax.f32 %v1367, %v1513
    %v1551 = vmax.f32 %v1296, %v1442
    %v1552 = vmax.f32 %v1298, %v1444
    %v1553 = vmax.f32 %v1369, %v1515
    %v1554 = vmax.f32 %v1371, %v1517
    %v1555 = vmax.f32 %v1302, %v1448
    %v1556 = vmax.f32 %v1304, %v1450
    %v1557 = vmax.f32 %v1375, %v1521
    %v1558 = vmax.f32 %v1377, %v1523
    %v1559 = vmax.f32 %v1306, %v1452
    %v1560 = vmax.f32 %v1308, %v1454
    %v1561 = vmax.f32 %v1379, %v1525
    %v1562 = vmax.f32 %v1381, %v1527
    %v1563 = vmax.f32 %v1312, %v1458
    %v1564 = vmax.f32 %v1314, %v1460
    %v1565 = vmax.f32 %v1385, %v1531
    %v1566 = vmax.f32 %v1387, %v1533
    %v1567 = vmax.f32 %v1316, %v1462
    %v1568 = vmax.f32 %v1318, %v1464
    %v1569 = vmax.f32 %v1389, %v1535
    %v1570 = vmax.f32 %v1391, %v1537
    %v1571 = vadd.f32 %v1539, %v552
    %v1572 = vadd.f32 %v1540, %v552
    %v1573 = vadd.f32 %v1541, %v552
    %v1574 = vadd.f32 %v1542, %v552
    %v1575 = vadd.f32 %v1543, %v557
    %v1576 = vadd.f32 %v1544, %v557
    %v1577 = vadd.f32 %v1545, %v557
    %v1578 = vadd.f32 %v1546, %v557
    %v1579 = vadd.f32 %v1547, %v562
    %v1580 = vadd.f32 %v1548, %v562
    %v1581 = vadd.f32 %v1549, %v562
    %v1582 = vadd.f32 %v1550, %v562
    %v1583 = vadd.f32 %v1551, %v567
    %v1584 = vadd.f32 %v1552, %v567
    %v1585 = vadd.f32 %v1553, %v567
    %v1586 = vadd.f32 %v1554, %v567
    %v1587 = vadd.f32 %v1555, %v572
    %v1588 = vadd.f32 %v1556, %v572
    %v1589 = vadd.f32 %v1557, %v572
    %v1590 = vadd.f32 %v1558, %v572
    %v1591 = vadd.f32 %v1559, %v577
    %v1592 = vadd.f32 %v1560, %v577
    %v1593 = vadd.f32 %v1561, %v577
    %v1594 = vadd.f32 %v1562, %v577
    %v1595 = vadd.f32 %v1563, %v582
    %v1596 = vadd.f32 %v1564, %v582
    %v1597 = vadd.f32 %v1565, %v582
    %v1598 = vadd.f32 %v1566, %v582
    %v1599 = vadd.f32 %v1567, %v587
    %v1600 = vadd.f32 %v1568, %v587
    %v1601 = vadd.f32 %v1569, %v587
    %v1602 = vadd.f32 %v1570, %v587
    %v1603 = vmax.f32 %v1571, 0.0
    %v1604 = vmax.f32 %v1572, 0.0
    %v1605 = vmax.f32 %v1573, 0.0
    %v1606 = vmax.f32 %v1574, 0.0
    %v1607 = vmax.f32 %v1575, 0.0
    %v1608 = vmax.f32 %v1576, 0.0
    %v1609 = vmax.f32 %v1577, 0.0
    %v1610 = vmax.f32 %v1578, 0.0
    %v1611 = vmax.f32 %v1579, 0.0
    %v1612 = vmax.f32 %v1580, 0.0
    %v1613 = vmax.f32 %v1581, 0.0
    %v1614 = vmax.f32 %v1582, 0.0
    %v1615 = vmax.f32 %v1583, 0.0
    %v1616 = vmax.f32 %v1584, 0.0
    %v1617 = vmax.f32 %v1585, 0.0
    %v1618 = vmax.f32 %v1586, 0.0
    %v1619 = vmax.f32 %v1587, 0.0
    %v1620 = vmax.f32 %v1588, 0.0
    %v1621 = vmax.f32 %v1589, 0.0
    %v1622 = vmax.f32 %v1590, 0.0
    %v1623 = vmax.f32 %v1591, 0.0
    %v1624 = vmax.f32 %v1592, 0.0
    %v1625 = vmax.f32 %v1593, 0.0
    %v1626 = vmax.f32 %v1594, 0.0
    %v1627 = vmax.f32 %v1595, 0.0
    %v1628 = vmax.f32 %v1596, 0.0
    %v1629 = vmax.f32 %v1597, 0.0
    %v1630 = vmax.f32 %v1598, 0.0
    %v1631 = vmax.f32 %v1599, 0.0
    %v1632 = vmax.f32 %v1600, 0.0
    %v1633 = vmax.f32 %v1601, 0.0
    %v1634 = vmax.f32 %v1602, 0.0
    %v1635 = vpack.c.bf16 %v1607, %v1603
    %v1636 = vpack.c.bf16 %v1608, %v1604
    %v1637 = vpack.c.bf16 %v1609, %v1605
    %v1638 = vpack.c.bf16 %v1610, %v1606
    %v1639 = vpack.c.bf16 %v1615, %v1611
    %v1640 = vpack.c.bf16 %v1616, %v1612
    %v1641 = vpack.c.bf16 %v1617, %v1613
    %v1642 = vpack.c.bf16 %v1618, %v1614
    %v1643 = vpack.c.bf16 %v1623, %v1619
    %v1644 = vpack.c.bf16 %v1624, %v1620
    %v1645 = vpack.c.bf16 %v1625, %v1621
    %v1646 = vpack.c.bf16 %v1626, %v1622
    %v1647 = vpack.c.bf16 %v1631, %v1627
    %v1648 = vpack.c.bf16 %v1632, %v1628
    %v1649 = vpack.c.bf16 %v1633, %v1629
    %v1650 = vpack.c.bf16 %v1634, %v1630
    %1651 = vst [vmem:[#allocation2 + $0x100] sm:$0xff] %v1635
    %1652 = vst [vmem:[#allocation2 + $0x108] sm:$0xff] %v1636
    %1653 = vst [vmem:[#allocation2 + $0x110] sm:$0xff] %v1637
    %1654 = vst [vmem:[#allocation2 + $0x118] sm:$0xff] %v1638
    %1655 = vst [vmem:[#allocation2 + $0x120] sm:$0xff] %v1639
    %1656 = vst [vmem:[#allocation2 + $0x128] sm:$0xff] %v1640
    %1657 = vst [vmem:[#allocation2 + $0x130] sm:$0xff] %v1641
    %1658 = vst [vmem:[#allocation2 + $0x138] sm:$0xff] %v1642
    %1659 = vst [vmem:[#allocation2 + $0x140] sm:$0xff] %v1643
    %1660 = vst [vmem:[#allocation2 + $0x148] sm:$0xff] %v1644
    %1661 = vst [vmem:[#allocation2 + $0x150] sm:$0xff] %v1645
    %1662 = vst [vmem:[#allocation2 + $0x158] sm:$0xff] %v1646
    %1663 = vst [vmem:[#allocation2 + $0x160] sm:$0xff] %v1647
    %1664 = vst [vmem:[#allocation2 + $0x168] sm:$0xff] %v1648
    %1665 = vst [vmem:[#allocation2 + $0x170] sm:$0xff] %v1649
    %1666 = vst [vmem:[#allocation2 + $0x178] sm:$0xff] %v1650
    %s1667 = scalar_lea.vmem %s0, 96
    %v1668 = vld [vmem:[%s1667] sm:$0xff]
    %v1669 = vld [vmem:[%s1667 + $0x8] sm:$0xff]
    %v1670 = vld [vmem:[%s1667 + $0x10] sm:$0xff]
    %v1671 = vld [vmem:[%s1667 + $0x18] sm:$0xff]
    %v1676 = vunpack.c.l.b16 %v1668
    %v1677 = vunpack.c.h.b16 %v1668
    %v1678 = vunpack.c.l.b16 %v1669
    %v1679 = vunpack.c.h.b16 %v1669
    %v1680 = vunpack.c.l.b16 %v1670
    %v1681 = vunpack.c.h.b16 %v1670
    %v1682 = vunpack.c.l.b16 %v1671
    %v1683 = vunpack.c.h.b16 %v1671
    %v1684 = vpack.c.b16 %v1676, %v1676
    %v1685 = vpack.c.b16 %v1677, %v1677
    %v1686 = vpack.c.b16 %v1678, %v1678
    %v1687 = vpack.c.b16 %v1679, %v1679
    %v1688 = vpack.c.b16 %v1680, %v1680
    %v1689 = vpack.c.b16 %v1681, %v1681
    %v1690 = vpack.c.b16 %v1682, %v1682
    %v1691 = vpack.c.b16 %v1683, %v1683
    %v1693 = vsel %vm200, %v1684, 0
    %v1696 = vsel %vm200, %v1685, 0
    %v1699 = vsel %vm200, %v1686, 0
    %v1702 = vsel %vm200, %v1687, 0
    %v1705 = vsel %vm200, %v1688, 0
    %v1708 = vsel %vm200, %v1689, 0
    %v1711 = vsel %vm200, %v1690, 0
    %v1714 = vsel %vm200, %v1691, 0
    %1716 = vmatprep.subr.bf16.mxu0 %v1696
    %1717 = vmatpush1.bf16.msra.mxu0 %v1693
    %1718 = vmatprep.subr.bf16.mxu0 0
    %1719 = vmatpush1.bf16.msra.mxu0 0
    %1720 = vmatprep.subr.bf16.mxu0 0
    %1721 = vmatpush1.bf16.msra.mxu0 0
    %1722 = vmatprep.subr.bf16.mxu0 0
    %1723 = vmatpush1.bf16.msra.mxu0 0
    %1724 = vmatprep.subr.bf16.mxu0 0
    %1725 = vmatpush1.bf16.msra.mxu0 0
    %1726 = vmatprep.subr.bf16.mxu0 0
    %1727 = vmatpush1.bf16.msra.mxu0 0
    %1728 = vmatprep.subr.bf16.mxu0 0
    %1729 = vmatpush1.bf16.msra.mxu0 0
    %1730 = vmatprep.subr.bf16.mxu0 0
    %1731 = vmatpush1.bf16.msra.mxu0 0
    %1732 = vmatprep.subr.bf16.mxu0 0
    %1733 = vmatpush1.bf16.msra.mxu0 0
    %1734 = vmatprep.subr.bf16.mxu0 0
    %1735 = vmatpush1.bf16.msra.mxu0 0
    %1736 = vmatprep.subr.bf16.mxu0 0
    %1737 = vmatpush1.bf16.msra.mxu0 0
    %1738 = vmatprep.subr.bf16.mxu0 0
    %1739 = vmatpush1.bf16.msra.mxu0 0
    %1740 = vmatprep.subr.bf16.mxu0 0
    %1741 = vmatpush1.bf16.msra.mxu0 0
    %1742 = vmatprep.subr.bf16.mxu0 0
    %1743 = vmatpush1.bf16.msra.mxu0 0
    %1744 = vmatprep.subr.bf16.mxu0 0
    %1745 = vmatpush1.bf16.msra.mxu0 0
    %1746 = vmatprep.subr.bf16.mxu0 0
    %1747 = vmatpush1.bf16.msra.mxu0 0
    %1748 = vmatprep.mubr.bf16.mxu0 0
    %1749 = vmatmul.mubr.bf16.gmra.mrb[0].mxu0 %v189
    %v1750 = vpop.f32.mrb[0].mxu0
    %v1751 = vadd.f32 0.0, %v1750
    %v1752 = vpop.f32.mrb[0].mxu0
    %v1753 = vadd.f32 0.0, %v1752
    %v1754 = vpop.f32.mrb[0].mxu0
    %v1755 = vadd.f32 0.0, %v1754
    %v1756 = vpop.f32.mrb[0].mxu0
    %v1757 = vadd.f32 0.0, %v1756
    %1758 = vmatprep.mubr.bf16.mxu0 0
    %1759 = vmatmul.mubr.bf16.gmra.mrb[0].mxu0 %v192
    %v1760 = vpop.f32.mrb[0].mxu0
    %v1761 = vadd.f32 0.0, %v1760
    %v1762 = vpop.f32.mrb[0].mxu0
    %v1763 = vadd.f32 0.0, %v1762
    %v1764 = vpop.f32.mrb[0].mxu0
    %v1765 = vadd.f32 0.0, %v1764
    %v1766 = vpop.f32.mrb[0].mxu0
    %v1767 = vadd.f32 0.0, %v1766
    %1768 = vmatprep.mubr.bf16.mxu0 0
    %1769 = vmatmul.mubr.bf16.gmra.mrb[0].mxu0 %v195
    %v1770 = vpop.f32.mrb[0].mxu0
    %v1771 = vadd.f32 0.0, %v1770
    %v1772 = vpop.f32.mrb[0].mxu0
    %v1773 = vadd.f32 0.0, %v1772
    %v1774 = vpop.f32.mrb[0].mxu0
    %v1775 = vadd.f32 0.0, %v1774
    %v1776 = vpop.f32.mrb[0].mxu0
    %v1777 = vadd.f32 0.0, %v1776
    %1778 = vmatprep.mubr.bf16.mxu0 0
    %1779 = vmatmul.mubr.bf16.gmra.mrb[0].mxu0 %v198
    %v1780 = vpop.f32.mrb[0].mxu0
    %v1781 = vadd.f32 0.0, %v1780
    %v1782 = vpop.f32.mrb[0].mxu0
    %v1783 = vadd.f32 0.0, %v1782
    %v1784 = vpop.f32.mrb[0].mxu0
    %v1785 = vadd.f32 0.0, %v1784
    %v1786 = vpop.f32.mrb[0].mxu0
    %v1787 = vadd.f32 0.0, %v1786
    %1788 = vdwg.mxu0
    %1789 = vmatprep.subr.bf16.mxu0 %v1702
    %1790 = vmatpush1.bf16.msra.mxu0 %v1699
    %1791 = vmatprep.subr.bf16.mxu0 0
    %1792 = vmatpush1.bf16.msra.mxu0 0
    %1793 = vmatprep.subr.bf16.mxu0 0
    %1794 = vmatpush1.bf16.msra.mxu0 0
    %1795 = vmatprep.subr.bf16.mxu0 0
    %1796 = vmatpush1.bf16.msra.mxu0 0
    %1797 = vmatprep.subr.bf16.mxu0 0
    %1798 = vmatpush1.bf16.msra.mxu0 0
    %1799 = vmatprep.subr.bf16.mxu0 0
    %1800 = vmatpush1.bf16.msra.mxu0 0
    %1801 = vmatprep.subr.bf16.mxu0 0
    %1802 = vmatpush1.bf16.msra.mxu0 0
    %1803 = vmatprep.subr.bf16.mxu0 0
    %1804 = vmatpush1.bf16.msra.mxu0 0
    %1805 = vmatprep.subr.bf16.mxu0 0
    %1806 = vmatpush1.bf16.msra.mxu0 0
    %1807 = vmatprep.subr.bf16.mxu0 0
    %1808 = vmatpush1.bf16.msra.mxu0 0
    %1809 = vmatprep.subr.bf16.mxu0 0
    %1810 = vmatpush1.bf16.msra.mxu0 0
    %1811 = vmatprep.subr.bf16.mxu0 0
    %1812 = vmatpush1.bf16.msra.mxu0 0
    %1813 = vmatprep.subr.bf16.mxu0 0
    %1814 = vmatpush1.bf16.msra.mxu0 0
    %1815 = vmatprep.subr.bf16.mxu0 0
    %1816 = vmatpush1.bf16.msra.mxu0 0
    %1817 = vmatprep.subr.bf16.mxu0 0
    %1818 = vmatpush1.bf16.msra.mxu0 0
    %1819 = vmatprep.subr.bf16.mxu0 0
    %1820 = vmatpush1.bf16.msra.mxu0 0
    %1821 = vmatprep.mubr.bf16.mxu0 0
    %1822 = vmatmul.mubr.bf16.gmra.mrb[0].mxu0 %v189
    %v1823 = vpop.f32.mrb[0].mxu0
    %v1824 = vadd.f32 0.0, %v1823
    %v1825 = vpop.f32.mrb[0].mxu0
    %v1826 = vadd.f32 0.0, %v1825
    %v1827 = vpop.f32.mrb[0].mxu0
    %v1828 = vadd.f32 0.0, %v1827
    %v1829 = vpop.f32.mrb[0].mxu0
    %v1830 = vadd.f32 0.0, %v1829
    %1831 = vmatprep.mubr.bf16.mxu0 0
    %1832 = vmatmul.mubr.bf16.gmra.mrb[0].mxu0 %v192
    %v1833 = vpop.f32.mrb[0].mxu0
    %v1834 = vadd.f32 0.0, %v1833
    %v1835 = vpop.f32.mrb[0].mxu0
    %v1836 = vadd.f32 0.0, %v1835
    %v1837 = vpop.f32.mrb[0].mxu0
    %v1838 = vadd.f32 0.0, %v1837
    %v1839 = vpop.f32.mrb[0].mxu0
    %v1840 = vadd.f32 0.0, %v1839
    %1841 = vmatprep.mubr.bf16.mxu0 0
    %1842 = vmatmul.mubr.bf16.gmra.mrb[0].mxu0 %v195
    %v1843 = vpop.f32.mrb[0].mxu0
    %v1844 = vadd.f32 0.0, %v1843
    %v1845 = vpop.f32.mrb[0].mxu0
    %v1846 = vadd.f32 0.0, %v1845
    %v1847 = vpop.f32.mrb[0].mxu0
    %v1848 = vadd.f32 0.0, %v1847
    %v1849 = vpop.f32.mrb[0].mxu0
    %v1850 = vadd.f32 0.0, %v1849
    %1851 = vmatprep.mubr.bf16.mxu0 0
    %1852 = vmatmul.mubr.bf16.gmra.mrb[0].mxu0 %v198
    %v1853 = vpop.f32.mrb[0].mxu0
    %v1854 = vadd.f32 0.0, %v1853
    %v1855 = vpop.f32.mrb[0].mxu0
    %v1856 = vadd.f32 0.0, %v1855
    %v1857 = vpop.f32.mrb[0].mxu0
    %v1858 = vadd.f32 0.0, %v1857
    %v1859 = vpop.f32.mrb[0].mxu0
    %v1860 = vadd.f32 0.0, %v1859
    %1861 = vdwg.mxu0
    %1862 = vmatprep.subr.bf16.mxu0 %v1708
    %1863 = vmatpush1.bf16.msra.mxu0 %v1705
    %1864 = vmatprep.subr.bf16.mxu0 0
    %1865 = vmatpush1.bf16.msra.mxu0 0
    %1866 = vmatprep.subr.bf16.mxu0 0
    %1867 = vmatpush1.bf16.msra.mxu0 0
    %1868 = vmatprep.subr.bf16.mxu0 0
    %1869 = vmatpush1.bf16.msra.mxu0 0
    %1870 = vmatprep.subr.bf16.mxu0 0
    %1871 = vmatpush1.bf16.msra.mxu0 0
    %1872 = vmatprep.subr.bf16.mxu0 0
    %1873 = vmatpush1.bf16.msra.mxu0 0
    %1874 = vmatprep.subr.bf16.mxu0 0
    %1875 = vmatpush1.bf16.msra.mxu0 0
    %1876 = vmatprep.subr.bf16.mxu0 0
    %1877 = vmatpush1.bf16.msra.mxu0 0
    %1878 = vmatprep.subr.bf16.mxu0 0
    %1879 = vmatpush1.bf16.msra.mxu0 0
    %1880 = vmatprep.subr.bf16.mxu0 0
    %1881 = vmatpush1.bf16.msra.mxu0 0
    %1882 = vmatprep.subr.bf16.mxu0 0
    %1883 = vmatpush1.bf16.msra.mxu0 0
    %1884 = vmatprep.subr.bf16.mxu0 0
    %1885 = vmatpush1.bf16.msra.mxu0 0
    %1886 = vmatprep.subr.bf16.mxu0 0
    %1887 = vmatpush1.bf16.msra.mxu0 0
    %1888 = vmatprep.subr.bf16.mxu0 0
    %1889 = vmatpush1.bf16.msra.mxu0 0
    %1890 = vmatprep.subr.bf16.mxu0 0
    %1891 = vmatpush1.bf16.msra.mxu0 0
    %1892 = vmatprep.subr.bf16.mxu0 0
    %1893 = vmatpush1.bf16.msra.mxu0 0
    %1894 = vmatprep.mubr.bf16.mxu0 0
    %1895 = vmatmul.mubr.bf16.gmra.mrb[0].mxu0 %v189
    %v1896 = vpop.f32.mrb[0].mxu0
    %v1897 = vadd.f32 0.0, %v1896
    %v1898 = vpop.f32.mrb[0].mxu0
    %v1899 = vadd.f32 0.0, %v1898
    %v1900 = vpop.f32.mrb[0].mxu0
    %v1901 = vadd.f32 0.0, %v1900
    %v1902 = vpop.f32.mrb[0].mxu0
    %v1903 = vadd.f32 0.0, %v1902
    %1904 = vmatprep.mubr.bf16.mxu0 0
    %1905 = vmatmul.mubr.bf16.gmra.mrb[0].mxu0 %v192
    %v1906 = vpop.f32.mrb[0].mxu0
    %v1907 = vadd.f32 0.0, %v1906
    %v1908 = vpop.f32.mrb[0].mxu0
    %v1909 = vadd.f32 0.0, %v1908
    %v1910 = vpop.f32.mrb[0].mxu0
    %v1911 = vadd.f32 0.0, %v1910
    %v1912 = vpop.f32.mrb[0].mxu0
    %v1913 = vadd.f32 0.0, %v1912
    %1914 = vmatprep.mubr.bf16.mxu0 0
    %1915 = vmatmul.mubr.bf16.gmra.mrb[0].mxu0 %v195
    %v1916 = vpop.f32.mrb[0].mxu0
    %v1917 = vadd.f32 0.0, %v1916
    %v1918 = vpop.f32.mrb[0].mxu0
    %v1919 = vadd.f32 0.0, %v1918
    %v1920 = vpop.f32.mrb[0].mxu0
    %v1921 = vadd.f32 0.0, %v1920
    %v1922 = vpop.f32.mrb[0].mxu0
    %v1923 = vadd.f32 0.0, %v1922
    %1924 = vmatprep.mubr.bf16.mxu0 0
    %1925 = vmatmul.mubr.bf16.gmra.mrb[0].mxu0 %v198
    %v1926 = vpop.f32.mrb[0].mxu0
    %v1927 = vadd.f32 0.0, %v1926
    %v1928 = vpop.f32.mrb[0].mxu0
    %v1929 = vadd.f32 0.0, %v1928
    %v1930 = vpop.f32.mrb[0].mxu0
    %v1931 = vadd.f32 0.0, %v1930
    %v1932 = vpop.f32.mrb[0].mxu0
    %v1933 = vadd.f32 0.0, %v1932
    %1934 = vdwg.mxu0
    %1935 = vmatprep.subr.bf16.mxu0 %v1714
    %1936 = vmatpush1.bf16.msra.mxu0 %v1711
    %1937 = vmatprep.subr.bf16.mxu0 0
    %1938 = vmatpush1.bf16.msra.mxu0 0
    %1939 = vmatprep.subr.bf16.mxu0 0
    %1940 = vmatpush1.bf16.msra.mxu0 0
    %1941 = vmatprep.subr.bf16.mxu0 0
    %1942 = vmatpush1.bf16.msra.mxu0 0
    %1943 = vmatprep.subr.bf16.mxu0 0
    %1944 = vmatpush1.bf16.msra.mxu0 0
    %1945 = vmatprep.subr.bf16.mxu0 0
    %1946 = vmatpush1.bf16.msra.mxu0 0
    %1947 = vmatprep.subr.bf16.mxu0 0
    %1948 = vmatpush1.bf16.msra.mxu0 0
    %1949 = vmatprep.subr.bf16.mxu0 0
    %1950 = vmatpush1.bf16.msra.mxu0 0
    %1951 = vmatprep.subr.bf16.mxu0 0
    %1952 = vmatpush1.bf16.msra.mxu0 0
    %1953 = vmatprep.subr.bf16.mxu0 0
    %1954 = vmatpush1.bf16.msra.mxu0 0
    %1955 = vmatprep.subr.bf16.mxu0 0
    %1956 = vmatpush1.bf16.msra.mxu0 0
    %1957 = vmatprep.subr.bf16.mxu0 0
    %1958 = vmatpush1.bf16.msra.mxu0 0
    %1959 = vmatprep.subr.bf16.mxu0 0
    %1960 = vmatpush1.bf16.msra.mxu0 0
    %1961 = vmatprep.subr.bf16.mxu0 0
    %1962 = vmatpush1.bf16.msra.mxu0 0
    %1963 = vmatprep.subr.bf16.mxu0 0
    %1964 = vmatpush1.bf16.msra.mxu0 0
    %1965 = vmatprep.subr.bf16.mxu0 0
    %1966 = vmatpush1.bf16.msra.mxu0 0
    %1967 = vmatprep.mubr.bf16.mxu0 0
    %1968 = vmatmul.mubr.bf16.gmra.mrb[0].mxu0 %v189
    %v1969 = vpop.f32.mrb[0].mxu0
    %v1970 = vadd.f32 0.0, %v1969
    %v1971 = vpop.f32.mrb[0].mxu0
    %v1972 = vadd.f32 0.0, %v1971
    %v1973 = vpop.f32.mrb[0].mxu0
    %v1974 = vadd.f32 0.0, %v1973
    %v1975 = vpop.f32.mrb[0].mxu0
    %v1976 = vadd.f32 0.0, %v1975
    %1977 = vmatprep.mubr.bf16.mxu0 0
    %1978 = vmatmul.mubr.bf16.gmra.mrb[0].mxu0 %v192
    %v1979 = vpop.f32.mrb[0].mxu0
    %v1980 = vadd.f32 0.0, %v1979
    %v1981 = vpop.f32.mrb[0].mxu0
    %v1982 = vadd.f32 0.0, %v1981
    %v1983 = vpop.f32.mrb[0].mxu0
    %v1984 = vadd.f32 0.0, %v1983
    %v1985 = vpop.f32.mrb[0].mxu0
    %v1986 = vadd.f32 0.0, %v1985
    %1987 = vmatprep.mubr.bf16.mxu0 0
    %1988 = vmatmul.mubr.bf16.gmra.mrb[0].mxu0 %v195
    %v1989 = vpop.f32.mrb[0].mxu0
    %v1990 = vadd.f32 0.0, %v1989
    %v1991 = vpop.f32.mrb[0].mxu0
    %v1992 = vadd.f32 0.0, %v1991
    %v1993 = vpop.f32.mrb[0].mxu0
    %v1994 = vadd.f32 0.0, %v1993
    %v1995 = vpop.f32.mrb[0].mxu0
    %v1996 = vadd.f32 0.0, %v1995
    %1997 = vmatprep.mubr.bf16.mxu0 0
    %1998 = vmatmul.mubr.bf16.gmra.mrb[0].mxu0 %v198
    %v1999 = vpop.f32.mrb[0].mxu0
    %v2000 = vadd.f32 0.0, %v1999
    %v2001 = vpop.f32.mrb[0].mxu0
    %v2002 = vadd.f32 0.0, %v2001
    %v2003 = vpop.f32.mrb[0].mxu0
    %v2004 = vadd.f32 0.0, %v2003
    %v2005 = vpop.f32.mrb[0].mxu0
    %v2006 = vadd.f32 0.0, %v2005
    %2007 = vdwg.mxu0
    %v2008 = vmax.f32 %v1751, %v1897
    %v2009 = vmax.f32 %v1753, %v1899
    %v2010 = vmax.f32 %v1824, %v1970
    %v2011 = vmax.f32 %v1826, %v1972
    %v2012 = vmax.f32 %v1755, %v1901
    %v2013 = vmax.f32 %v1757, %v1903
    %v2014 = vmax.f32 %v1828, %v1974
    %v2015 = vmax.f32 %v1830, %v1976
    %v2016 = vmax.f32 %v1761, %v1907
    %v2017 = vmax.f32 %v1763, %v1909
    %v2018 = vmax.f32 %v1834, %v1980
    %v2019 = vmax.f32 %v1836, %v1982
    %v2020 = vmax.f32 %v1765, %v1911
    %v2021 = vmax.f32 %v1767, %v1913
    %v2022 = vmax.f32 %v1838, %v1984
    %v2023 = vmax.f32 %v1840, %v1986
    %v2024 = vmax.f32 %v1771, %v1917
    %v2025 = vmax.f32 %v1773, %v1919
    %v2026 = vmax.f32 %v1844, %v1990
    %v2027 = vmax.f32 %v1846, %v1992
    %v2028 = vmax.f32 %v1775, %v1921
    %v2029 = vmax.f32 %v1777, %v1923
    %v2030 = vmax.f32 %v1848, %v1994
    %v2031 = vmax.f32 %v1850, %v1996
    %v2032 = vmax.f32 %v1781, %v1927
    %v2033 = vmax.f32 %v1783, %v1929
    %v2034 = vmax.f32 %v1854, %v2000
    %v2035 = vmax.f32 %v1856, %v2002
    %v2036 = vmax.f32 %v1785, %v1931
    %v2037 = vmax.f32 %v1787, %v1933
    %v2038 = vmax.f32 %v1858, %v2004
    %v2039 = vmax.f32 %v1860, %v2006
    %v2040 = vadd.f32 %v2008, %v552
    %v2041 = vadd.f32 %v2009, %v552
    %v2042 = vadd.f32 %v2010, %v552
    %v2043 = vadd.f32 %v2011, %v552
    %v2044 = vadd.f32 %v2012, %v557
    %v2045 = vadd.f32 %v2013, %v557
    %v2046 = vadd.f32 %v2014, %v557
    %v2047 = vadd.f32 %v2015, %v557
    %v2048 = vadd.f32 %v2016, %v562
    %v2049 = vadd.f32 %v2017, %v562
    %v2050 = vadd.f32 %v2018, %v562
    %v2051 = vadd.f32 %v2019, %v562
    %v2052 = vadd.f32 %v2020, %v567
    %v2053 = vadd.f32 %v2021, %v567
    %v2054 = vadd.f32 %v2022, %v567
    %v2055 = vadd.f32 %v2023, %v567
    %v2056 = vadd.f32 %v2024, %v572
    %v2057 = vadd.f32 %v2025, %v572
    %v2058 = vadd.f32 %v2026, %v572
    %v2059 = vadd.f32 %v2027, %v572
    %v2060 = vadd.f32 %v2028, %v577
    %v2061 = vadd.f32 %v2029, %v577
    %v2062 = vadd.f32 %v2030, %v577
    %v2063 = vadd.f32 %v2031, %v577
    %v2064 = vadd.f32 %v2032, %v582
    %v2065 = vadd.f32 %v2033, %v582
    %v2066 = vadd.f32 %v2034, %v582
    %v2067 = vadd.f32 %v2035, %v582
    %v2068 = vadd.f32 %v2036, %v587
    %v2069 = vadd.f32 %v2037, %v587
    %v2070 = vadd.f32 %v2038, %v587
    %v2071 = vadd.f32 %v2039, %v587
    %v2072 = vmax.f32 %v2040, 0.0
    %v2073 = vmax.f32 %v2041, 0.0
    %v2074 = vmax.f32 %v2042, 0.0
    %v2075 = vmax.f32 %v2043, 0.0
    %v2076 = vmax.f32 %v2044, 0.0
    %v2077 = vmax.f32 %v2045, 0.0
    %v2078 = vmax.f32 %v2046, 0.0
    %v2079 = vmax.f32 %v2047, 0.0
    %v2080 = vmax.f32 %v2048, 0.0
    %v2081 = vmax.f32 %v2049, 0.0
    %v2082 = vmax.f32 %v2050, 0.0
    %v2083 = vmax.f32 %v2051, 0.0
    %v2084 = vmax.f32 %v2052, 0.0
    %v2085 = vmax.f32 %v2053, 0.0
    %v2086 = vmax.f32 %v2054, 0.0
    %v2087 = vmax.f32 %v2055, 0.0
    %v2088 = vmax.f32 %v2056, 0.0
    %v2089 = vmax.f32 %v2057, 0.0
    %v2090 = vmax.f32 %v2058, 0.0
    %v2091 = vmax.f32 %v2059, 0.0
    %v2092 = vmax.f32 %v2060, 0.0
    %v2093 = vmax.f32 %v2061, 0.0
    %v2094 = vmax.f32 %v2062, 0.0
    %v2095 = vmax.f32 %v2063, 0.0
    %v2096 = vmax.f32 %v2064, 0.0
    %v2097 = vmax.f32 %v2065, 0.0
    %v2098 = vmax.f32 %v2066, 0.0
    %v2099 = vmax.f32 %v2067, 0.0
    %v2100 = vmax.f32 %v2068, 0.0
    %v2101 = vmax.f32 %v2069, 0.0
    %v2102 = vmax.f32 %v2070, 0.0
    %v2103 = vmax.f32 %v2071, 0.0
    %v2104 = vpack.c.bf16 %v2076, %v2072
    %v2105 = vpack.c.bf16 %v2077, %v2073
    %v2106 = vpack.c.bf16 %v2078, %v2074
    %v2107 = vpack.c.bf16 %v2079, %v2075
    %v2108 = vpack.c.bf16 %v2084, %v2080
    %v2109 = vpack.c.bf16 %v2085, %v2081
    %v2110 = vpack.c.bf16 %v2086, %v2082
    %v2111 = vpack.c.bf16 %v2087, %v2083
    %v2112 = vpack.c.bf16 %v2092, %v2088
    %v2113 = vpack.c.bf16 %v2093, %v2089
    %v2114 = vpack.c.bf16 %v2094, %v2090
    %v2115 = vpack.c.bf16 %v2095, %v2091
    %v2116 = vpack.c.bf16 %v2100, %v2096
    %v2117 = vpack.c.bf16 %v2101, %v2097
    %v2118 = vpack.c.bf16 %v2102, %v2098
    %v2119 = vpack.c.bf16 %v2103, %v2099
    %2120 = vst [vmem:[#allocation2 + $0x180] sm:$0xff] %v2104
    %2121 = vst [vmem:[#allocation2 + $0x188] sm:$0xff] %v2105
    %2122 = vst [vmem:[#allocation2 + $0x190] sm:$0xff] %v2106
    %2123 = vst [vmem:[#allocation2 + $0x198] sm:$0xff] %v2107
    %2124 = vst [vmem:[#allocation2 + $0x1a0] sm:$0xff] %v2108
    %2125 = vst [vmem:[#allocation2 + $0x1a8] sm:$0xff] %v2109
    %2126 = vst [vmem:[#allocation2 + $0x1b0] sm:$0xff] %v2110
    %2127 = vst [vmem:[#allocation2 + $0x1b8] sm:$0xff] %v2111
    %2128 = vst [vmem:[#allocation2 + $0x1c0] sm:$0xff] %v2112
    %2129 = vst [vmem:[#allocation2 + $0x1c8] sm:$0xff] %v2113
    %2130 = vst [vmem:[#allocation2 + $0x1d0] sm:$0xff] %v2114
    %2131 = vst [vmem:[#allocation2 + $0x1d8] sm:$0xff] %v2115
    %2132 = vst [vmem:[#allocation2 + $0x1e0] sm:$0xff] %v2116
    %2133 = vst [vmem:[#allocation2 + $0x1e8] sm:$0xff] %v2117
    %2134 = vst [vmem:[#allocation2 + $0x1f0] sm:$0xff] %v2118
    %2135 = vst [vmem:[#allocation2 + $0x1f8] sm:$0xff] %v2119
    %s2136 = scalar_lea.vmem %s0, 128
    %v2137 = vld [vmem:[%s2136] sm:$0xff]
    %v2138 = vld [vmem:[%s2136 + $0x8] sm:$0xff]
    %v2139 = vld [vmem:[%s2136 + $0x10] sm:$0xff]
    %v2140 = vld [vmem:[%s2136 + $0x18] sm:$0xff]
    %v2145 = vunpack.c.l.b16 %v2137
    %v2146 = vunpack.c.h.b16 %v2137
    %v2147 = vunpack.c.l.b16 %v2138
    %v2148 = vunpack.c.h.b16 %v2138
    %v2149 = vunpack.c.l.b16 %v2139
    %v2150 = vunpack.c.h.b16 %v2139
    %v2151 = vunpack.c.l.b16 %v2140
    %v2152 = vunpack.c.h.b16 %v2140
    %v2153 = vpack.c.b16 %v2145, %v2145
    %v2154 = vpack.c.b16 %v2146, %v2146
    %v2155 = vpack.c.b16 %v2147, %v2147
    %v2156 = vpack.c.b16 %v2148, %v2148
    %v2157 = vpack.c.b16 %v2149, %v2149
    %v2158 = vpack.c.b16 %v2150, %v2150
    %v2159 = vpack.c.b16 %v2151, %v2151
    %v2160 = vpack.c.b16 %v2152, %v2152
    %v2162 = vsel %vm200, %v2153, 0
    %v2165 = vsel %vm200, %v2154, 0
    %v2168 = vsel %vm200, %v2155, 0
    %v2171 = vsel %vm200, %v2156, 0
    %v2174 = vsel %vm200, %v2157, 0
    %v2177 = vsel %vm200, %v2158, 0
    %v2180 = vsel %vm200, %v2159, 0
    %v2183 = vsel %vm200, %v2160, 0
    %2185 = vmatprep.subr.bf16.mxu0 %v2165
    %2186 = vmatpush1.bf16.msra.mxu0 %v2162
    %2187 = vmatprep.subr.bf16.mxu0 0
    %2188 = vmatpush1.bf16.msra.mxu0 0
    %2189 = vmatprep.subr.bf16.mxu0 0
    %2190 = vmatpush1.bf16.msra.mxu0 0
    %2191 = vmatprep.subr.bf16.mxu0 0
    %2192 = vmatpush1.bf16.msra.mxu0 0
    %2193 = vmatprep.subr.bf16.mxu0 0
    %2194 = vmatpush1.bf16.msra.mxu0 0
    %2195 = vmatprep.subr.bf16.mxu0 0
    %2196 = vmatpush1.bf16.msra.mxu0 0
    %2197 = vmatprep.subr.bf16.mxu0 0
    %2198 = vmatpush1.bf16.msra.mxu0 0
    %2199 = vmatprep.subr.bf16.mxu0 0
    %2200 = vmatpush1.bf16.msra.mxu0 0
    %2201 = vmatprep.subr.bf16.mxu0 0
    %2202 = vmatpush1.bf16.msra.mxu0 0
    %2203 = vmatprep.subr.bf16.mxu0 0
    %2204 = vmatpush1.bf16.msra.mxu0 0
    %2205 = vmatprep.subr.bf16.mxu0 0
    %2206 = vmatpush1.bf16.msra.mxu0 0
    %2207 = vmatprep.subr.bf16.mxu0 0
    %2208 = vmatpush1.bf16.msra.mxu0 0
    %2209 = vmatprep.subr.bf16.mxu0 0
    %2210 = vmatpush1.bf16.msra.mxu0 0
    %2211 = vmatprep.subr.bf16.mxu0 0
    %2212 = vmatpush1.bf16.msra.mxu0 0
    %2213 = vmatprep.subr.bf16.mxu0 0
    %2214 = vmatpush1.bf16.msra.mxu0 0
    %2215 = vmatprep.subr.bf16.mxu0 0
    %2216 = vmatpush1.bf16.msra.mxu0 0
    %2217 = vmatprep.mubr.bf16.mxu0 0
    %2218 = vmatmul.mubr.bf16.gmra.mrb[0].mxu0 %v189
    %v2219 = vpop.f32.mrb[0].mxu0
    %v2220 = vadd.f32 0.0, %v2219
    %v2221 = vpop.f32.mrb[0].mxu0
    %v2222 = vadd.f32 0.0, %v2221
    %v2223 = vpop.f32.mrb[0].mxu0
    %v2224 = vadd.f32 0.0, %v2223
    %v2225 = vpop.f32.mrb[0].mxu0
    %v2226 = vadd.f32 0.0, %v2225
    %2227 = vmatprep.mubr.bf16.mxu0 0
    %2228 = vmatmul.mubr.bf16.gmra.mrb[0].mxu0 %v192
    %v2229 = vpop.f32.mrb[0].mxu0
    %v2230 = vadd.f32 0.0, %v2229
    %v2231 = vpop.f32.mrb[0].mxu0
    %v2232 = vadd.f32 0.0, %v2231
    %v2233 = vpop.f32.mrb[0].mxu0
    %v2234 = vadd.f32 0.0, %v2233
    %v2235 = vpop.f32.mrb[0].mxu0
    %v2236 = vadd.f32 0.0, %v2235
    %2237 = vmatprep.mubr.bf16.mxu0 0
    %2238 = vmatmul.mubr.bf16.gmra.mrb[0].mxu0 %v195
    %v2239 = vpop.f32.mrb[0].mxu0
    %v2240 = vadd.f32 0.0, %v2239
    %v2241 = vpop.f32.mrb[0].mxu0
    %v2242 = vadd.f32 0.0, %v2241
    %v2243 = vpop.f32.mrb[0].mxu0
    %v2244 = vadd.f32 0.0, %v2243
    %v2245 = vpop.f32.mrb[0].mxu0
    %v2246 = vadd.f32 0.0, %v2245
    %2247 = vmatprep.mubr.bf16.mxu0 0
    %2248 = vmatmul.mubr.bf16.gmra.mrb[0].mxu0 %v198
    %v2249 = vpop.f32.mrb[0].mxu0
    %v2250 = vadd.f32 0.0, %v2249
    %v2251 = vpop.f32.mrb[0].mxu0
    %v2252 = vadd.f32 0.0, %v2251
    %v2253 = vpop.f32.mrb[0].mxu0
    %v2254 = vadd.f32 0.0, %v2253
    %v2255 = vpop.f32.mrb[0].mxu0
    %v2256 = vadd.f32 0.0, %v2255
    %2257 = vdwg.mxu0
    %2258 = vmatprep.subr.bf16.mxu0 %v2171
    %2259 = vmatpush1.bf16.msra.mxu0 %v2168
    %2260 = vmatprep.subr.bf16.mxu0 0
    %2261 = vmatpush1.bf16.msra.mxu0 0
    %2262 = vmatprep.subr.bf16.mxu0 0
    %2263 = vmatpush1.bf16.msra.mxu0 0
    %2264 = vmatprep.subr.bf16.mxu0 0
    %2265 = vmatpush1.bf16.msra.mxu0 0
    %2266 = vmatprep.subr.bf16.mxu0 0
    %2267 = vmatpush1.bf16.msra.mxu0 0
    %2268 = vmatprep.subr.bf16.mxu0 0
    %2269 = vmatpush1.bf16.msra.mxu0 0
    %2270 = vmatprep.subr.bf16.mxu0 0
    %2271 = vmatpush1.bf16.msra.mxu0 0
    %2272 = vmatprep.subr.bf16.mxu0 0
    %2273 = vmatpush1.bf16.msra.mxu0 0
    %2274 = vmatprep.subr.bf16.mxu0 0
    %2275 = vmatpush1.bf16.msra.mxu0 0
    %2276 = vmatprep.subr.bf16.mxu0 0
    %2277 = vmatpush1.bf16.msra.mxu0 0
    %2278 = vmatprep.subr.bf16.mxu0 0
    %2279 = vmatpush1.bf16.msra.mxu0 0
    %2280 = vmatprep.subr.bf16.mxu0 0
    %2281 = vmatpush1.bf16.msra.mxu0 0
    %2282 = vmatprep.subr.bf16.mxu0 0
    %2283 = vmatpush1.bf16.msra.mxu0 0
    %2284 = vmatprep.subr.bf16.mxu0 0
    %2285 = vmatpush1.bf16.msra.mxu0 0
    %2286 = vmatprep.subr.bf16.mxu0 0
    %2287 = vmatpush1.bf16.msra.mxu0 0
    %2288 = vmatprep.subr.bf16.mxu0 0
    %2289 = vmatpush1.bf16.msra.mxu0 0
    %2290 = vmatprep.mubr.bf16.mxu0 0
    %2291 = vmatmul.mubr.bf16.gmra.mrb[0].mxu0 %v189
    %v2292 = vpop.f32.mrb[0].mxu0
    %v2293 = vadd.f32 0.0, %v2292
    %v2294 = vpop.f32.mrb[0].mxu0
    %v2295 = vadd.f32 0.0, %v2294
    %v2296 = vpop.f32.mrb[0].mxu0
    %v2297 = vadd.f32 0.0, %v2296
    %v2298 = vpop.f32.mrb[0].mxu0
    %v2299 = vadd.f32 0.0, %v2298
    %2300 = vmatprep.mubr.bf16.mxu0 0
    %2301 = vmatmul.mubr.bf16.gmra.mrb[0].mxu0 %v192
    %v2302 = vpop.f32.mrb[0].mxu0
    %v2303 = vadd.f32 0.0, %v2302
    %v2304 = vpop.f32.mrb[0].mxu0
    %v2305 = vadd.f32 0.0, %v2304
    %v2306 = vpop.f32.mrb[0].mxu0
    %v2307 = vadd.f32 0.0, %v2306
    %v2308 = vpop.f32.mrb[0].mxu0
    %v2309 = vadd.f32 0.0, %v2308
    %2310 = vmatprep.mubr.bf16.mxu0 0
    %2311 = vmatmul.mubr.bf16.gmra.mrb[0].mxu0 %v195
    %v2312 = vpop.f32.mrb[0].mxu0
    %v2313 = vadd.f32 0.0, %v2312
    %v2314 = vpop.f32.mrb[0].mxu0
    %v2315 = vadd.f32 0.0, %v2314
    %v2316 = vpop.f32.mrb[0].mxu0
    %v2317 = vadd.f32 0.0, %v2316
    %v2318 = vpop.f32.mrb[0].mxu0
    %v2319 = vadd.f32 0.0, %v2318
    %2320 = vmatprep.mubr.bf16.mxu0 0
    %2321 = vmatmul.mubr.bf16.gmra.mrb[0].mxu0 %v198
    %v2322 = vpop.f32.mrb[0].mxu0
    %v2323 = vadd.f32 0.0, %v2322
    %v2324 = vpop.f32.mrb[0].mxu0
    %v2325 = vadd.f32 0.0, %v2324
    %v2326 = vpop.f32.mrb[0].mxu0
    %v2327 = vadd.f32 0.0, %v2326
    %v2328 = vpop.f32.mrb[0].mxu0
    %v2329 = vadd.f32 0.0, %v2328
    %2330 = vdwg.mxu0
    %2331 = vmatprep.subr.bf16.mxu0 %v2177
    %2332 = vmatpush1.bf16.msra.mxu0 %v2174
    %2333 = vmatprep.subr.bf16.mxu0 0
    %2334 = vmatpush1.bf16.msra.mxu0 0
    %2335 = vmatprep.subr.bf16.mxu0 0
    %2336 = vmatpush1.bf16.msra.mxu0 0
    %2337 = vmatprep.subr.bf16.mxu0 0
    %2338 = vmatpush1.bf16.msra.mxu0 0
    %2339 = vmatprep.subr.bf16.mxu0 0
    %2340 = vmatpush1.bf16.msra.mxu0 0
    %2341 = vmatprep.subr.bf16.mxu0 0
    %2342 = vmatpush1.bf16.msra.mxu0 0
    %2343 = vmatprep.subr.bf16.mxu0 0
    %2344 = vmatpush1.bf16.msra.mxu0 0
    %2345 = vmatprep.subr.bf16.mxu0 0
    %2346 = vmatpush1.bf16.msra.mxu0 0
    %2347 = vmatprep.subr.bf16.mxu0 0
    %2348 = vmatpush1.bf16.msra.mxu0 0
    %2349 = vmatprep.subr.bf16.mxu0 0
    %2350 = vmatpush1.bf16.msra.mxu0 0
    %2351 = vmatprep.subr.bf16.mxu0 0
    %2352 = vmatpush1.bf16.msra.mxu0 0
    %2353 = vmatprep.subr.bf16.mxu0 0
    %2354 = vmatpush1.bf16.msra.mxu0 0
    %2355 = vmatprep.subr.bf16.mxu0 0
    %2356 = vmatpush1.bf16.msra.mxu0 0
    %2357 = vmatprep.subr.bf16.mxu0 0
    %2358 = vmatpush1.bf16.msra.mxu0 0
    %2359 = vmatprep.subr.bf16.mxu0 0
    %2360 = vmatpush1.bf16.msra.mxu0 0
    %2361 = vmatprep.subr.bf16.mxu0 0
    %2362 = vmatpush1.bf16.msra.mxu0 0
    %2363 = vmatprep.mubr.bf16.mxu0 0
    %2364 = vmatmul.mubr.bf16.gmra.mrb[0].mxu0 %v189
    %v2365 = vpop.f32.mrb[0].mxu0
    %v2366 = vadd.f32 0.0, %v2365
    %v2367 = vpop.f32.mrb[0].mxu0
    %v2368 = vadd.f32 0.0, %v2367
    %v2369 = vpop.f32.mrb[0].mxu0
    %v2370 = vadd.f32 0.0, %v2369
    %v2371 = vpop.f32.mrb[0].mxu0
    %v2372 = vadd.f32 0.0, %v2371
    %2373 = vmatprep.mubr.bf16.mxu0 0
    %2374 = vmatmul.mubr.bf16.gmra.mrb[0].mxu0 %v192
    %v2375 = vpop.f32.mrb[0].mxu0
    %v2376 = vadd.f32 0.0, %v2375
    %v2377 = vpop.f32.mrb[0].mxu0
    %v2378 = vadd.f32 0.0, %v2377
    %v2379 = vpop.f32.mrb[0].mxu0
    %v2380 = vadd.f32 0.0, %v2379
    %v2381 = vpop.f32.mrb[0].mxu0
    %v2382 = vadd.f32 0.0, %v2381
    %2383 = vmatprep.mubr.bf16.mxu0 0
    %2384 = vmatmul.mubr.bf16.gmra.mrb[0].mxu0 %v195
    %v2385 = vpop.f32.mrb[0].mxu0
    %v2386 = vadd.f32 0.0, %v2385
    %v2387 = vpop.f32.mrb[0].mxu0
    %v2388 = vadd.f32 0.0, %v2387
    %v2389 = vpop.f32.mrb[0].mxu0
    %v2390 = vadd.f32 0.0, %v2389
    %v2391 = vpop.f32.mrb[0].mxu0
    %v2392 = vadd.f32 0.0, %v2391
    %2393 = vmatprep.mubr.bf16.mxu0 0
    %2394 = vmatmul.mubr.bf16.gmra.mrb[0].mxu0 %v198
    %v2395 = vpop.f32.mrb[0].mxu0
    %v2396 = vadd.f32 0.0, %v2395
    %v2397 = vpop.f32.mrb[0].mxu0
    %v2398 = vadd.f32 0.0, %v2397
    %v2399 = vpop.f32.mrb[0].mxu0
    %v2400 = vadd.f32 0.0, %v2399
    %v2401 = vpop.f32.mrb[0].mxu0
    %v2402 = vadd.f32 0.0, %v2401
    %2403 = vdwg.mxu0
    %2404 = vmatprep.subr.bf16.mxu0 %v2183
    %2405 = vmatpush1.bf16.msra.mxu0 %v2180
    %2406 = vmatprep.subr.bf16.mxu0 0
    %2407 = vmatpush1.bf16.msra.mxu0 0
    %2408 = vmatprep.subr.bf16.mxu0 0
    %2409 = vmatpush1.bf16.msra.mxu0 0
    %2410 = vmatprep.subr.bf16.mxu0 0
    %2411 = vmatpush1.bf16.msra.mxu0 0
    %2412 = vmatprep.subr.bf16.mxu0 0
    %2413 = vmatpush1.bf16.msra.mxu0 0
    %2414 = vmatprep.subr.bf16.mxu0 0
    %2415 = vmatpush1.bf16.msra.mxu0 0
    %2416 = vmatprep.subr.bf16.mxu0 0
    %2417 = vmatpush1.bf16.msra.mxu0 0
    %2418 = vmatprep.subr.bf16.mxu0 0
    %2419 = vmatpush1.bf16.msra.mxu0 0
    %2420 = vmatprep.subr.bf16.mxu0 0
    %2421 = vmatpush1.bf16.msra.mxu0 0
    %2422 = vmatprep.subr.bf16.mxu0 0
    %2423 = vmatpush1.bf16.msra.mxu0 0
    %2424 = vmatprep.subr.bf16.mxu0 0
    %2425 = vmatpush1.bf16.msra.mxu0 0
    %2426 = vmatprep.subr.bf16.mxu0 0
    %2427 = vmatpush1.bf16.msra.mxu0 0
    %2428 = vmatprep.subr.bf16.mxu0 0
    %2429 = vmatpush1.bf16.msra.mxu0 0
    %2430 = vmatprep.subr.bf16.mxu0 0
    %2431 = vmatpush1.bf16.msra.mxu0 0
    %2432 = vmatprep.subr.bf16.mxu0 0
    %2433 = vmatpush1.bf16.msra.mxu0 0
    %2434 = vmatprep.subr.bf16.mxu0 0
    %2435 = vmatpush1.bf16.msra.mxu0 0
    %2436 = vmatprep.mubr.bf16.mxu0 0
    %2437 = vmatmul.mubr.bf16.gmra.mrb[0].mxu0 %v189
    %v2438 = vpop.f32.mrb[0].mxu0
    %v2439 = vadd.f32 0.0, %v2438
    %v2440 = vpop.f32.mrb[0].mxu0
    %v2441 = vadd.f32 0.0, %v2440
    %v2442 = vpop.f32.mrb[0].mxu0
    %v2443 = vadd.f32 0.0, %v2442
    %v2444 = vpop.f32.mrb[0].mxu0
    %v2445 = vadd.f32 0.0, %v2444
    %2446 = vmatprep.mubr.bf16.mxu0 0
    %2447 = vmatmul.mubr.bf16.gmra.mrb[0].mxu0 %v192
    %v2448 = vpop.f32.mrb[0].mxu0
    %v2449 = vadd.f32 0.0, %v2448
    %v2450 = vpop.f32.mrb[0].mxu0
    %v2451 = vadd.f32 0.0, %v2450
    %v2452 = vpop.f32.mrb[0].mxu0
    %v2453 = vadd.f32 0.0, %v2452
    %v2454 = vpop.f32.mrb[0].mxu0
    %v2455 = vadd.f32 0.0, %v2454
    %2456 = vmatprep.mubr.bf16.mxu0 0
    %2457 = vmatmul.mubr.bf16.gmra.mrb[0].mxu0 %v195
    %v2458 = vpop.f32.mrb[0].mxu0
    %v2459 = vadd.f32 0.0, %v2458
    %v2460 = vpop.f32.mrb[0].mxu0
    %v2461 = vadd.f32 0.0, %v2460
    %v2462 = vpop.f32.mrb[0].mxu0
    %v2463 = vadd.f32 0.0, %v2462
    %v2464 = vpop.f32.mrb[0].mxu0
    %v2465 = vadd.f32 0.0, %v2464
    %2466 = vmatprep.mubr.bf16.mxu0 0
    %2467 = vmatmul.mubr.bf16.gmra.mrb[0].mxu0 %v198
    %v2468 = vpop.f32.mrb[0].mxu0
    %v2469 = vadd.f32 0.0, %v2468
    %v2470 = vpop.f32.mrb[0].mxu0
    %v2471 = vadd.f32 0.0, %v2470
    %v2472 = vpop.f32.mrb[0].mxu0
    %v2473 = vadd.f32 0.0, %v2472
    %v2474 = vpop.f32.mrb[0].mxu0
    %v2475 = vadd.f32 0.0, %v2474
    %2476 = vdwg.mxu0
    %v2477 = vmax.f32 %v2220, %v2366
    %v2478 = vmax.f32 %v2222, %v2368
    %v2479 = vmax.f32 %v2293, %v2439
    %v2480 = vmax.f32 %v2295, %v2441
    %v2481 = vmax.f32 %v2224, %v2370
    %v2482 = vmax.f32 %v2226, %v2372
    %v2483 = vmax.f32 %v2297, %v2443
    %v2484 = vmax.f32 %v2299, %v2445
    %v2485 = vmax.f32 %v2230, %v2376
    %v2486 = vmax.f32 %v2232, %v2378
    %v2487 = vmax.f32 %v2303, %v2449
    %v2488 = vmax.f32 %v2305, %v2451
    %v2489 = vmax.f32 %v2234, %v2380
    %v2490 = vmax.f32 %v2236, %v2382
    %v2491 = vmax.f32 %v2307, %v2453
    %v2492 = vmax.f32 %v2309, %v2455
    %v2493 = vmax.f32 %v2240, %v2386
    %v2494 = vmax.f32 %v2242, %v2388
    %v2495 = vmax.f32 %v2313, %v2459
    %v2496 = vmax.f32 %v2315, %v2461
    %v2497 = vmax.f32 %v2244, %v2390
    %v2498 = vmax.f32 %v2246, %v2392
    %v2499 = vmax.f32 %v2317, %v2463
    %v2500 = vmax.f32 %v2319, %v2465
    %v2501 = vmax.f32 %v2250, %v2396
    %v2502 = vmax.f32 %v2252, %v2398
    %v2503 = vmax.f32 %v2323, %v2469
    %v2504 = vmax.f32 %v2325, %v2471
    %v2505 = vmax.f32 %v2254, %v2400
    %v2506 = vmax.f32 %v2256, %v2402
    %v2507 = vmax.f32 %v2327, %v2473
    %v2508 = vmax.f32 %v2329, %v2475
    %v2509 = vadd.f32 %v2477, %v552
    %v2510 = vadd.f32 %v2478, %v552
    %v2511 = vadd.f32 %v2479, %v552
    %v2512 = vadd.f32 %v2480, %v552
    %v2513 = vadd.f32 %v2481, %v557
    %v2514 = vadd.f32 %v2482, %v557
    %v2515 = vadd.f32 %v2483, %v557
    %v2516 = vadd.f32 %v2484, %v557
    %v2517 = vadd.f32 %v2485, %v562
    %v2518 = vadd.f32 %v2486, %v562
    %v2519 = vadd.f32 %v2487, %v562
    %v2520 = vadd.f32 %v2488, %v562
    %v2521 = vadd.f32 %v2489, %v567
    %v2522 = vadd.f32 %v2490, %v567
    %v2523 = vadd.f32 %v2491, %v567
    %v2524 = vadd.f32 %v2492, %v567
    %v2525 = vadd.f32 %v2493, %v572
    %v2526 = vadd.f32 %v2494, %v572
    %v2527 = vadd.f32 %v2495, %v572
    %v2528 = vadd.f32 %v2496, %v572
    %v2529 = vadd.f32 %v2497, %v577
    %v2530 = vadd.f32 %v2498, %v577
    %v2531 = vadd.f32 %v2499, %v577
    %v2532 = vadd.f32 %v2500, %v577
    %v2533 = vadd.f32 %v2501, %v582
    %v2534 = vadd.f32 %v2502, %v582
    %v2535 = vadd.f32 %v2503, %v582
    %v2536 = vadd.f32 %v2504, %v582
    %v2537 = vadd.f32 %v2505, %v587
    %v2538 = vadd.f32 %v2506, %v587
    %v2539 = vadd.f32 %v2507, %v587
    %v2540 = vadd.f32 %v2508, %v587
    %v2541 = vmax.f32 %v2509, 0.0
    %v2542 = vmax.f32 %v2510, 0.0
    %v2543 = vmax.f32 %v2511, 0.0
    %v2544 = vmax.f32 %v2512, 0.0
    %v2545 = vmax.f32 %v2513, 0.0
    %v2546 = vmax.f32 %v2514, 0.0
    %v2547 = vmax.f32 %v2515, 0.0
    %v2548 = vmax.f32 %v2516, 0.0
    %v2549 = vmax.f32 %v2517, 0.0
    %v2550 = vmax.f32 %v2518, 0.0
    %v2551 = vmax.f32 %v2519, 0.0
    %v2552 = vmax.f32 %v2520, 0.0
    %v2553 = vmax.f32 %v2521, 0.0
    %v2554 = vmax.f32 %v2522, 0.0
    %v2555 = vmax.f32 %v2523, 0.0
    %v2556 = vmax.f32 %v2524, 0.0
    %v2557 = vmax.f32 %v2525, 0.0
    %v2558 = vmax.f32 %v2526, 0.0
    %v2559 = vmax.f32 %v2527, 0.0
    %v2560 = vmax.f32 %v2528, 0.0
    %v2561 = vmax.f32 %v2529, 0.0
    %v2562 = vmax.f32 %v2530, 0.0
    %v2563 = vmax.f32 %v2531, 0.0
    %v2564 = vmax.f32 %v2532, 0.0
    %v2565 = vmax.f32 %v2533, 0.0
    %v2566 = vmax.f32 %v2534, 0.0
    %v2567 = vmax.f32 %v2535, 0.0
    %v2568 = vmax.f32 %v2536, 0.0
    %v2569 = vmax.f32 %v2537, 0.0
    %v2570 = vmax.f32 %v2538, 0.0
    %v2571 = vmax.f32 %v2539, 0.0
    %v2572 = vmax.f32 %v2540, 0.0
    %v2573 = vpack.c.bf16 %v2545, %v2541
    %v2574 = vpack.c.bf16 %v2546, %v2542
    %v2575 = vpack.c.bf16 %v2547, %v2543
    %v2576 = vpack.c.bf16 %v2548, %v2544
    %v2577 = vpack.c.bf16 %v2553, %v2549
    %v2578 = vpack.c.bf16 %v2554, %v2550
    %v2579 = vpack.c.bf16 %v2555, %v2551
    %v2580 = vpack.c.bf16 %v2556, %v2552
    %v2581 = vpack.c.bf16 %v2561, %v2557
    %v2582 = vpack.c.bf16 %v2562, %v2558
    %v2583 = vpack.c.bf16 %v2563, %v2559
    %v2584 = vpack.c.bf16 %v2564, %v2560
    %v2585 = vpack.c.bf16 %v2569, %v2565
    %v2586 = vpack.c.bf16 %v2570, %v2566
    %v2587 = vpack.c.bf16 %v2571, %v2567
    %v2588 = vpack.c.bf16 %v2572, %v2568
    %2589 = vst [vmem:[#allocation2 + $0x200] sm:$0xff] %v2573
    %2590 = vst [vmem:[#allocation2 + $0x208] sm:$0xff] %v2574
    %2591 = vst [vmem:[#allocation2 + $0x210] sm:$0xff] %v2575
    %2592 = vst [vmem:[#allocation2 + $0x218] sm:$0xff] %v2576
    %2593 = vst [vmem:[#allocation2 + $0x220] sm:$0xff] %v2577
    %2594 = vst [vmem:[#allocation2 + $0x228] sm:$0xff] %v2578
    %2595 = vst [vmem:[#allocation2 + $0x230] sm:$0xff] %v2579
    %2596 = vst [vmem:[#allocation2 + $0x238] sm:$0xff] %v2580
    %2597 = vst [vmem:[#allocation2 + $0x240] sm:$0xff] %v2581
    %2598 = vst [vmem:[#allocation2 + $0x248] sm:$0xff] %v2582
    %2599 = vst [vmem:[#allocation2 + $0x250] sm:$0xff] %v2583
    %2600 = vst [vmem:[#allocation2 + $0x258] sm:$0xff] %v2584
    %2601 = vst [vmem:[#allocation2 + $0x260] sm:$0xff] %v2585
    %2602 = vst [vmem:[#allocation2 + $0x268] sm:$0xff] %v2586
    %2603 = vst [vmem:[#allocation2 + $0x270] sm:$0xff] %v2587
    %2604 = vst [vmem:[#allocation2 + $0x278] sm:$0xff] %v2588
    %s2605 = scalar_lea.vmem %s0, 160
    %v2606 = vld [vmem:[%s2605] sm:$0xff]
    %v2607 = vld [vmem:[%s2605 + $0x8] sm:$0xff]
    %v2608 = vld [vmem:[%s2605 + $0x10] sm:$0xff]
    %v2609 = vld [vmem:[%s2605 + $0x18] sm:$0xff]
    %v2614 = vunpack.c.l.b16 %v2606
    %v2615 = vunpack.c.h.b16 %v2606
    %v2616 = vunpack.c.l.b16 %v2607
    %v2617 = vunpack.c.h.b16 %v2607
    %v2618 = vunpack.c.l.b16 %v2608
    %v2619 = vunpack.c.h.b16 %v2608
    %v2620 = vunpack.c.l.b16 %v2609
    %v2621 = vunpack.c.h.b16 %v2609
    %v2622 = vpack.c.b16 %v2614, %v2614
    %v2623 = vpack.c.b16 %v2615, %v2615
    %v2624 = vpack.c.b16 %v2616, %v2616
    %v2625 = vpack.c.b16 %v2617, %v2617
    %v2626 = vpack.c.b16 %v2618, %v2618
    %v2627 = vpack.c.b16 %v2619, %v2619
    %v2628 = vpack.c.b16 %v2620, %v2620
    %v2629 = vpack.c.b16 %v2621, %v2621
    %v2631 = vsel %vm200, %v2622, 0
    %v2634 = vsel %vm200, %v2623, 0
    %v2637 = vsel %vm200, %v2624, 0
    %v2640 = vsel %vm200, %v2625, 0
    %v2643 = vsel %vm200, %v2626, 0
    %v2646 = vsel %vm200, %v2627, 0
    %v2649 = vsel %vm200, %v2628, 0
    %v2652 = vsel %vm200, %v2629, 0
    %2654 = vmatprep.subr.bf16.mxu0 %v2634
    %2655 = vmatpush1.bf16.msra.mxu0 %v2631
    %2656 = vmatprep.subr.bf16.mxu0 0
    %2657 = vmatpush1.bf16.msra.mxu0 0
    %2658 = vmatprep.subr.bf16.mxu0 0
    %2659 = vmatpush1.bf16.msra.mxu0 0
    %2660 = vmatprep.subr.bf16.mxu0 0
    %2661 = vmatpush1.bf16.msra.mxu0 0
    %2662 = vmatprep.subr.bf16.mxu0 0
    %2663 = vmatpush1.bf16.msra.mxu0 0
    %2664 = vmatprep.subr.bf16.mxu0 0
    %2665 = vmatpush1.bf16.msra.mxu0 0
    %2666 = vmatprep.subr.bf16.mxu0 0
    %2667 = vmatpush1.bf16.msra.mxu0 0
    %2668 = vmatprep.subr.bf16.mxu0 0
    %2669 = vmatpush1.bf16.msra.mxu0 0
    %2670 = vmatprep.subr.bf16.mxu0 0
    %2671 = vmatpush1.bf16.msra.mxu0 0
    %2672 = vmatprep.subr.bf16.mxu0 0
    %2673 = vmatpush1.bf16.msra.mxu0 0
    %2674 = vmatprep.subr.bf16.mxu0 0
    %2675 = vmatpush1.bf16.msra.mxu0 0
    %2676 = vmatprep.subr.bf16.mxu0 0
    %2677 = vmatpush1.bf16.msra.mxu0 0
    %2678 = vmatprep.subr.bf16.mxu0 0
    %2679 = vmatpush1.bf16.msra.mxu0 0
    %2680 = vmatprep.subr.bf16.mxu0 0
    %2681 = vmatpush1.bf16.msra.mxu0 0
    %2682 = vmatprep.subr.bf16.mxu0 0
    %2683 = vmatpush1.bf16.msra.mxu0 0
    %2684 = vmatprep.subr.bf16.mxu0 0
    %2685 = vmatpush1.bf16.msra.mxu0 0
    %2686 = vmatprep.mubr.bf16.mxu0 0
    %2687 = vmatmul.mubr.bf16.gmra.mrb[0].mxu0 %v189
    %v2688 = vpop.f32.mrb[0].mxu0
    %v2689 = vadd.f32 0.0, %v2688
    %v2690 = vpop.f32.mrb[0].mxu0
    %v2691 = vadd.f32 0.0, %v2690
    %v2692 = vpop.f32.mrb[0].mxu0
    %v2693 = vadd.f32 0.0, %v2692
    %v2694 = vpop.f32.mrb[0].mxu0
    %v2695 = vadd.f32 0.0, %v2694
    %2696 = vmatprep.mubr.bf16.mxu0 0
    %2697 = vmatmul.mubr.bf16.gmra.mrb[0].mxu0 %v192
    %v2698 = vpop.f32.mrb[0].mxu0
    %v2699 = vadd.f32 0.0, %v2698
    %v2700 = vpop.f32.mrb[0].mxu0
    %v2701 = vadd.f32 0.0, %v2700
    %v2702 = vpop.f32.mrb[0].mxu0
    %v2703 = vadd.f32 0.0, %v2702
    %v2704 = vpop.f32.mrb[0].mxu0
    %v2705 = vadd.f32 0.0, %v2704
    %2706 = vmatprep.mubr.bf16.mxu0 0
    %2707 = vmatmul.mubr.bf16.gmra.mrb[0].mxu0 %v195
    %v2708 = vpop.f32.mrb[0].mxu0
    %v2709 = vadd.f32 0.0, %v2708
    %v2710 = vpop.f32.mrb[0].mxu0
    %v2711 = vadd.f32 0.0, %v2710
    %v2712 = vpop.f32.mrb[0].mxu0
    %v2713 = vadd.f32 0.0, %v2712
    %v2714 = vpop.f32.mrb[0].mxu0
    %v2715 = vadd.f32 0.0, %v2714
    %2716 = vmatprep.mubr.bf16.mxu0 0
    %2717 = vmatmul.mubr.bf16.gmra.mrb[0].mxu0 %v198
    %v2718 = vpop.f32.mrb[0].mxu0
    %v2719 = vadd.f32 0.0, %v2718
    %v2720 = vpop.f32.mrb[0].mxu0
    %v2721 = vadd.f32 0.0, %v2720
    %v2722 = vpop.f32.mrb[0].mxu0
    %v2723 = vadd.f32 0.0, %v2722
    %v2724 = vpop.f32.mrb[0].mxu0
    %v2725 = vadd.f32 0.0, %v2724
    %2726 = vdwg.mxu0
    %2727 = vmatprep.subr.bf16.mxu0 %v2640
    %2728 = vmatpush1.bf16.msra.mxu0 %v2637
    %2729 = vmatprep.subr.bf16.mxu0 0
    %2730 = vmatpush1.bf16.msra.mxu0 0
    %2731 = vmatprep.subr.bf16.mxu0 0
    %2732 = vmatpush1.bf16.msra.mxu0 0
    %2733 = vmatprep.subr.bf16.mxu0 0
    %2734 = vmatpush1.bf16.msra.mxu0 0
    %2735 = vmatprep.subr.bf16.mxu0 0
    %2736 = vmatpush1.bf16.msra.mxu0 0
    %2737 = vmatprep.subr.bf16.mxu0 0
    %2738 = vmatpush1.bf16.msra.mxu0 0
    %2739 = vmatprep.subr.bf16.mxu0 0
    %2740 = vmatpush1.bf16.msra.mxu0 0
    %2741 = vmatprep.subr.bf16.mxu0 0
    %2742 = vmatpush1.bf16.msra.mxu0 0
    %2743 = vmatprep.subr.bf16.mxu0 0
    %2744 = vmatpush1.bf16.msra.mxu0 0
    %2745 = vmatprep.subr.bf16.mxu0 0
    %2746 = vmatpush1.bf16.msra.mxu0 0
    %2747 = vmatprep.subr.bf16.mxu0 0
    %2748 = vmatpush1.bf16.msra.mxu0 0
    %2749 = vmatprep.subr.bf16.mxu0 0
    %2750 = vmatpush1.bf16.msra.mxu0 0
    %2751 = vmatprep.subr.bf16.mxu0 0
    %2752 = vmatpush1.bf16.msra.mxu0 0
    %2753 = vmatprep.subr.bf16.mxu0 0
    %2754 = vmatpush1.bf16.msra.mxu0 0
    %2755 = vmatprep.subr.bf16.mxu0 0
    %2756 = vmatpush1.bf16.msra.mxu0 0
    %2757 = vmatprep.subr.bf16.mxu0 0
    %2758 = vmatpush1.bf16.msra.mxu0 0
    %2759 = vmatprep.mubr.bf16.mxu0 0
    %2760 = vmatmul.mubr.bf16.gmra.mrb[0].mxu0 %v189
    %v2761 = vpop.f32.mrb[0].mxu0
    %v2762 = vadd.f32 0.0, %v2761
    %v2763 = vpop.f32.mrb[0].mxu0
    %v2764 = vadd.f32 0.0, %v2763
    %v2765 = vpop.f32.mrb[0].mxu0
    %v2766 = vadd.f32 0.0, %v2765
    %v2767 = vpop.f32.mrb[0].mxu0
    %v2768 = vadd.f32 0.0, %v2767
    %2769 = vmatprep.mubr.bf16.mxu0 0
    %2770 = vmatmul.mubr.bf16.gmra.mrb[0].mxu0 %v192
    %v2771 = vpop.f32.mrb[0].mxu0
    %v2772 = vadd.f32 0.0, %v2771
    %v2773 = vpop.f32.mrb[0].mxu0
    %v2774 = vadd.f32 0.0, %v2773
    %v2775 = vpop.f32.mrb[0].mxu0
    %v2776 = vadd.f32 0.0, %v2775
    %v2777 = vpop.f32.mrb[0].mxu0
    %v2778 = vadd.f32 0.0, %v2777
    %2779 = vmatprep.mubr.bf16.mxu0 0
    %2780 = vmatmul.mubr.bf16.gmra.mrb[0].mxu0 %v195
    %v2781 = vpop.f32.mrb[0].mxu0
    %v2782 = vadd.f32 0.0, %v2781
    %v2783 = vpop.f32.mrb[0].mxu0
    %v2784 = vadd.f32 0.0, %v2783
    %v2785 = vpop.f32.mrb[0].mxu0
    %v2786 = vadd.f32 0.0, %v2785
    %v2787 = vpop.f32.mrb[0].mxu0
    %v2788 = vadd.f32 0.0, %v2787
    %2789 = vmatprep.mubr.bf16.mxu0 0
    %2790 = vmatmul.mubr.bf16.gmra.mrb[0].mxu0 %v198
    %v2791 = vpop.f32.mrb[0].mxu0
    %v2792 = vadd.f32 0.0, %v2791
    %v2793 = vpop.f32.mrb[0].mxu0
    %v2794 = vadd.f32 0.0, %v2793
    %v2795 = vpop.f32.mrb[0].mxu0
    %v2796 = vadd.f32 0.0, %v2795
    %v2797 = vpop.f32.mrb[0].mxu0
    %v2798 = vadd.f32 0.0, %v2797
    %2799 = vdwg.mxu0
    %2800 = vmatprep.subr.bf16.mxu0 %v2646
    %2801 = vmatpush1.bf16.msra.mxu0 %v2643
    %2802 = vmatprep.subr.bf16.mxu0 0
    %2803 = vmatpush1.bf16.msra.mxu0 0
    %2804 = vmatprep.subr.bf16.mxu0 0
    %2805 = vmatpush1.bf16.msra.mxu0 0
    %2806 = vmatprep.subr.bf16.mxu0 0
    %2807 = vmatpush1.bf16.msra.mxu0 0
    %2808 = vmatprep.subr.bf16.mxu0 0
    %2809 = vmatpush1.bf16.msra.mxu0 0
    %2810 = vmatprep.subr.bf16.mxu0 0
    %2811 = vmatpush1.bf16.msra.mxu0 0
    %2812 = vmatprep.subr.bf16.mxu0 0
    %2813 = vmatpush1.bf16.msra.mxu0 0
    %2814 = vmatprep.subr.bf16.mxu0 0
    %2815 = vmatpush1.bf16.msra.mxu0 0
    %2816 = vmatprep.subr.bf16.mxu0 0
    %2817 = vmatpush1.bf16.msra.mxu0 0
    %2818 = vmatprep.subr.bf16.mxu0 0
    %2819 = vmatpush1.bf16.msra.mxu0 0
    %2820 = vmatprep.subr.bf16.mxu0 0
    %2821 = vmatpush1.bf16.msra.mxu0 0
    %2822 = vmatprep.subr.bf16.mxu0 0
    %2823 = vmatpush1.bf16.msra.mxu0 0
    %2824 = vmatprep.subr.bf16.mxu0 0
    %2825 = vmatpush1.bf16.msra.mxu0 0
    %2826 = vmatprep.subr.bf16.mxu0 0
    %2827 = vmatpush1.bf16.msra.mxu0 0
    %2828 = vmatprep.subr.bf16.mxu0 0
    %2829 = vmatpush1.bf16.msra.mxu0 0
    %2830 = vmatprep.subr.bf16.mxu0 0
    %2831 = vmatpush1.bf16.msra.mxu0 0
    %2832 = vmatprep.mubr.bf16.mxu0 0
    %2833 = vmatmul.mubr.bf16.gmra.mrb[0].mxu0 %v189
    %v2834 = vpop.f32.mrb[0].mxu0
    %v2835 = vadd.f32 0.0, %v2834
    %v2836 = vpop.f32.mrb[0].mxu0
    %v2837 = vadd.f32 0.0, %v2836
    %v2838 = vpop.f32.mrb[0].mxu0
    %v2839 = vadd.f32 0.0, %v2838
    %v2840 = vpop.f32.mrb[0].mxu0
    %v2841 = vadd.f32 0.0, %v2840
    %2842 = vmatprep.mubr.bf16.mxu0 0
    %2843 = vmatmul.mubr.bf16.gmra.mrb[0].mxu0 %v192
    %v2844 = vpop.f32.mrb[0].mxu0
    %v2845 = vadd.f32 0.0, %v2844
    %v2846 = vpop.f32.mrb[0].mxu0
    %v2847 = vadd.f32 0.0, %v2846
    %v2848 = vpop.f32.mrb[0].mxu0
    %v2849 = vadd.f32 0.0, %v2848
    %v2850 = vpop.f32.mrb[0].mxu0
    %v2851 = vadd.f32 0.0, %v2850
    %2852 = vmatprep.mubr.bf16.mxu0 0
    %2853 = vmatmul.mubr.bf16.gmra.mrb[0].mxu0 %v195
    %v2854 = vpop.f32.mrb[0].mxu0
    %v2855 = vadd.f32 0.0, %v2854
    %v2856 = vpop.f32.mrb[0].mxu0
    %v2857 = vadd.f32 0.0, %v2856
    %v2858 = vpop.f32.mrb[0].mxu0
    %v2859 = vadd.f32 0.0, %v2858
    %v2860 = vpop.f32.mrb[0].mxu0
    %v2861 = vadd.f32 0.0, %v2860
    %2862 = vmatprep.mubr.bf16.mxu0 0
    %2863 = vmatmul.mubr.bf16.gmra.mrb[0].mxu0 %v198
    %v2864 = vpop.f32.mrb[0].mxu0
    %v2865 = vadd.f32 0.0, %v2864
    %v2866 = vpop.f32.mrb[0].mxu0
    %v2867 = vadd.f32 0.0, %v2866
    %v2868 = vpop.f32.mrb[0].mxu0
    %v2869 = vadd.f32 0.0, %v2868
    %v2870 = vpop.f32.mrb[0].mxu0
    %v2871 = vadd.f32 0.0, %v2870
    %2872 = vdwg.mxu0
    %2873 = vmatprep.subr.bf16.mxu0 %v2652
    %2874 = vmatpush1.bf16.msra.mxu0 %v2649
    %2875 = vmatprep.subr.bf16.mxu0 0
    %2876 = vmatpush1.bf16.msra.mxu0 0
    %2877 = vmatprep.subr.bf16.mxu0 0
    %2878 = vmatpush1.bf16.msra.mxu0 0
    %2879 = vmatprep.subr.bf16.mxu0 0
    %2880 = vmatpush1.bf16.msra.mxu0 0
    %2881 = vmatprep.subr.bf16.mxu0 0
    %2882 = vmatpush1.bf16.msra.mxu0 0
    %2883 = vmatprep.subr.bf16.mxu0 0
    %2884 = vmatpush1.bf16.msra.mxu0 0
    %2885 = vmatprep.subr.bf16.mxu0 0
    %2886 = vmatpush1.bf16.msra.mxu0 0
    %2887 = vmatprep.subr.bf16.mxu0 0
    %2888 = vmatpush1.bf16.msra.mxu0 0
    %2889 = vmatprep.subr.bf16.mxu0 0
    %2890 = vmatpush1.bf16.msra.mxu0 0
    %2891 = vmatprep.subr.bf16.mxu0 0
    %2892 = vmatpush1.bf16.msra.mxu0 0
    %2893 = vmatprep.subr.bf16.mxu0 0
    %2894 = vmatpush1.bf16.msra.mxu0 0
    %2895 = vmatprep.subr.bf16.mxu0 0
    %2896 = vmatpush1.bf16.msra.mxu0 0
    %2897 = vmatprep.subr.bf16.mxu0 0
    %2898 = vmatpush1.bf16.msra.mxu0 0
    %2899 = vmatprep.subr.bf16.mxu0 0
    %2900 = vmatpush1.bf16.msra.mxu0 0
    %2901 = vmatprep.subr.bf16.mxu0 0
    %2902 = vmatpush1.bf16.msra.mxu0 0
    %2903 = vmatprep.subr.bf16.mxu0 0
    %2904 = vmatpush1.bf16.msra.mxu0 0
    %2905 = vmatprep.mubr.bf16.mxu0 0
    %2906 = vmatmul.mubr.bf16.gmra.mrb[0].mxu0 %v189
    %v2907 = vpop.f32.mrb[0].mxu0
    %v2908 = vadd.f32 0.0, %v2907
    %v2909 = vpop.f32.mrb[0].mxu0
    %v2910 = vadd.f32 0.0, %v2909
    %v2911 = vpop.f32.mrb[0].mxu0
    %v2912 = vadd.f32 0.0, %v2911
    %v2913 = vpop.f32.mrb[0].mxu0
    %v2914 = vadd.f32 0.0, %v2913
    %2915 = vmatprep.mubr.bf16.mxu0 0
    %2916 = vmatmul.mubr.bf16.gmra.mrb[0].mxu0 %v192
    %v2917 = vpop.f32.mrb[0].mxu0
    %v2918 = vadd.f32 0.0, %v2917
    %v2919 = vpop.f32.mrb[0].mxu0
    %v2920 = vadd.f32 0.0, %v2919
    %v2921 = vpop.f32.mrb[0].mxu0
    %v2922 = vadd.f32 0.0, %v2921
    %v2923 = vpop.f32.mrb[0].mxu0
    %v2924 = vadd.f32 0.0, %v2923
    %2925 = vmatprep.mubr.bf16.mxu0 0
    %2926 = vmatmul.mubr.bf16.gmra.mrb[0].mxu0 %v195
    %v2927 = vpop.f32.mrb[0].mxu0
    %v2928 = vadd.f32 0.0, %v2927
    %v2929 = vpop.f32.mrb[0].mxu0
    %v2930 = vadd.f32 0.0, %v2929
    %v2931 = vpop.f32.mrb[0].mxu0
    %v2932 = vadd.f32 0.0, %v2931
    %v2933 = vpop.f32.mrb[0].mxu0
    %v2934 = vadd.f32 0.0, %v2933
    %2935 = vmatprep.mubr.bf16.mxu0 0
    %2936 = vmatmul.mubr.bf16.gmra.mrb[0].mxu0 %v198
    %v2937 = vpop.f32.mrb[0].mxu0
    %v2938 = vadd.f32 0.0, %v2937
    %v2939 = vpop.f32.mrb[0].mxu0
    %v2940 = vadd.f32 0.0, %v2939
    %v2941 = vpop.f32.mrb[0].mxu0
    %v2942 = vadd.f32 0.0, %v2941
    %v2943 = vpop.f32.mrb[0].mxu0
    %v2944 = vadd.f32 0.0, %v2943
    %2945 = vdwg.mxu0
    %v2946 = vmax.f32 %v2689, %v2835
    %v2947 = vmax.f32 %v2691, %v2837
    %v2948 = vmax.f32 %v2762, %v2908
    %v2949 = vmax.f32 %v2764, %v2910
    %v2950 = vmax.f32 %v2693, %v2839
    %v2951 = vmax.f32 %v2695, %v2841
    %v2952 = vmax.f32 %v2766, %v2912
    %v2953 = vmax.f32 %v2768, %v2914
    %v2954 = vmax.f32 %v2699, %v2845
    %v2955 = vmax.f32 %v2701, %v2847
    %v2956 = vmax.f32 %v2772, %v2918
    %v2957 = vmax.f32 %v2774, %v2920
    %v2958 = vmax.f32 %v2703, %v2849
    %v2959 = vmax.f32 %v2705, %v2851
    %v2960 = vmax.f32 %v2776, %v2922
    %v2961 = vmax.f32 %v2778, %v2924
    %v2962 = vmax.f32 %v2709, %v2855
    %v2963 = vmax.f32 %v2711, %v2857
    %v2964 = vmax.f32 %v2782, %v2928
    %v2965 = vmax.f32 %v2784, %v2930
    %v2966 = vmax.f32 %v2713, %v2859
    %v2967 = vmax.f32 %v2715, %v2861
    %v2968 = vmax.f32 %v2786, %v2932
    %v2969 = vmax.f32 %v2788, %v2934
    %v2970 = vmax.f32 %v2719, %v2865
    %v2971 = vmax.f32 %v2721, %v2867
    %v2972 = vmax.f32 %v2792, %v2938
    %v2973 = vmax.f32 %v2794, %v2940
    %v2974 = vmax.f32 %v2723, %v2869
    %v2975 = vmax.f32 %v2725, %v2871
    %v2976 = vmax.f32 %v2796, %v2942
    %v2977 = vmax.f32 %v2798, %v2944
    %v2978 = vadd.f32 %v2946, %v552
    %v2979 = vadd.f32 %v2947, %v552
    %v2980 = vadd.f32 %v2948, %v552
    %v2981 = vadd.f32 %v2949, %v552
    %v2982 = vadd.f32 %v2950, %v557
    %v2983 = vadd.f32 %v2951, %v557
    %v2984 = vadd.f32 %v2952, %v557
    %v2985 = vadd.f32 %v2953, %v557
    %v2986 = vadd.f32 %v2954, %v562
    %v2987 = vadd.f32 %v2955, %v562
    %v2988 = vadd.f32 %v2956, %v562
    %v2989 = vadd.f32 %v2957, %v562
    %v2990 = vadd.f32 %v2958, %v567
    %v2991 = vadd.f32 %v2959, %v567
    %v2992 = vadd.f32 %v2960, %v567
    %v2993 = vadd.f32 %v2961, %v567
    %v2994 = vadd.f32 %v2962, %v572
    %v2995 = vadd.f32 %v2963, %v572
    %v2996 = vadd.f32 %v2964, %v572
    %v2997 = vadd.f32 %v2965, %v572
    %v2998 = vadd.f32 %v2966, %v577
    %v2999 = vadd.f32 %v2967, %v577
    %v3000 = vadd.f32 %v2968, %v577
    %v3001 = vadd.f32 %v2969, %v577
    %v3002 = vadd.f32 %v2970, %v582
    %v3003 = vadd.f32 %v2971, %v582
    %v3004 = vadd.f32 %v2972, %v582
    %v3005 = vadd.f32 %v2973, %v582
    %v3006 = vadd.f32 %v2974, %v587
    %v3007 = vadd.f32 %v2975, %v587
    %v3008 = vadd.f32 %v2976, %v587
    %v3009 = vadd.f32 %v2977, %v587
    %v3010 = vmax.f32 %v2978, 0.0
    %v3011 = vmax.f32 %v2979, 0.0
    %v3012 = vmax.f32 %v2980, 0.0
    %v3013 = vmax.f32 %v2981, 0.0
    %v3014 = vmax.f32 %v2982, 0.0
    %v3015 = vmax.f32 %v2983, 0.0
    %v3016 = vmax.f32 %v2984, 0.0
    %v3017 = vmax.f32 %v2985, 0.0
    %v3018 = vmax.f32 %v2986, 0.0
    %v3019 = vmax.f32 %v2987, 0.0
    %v3020 = vmax.f32 %v2988, 0.0
    %v3021 = vmax.f32 %v2989, 0.0
    %v3022 = vmax.f32 %v2990, 0.0
    %v3023 = vmax.f32 %v2991, 0.0
    %v3024 = vmax.f32 %v2992, 0.0
    %v3025 = vmax.f32 %v2993, 0.0
    %v3026 = vmax.f32 %v2994, 0.0
    %v3027 = vmax.f32 %v2995, 0.0
    %v3028 = vmax.f32 %v2996, 0.0
    %v3029 = vmax.f32 %v2997, 0.0
    %v3030 = vmax.f32 %v2998, 0.0
    %v3031 = vmax.f32 %v2999, 0.0
    %v3032 = vmax.f32 %v3000, 0.0
    %v3033 = vmax.f32 %v3001, 0.0
    %v3034 = vmax.f32 %v3002, 0.0
    %v3035 = vmax.f32 %v3003, 0.0
    %v3036 = vmax.f32 %v3004, 0.0
    %v3037 = vmax.f32 %v3005, 0.0
    %v3038 = vmax.f32 %v3006, 0.0
    %v3039 = vmax.f32 %v3007, 0.0
    %v3040 = vmax.f32 %v3008, 0.0
    %v3041 = vmax.f32 %v3009, 0.0
    %vm3042 = vcmp.eq.s32.totalorder %v139, 63
    %vm3043 = vcmp.eq.s32.totalorder %v140, 63
    %vm3044 = vcmp.eq.s32.totalorder %v141, 63
    %vm3045 = vcmp.eq.s32.totalorder %v142, 63
    %v3046 = vsel %vm3042, 1, 0
    %v3047 = vsel %vm3043, 1, 0
    %v3048 = vsel %vm3044, 1, 0
    %v3049 = vsel %vm3045, 1, 0
    %vm3050 = vcmp.eq.s32.totalorder %v3046, 1
    %vm3051 = vcmp.eq.s32.totalorder %v3047, 1
    %vm3052 = vcmp.eq.s32.totalorder %v3048, 1
    %vm3053 = vcmp.eq.s32.totalorder %v3049, 1
    %v3054 = vsel %vm3050, 0.0, %v3010
    %v3055 = vsel %vm3051, 0.0, %v3011
    %v3056 = vsel %vm3052, 0.0, %v3012
    %v3057 = vsel %vm3053, 0.0, %v3013
    %v3058 = vsel %vm3050, 0.0, %v3014
    %v3059 = vsel %vm3051, 0.0, %v3015
    %v3060 = vsel %vm3052, 0.0, %v3016
    %v3061 = vsel %vm3053, 0.0, %v3017
    %v3062 = vsel %vm3050, 0.0, %v3018
    %v3063 = vsel %vm3051, 0.0, %v3019
    %v3064 = vsel %vm3052, 0.0, %v3020
    %v3065 = vsel %vm3053, 0.0, %v3021
    %v3066 = vsel %vm3050, 0.0, %v3022
    %v3067 = vsel %vm3051, 0.0, %v3023
    %v3068 = vsel %vm3052, 0.0, %v3024
    %v3069 = vsel %vm3053, 0.0, %v3025
    %v3070 = vsel %vm3050, 0.0, %v3026
    %v3071 = vsel %vm3051, 0.0, %v3027
    %v3072 = vsel %vm3052, 0.0, %v3028
    %v3073 = vsel %vm3053, 0.0, %v3029
    %v3074 = vsel %vm3050, 0.0, %v3030
    %v3075 = vsel %vm3051, 0.0, %v3031
    %v3076 = vsel %vm3052, 0.0, %v3032
    %v3077 = vsel %vm3053, 0.0, %v3033
    %v3078 = vsel %vm3050, 0.0, %v3034
    %v3079 = vsel %vm3051, 0.0, %v3035
    %v3080 = vsel %vm3052, 0.0, %v3036
    %v3081 = vsel %vm3053, 0.0, %v3037
    %v3082 = vsel %vm3050, 0.0, %v3038
    %v3083 = vsel %vm3051, 0.0, %v3039
    %v3084 = vsel %vm3052, 0.0, %v3040
    %v3085 = vsel %vm3053, 0.0, %v3041
    %v3086 = vpack.c.bf16 %v3058, %v3054
    %v3087 = vpack.c.bf16 %v3059, %v3055
    %v3088 = vpack.c.bf16 %v3060, %v3056
    %v3089 = vpack.c.bf16 %v3061, %v3057
    %v3090 = vpack.c.bf16 %v3066, %v3062
    %v3091 = vpack.c.bf16 %v3067, %v3063
    %v3092 = vpack.c.bf16 %v3068, %v3064
    %v3093 = vpack.c.bf16 %v3069, %v3065
    %v3094 = vpack.c.bf16 %v3074, %v3070
    %v3095 = vpack.c.bf16 %v3075, %v3071
    %v3096 = vpack.c.bf16 %v3076, %v3072
    %v3097 = vpack.c.bf16 %v3077, %v3073
    %v3098 = vpack.c.bf16 %v3082, %v3078
    %v3099 = vpack.c.bf16 %v3083, %v3079
    %v3100 = vpack.c.bf16 %v3084, %v3080
    %v3101 = vpack.c.bf16 %v3085, %v3081
    %3102 = vst [vmem:[#allocation2 + $0x280] sm:$0xff] %v3086
    %3103 = vst [vmem:[#allocation2 + $0x288] sm:$0xff] %v3087
    %3104 = vst [vmem:[#allocation2 + $0x290] sm:$0xff] %v3088
    %3105 = vst [vmem:[#allocation2 + $0x298] sm:$0xff] %v3089
    %3106 = vst [vmem:[#allocation2 + $0x2a0] sm:$0xff] %v3090
    %3107 = vst [vmem:[#allocation2 + $0x2a8] sm:$0xff] %v3091
    %3108 = vst [vmem:[#allocation2 + $0x2b0] sm:$0xff] %v3092
    %3109 = vst [vmem:[#allocation2 + $0x2b8] sm:$0xff] %v3093
    %3110 = vst [vmem:[#allocation2 + $0x2c0] sm:$0xff] %v3094
    %3111 = vst [vmem:[#allocation2 + $0x2c8] sm:$0xff] %v3095
    %3112 = vst [vmem:[#allocation2 + $0x2d0] sm:$0xff] %v3096
    %3113 = vst [vmem:[#allocation2 + $0x2d8] sm:$0xff] %v3097
    %3114 = vst [vmem:[#allocation2 + $0x2e0] sm:$0xff] %v3098
    %3115 = vst [vmem:[#allocation2 + $0x2e8] sm:$0xff] %v3099
    %3116 = vst [vmem:[#allocation2 + $0x2f0] sm:$0xff] %v3100
    %3117 = vst [vmem:[#allocation2 + $0x2f8] sm:$0xff] %v3101
    %v3118 = vld [vmem:[#allocation4] sm:$0xff]
    %v3119 = vld [vmem:[#allocation4 + $0x8] sm:$0xff]
    %v3120 = vld [vmem:[#allocation4 + $0x10] sm:$0xff]
    %v3121 = vld [vmem:[#allocation4 + $0x18] sm:$0xff]
    %v3122 = vld [vmem:[#allocation4 + $0x20] sm:$0xff]
    %v3123 = vld [vmem:[#allocation4 + $0x28] sm:$0xff]
    %v3124 = vld [vmem:[#allocation4 + $0x30] sm:$0xff]
    %v3125 = vld [vmem:[#allocation4 + $0x38] sm:$0xff]
    %v3126 = vld [vmem:[#allocation4 + $0x40] sm:$0xff]
    %v3127 = vld [vmem:[#allocation4 + $0x48] sm:$0xff]
    %v3128 = vld [vmem:[#allocation4 + $0x50] sm:$0xff]
    %v3129 = vld [vmem:[#allocation4 + $0x58] sm:$0xff]
    %v3130 = vld [vmem:[#allocation4 + $0x60] sm:$0xff]
    %v3131 = vld [vmem:[#allocation4 + $0x68] sm:$0xff]
    %v3132 = vld [vmem:[#allocation4 + $0x70] sm:$0xff]
    %v3133 = vld [vmem:[#allocation4 + $0x78] sm:$0xff]
    %v3134 = vld [vmem:[#allocation2] sm:$0xff]
    %v3135 = vld [vmem:[#allocation2 + $0x8] sm:$0xff]
    %v3136 = vld [vmem:[#allocation2 + $0x10] sm:$0xff]
    %v3137 = vld [vmem:[#allocation2 + $0x18] sm:$0xff]
    %v3138 = vld [vmem:[#allocation2 + $0x20] sm:$0xff]
    %v3139 = vld [vmem:[#allocation2 + $0x28] sm:$0xff]
    %v3140 = vld [vmem:[#allocation2 + $0x30] sm:$0xff]
    %v3141 = vld [vmem:[#allocation2 + $0x38] sm:$0xff]
    %v3142 = vld [vmem:[#allocation2 + $0x40] sm:$0xff]
    %v3143 = vld [vmem:[#allocation2 + $0x48] sm:$0xff]
    %v3144 = vld [vmem:[#allocation2 + $0x50] sm:$0xff]
    %v3145 = vld [vmem:[#allocation2 + $0x58] sm:$0xff]
    %v3146 = vld [vmem:[#allocation2 + $0x60] sm:$0xff]
    %v3147 = vld [vmem:[#allocation2 + $0x68] sm:$0xff]
    %v3148 = vld [vmem:[#allocation2 + $0x70] sm:$0xff]
    %v3149 = vld [vmem:[#allocation2 + $0x78] sm:$0xff]
    %v3150 = vld [vmem:[#allocation2 + $0x80] sm:$0xff]
    %v3151 = vld [vmem:[#allocation2 + $0x88] sm:$0xff]
    %v3152 = vld [vmem:[#allocation2 + $0x90] sm:$0xff]
    %v3153 = vld [vmem:[#allocation2 + $0x98] sm:$0xff]
    %v3154 = vld [vmem:[#allocation2 + $0xa0] sm:$0xff]
    %v3155 = vld [vmem:[#allocation2 + $0xa8] sm:$0xff]
    %v3156 = vld [vmem:[#allocation2 + $0xb0] sm:$0xff]
    %v3157 = vld [vmem:[#allocation2 + $0xb8] sm:$0xff]
    %v3158 = vld [vmem:[#allocation2 + $0xc0] sm:$0xff]
    %v3159 = vld [vmem:[#allocation2 + $0xc8] sm:$0xff]
    %v3160 = vld [vmem:[#allocation2 + $0xd0] sm:$0xff]
    %v3161 = vld [vmem:[#allocation2 + $0xd8] sm:$0xff]
    %v3162 = vld [vmem:[#allocation2 + $0xe0] sm:$0xff]
    %v3163 = vld [vmem:[#allocation2 + $0xe8] sm:$0xff]
    %v3164 = vld [vmem:[#allocation2 + $0xf0] sm:$0xff]
    %v3165 = vld [vmem:[#allocation2 + $0xf8] sm:$0xff]
    %v3166 = vld [vmem:[#allocation2 + $0x100] sm:$0xff]
    %v3167 = vld [vmem:[#allocation2 + $0x108] sm:$0xff]
    %v3168 = vld [vmem:[#allocation2 + $0x110] sm:$0xff]
    %v3169 = vld [vmem:[#allocation2 + $0x118] sm:$0xff]
    %v3170 = vld [vmem:[#allocation2 + $0x120] sm:$0xff]
    %v3171 = vld [vmem:[#allocation2 + $0x128] sm:$0xff]
    %v3172 = vld [vmem:[#allocation2 + $0x130] sm:$0xff]
    %v3173 = vld [vmem:[#allocation2 + $0x138] sm:$0xff]
    %v3174 = vld [vmem:[#allocation2 + $0x140] sm:$0xff]
    %v3175 = vld [vmem:[#allocation2 + $0x148] sm:$0xff]
    %v3176 = vld [vmem:[#allocation2 + $0x150] sm:$0xff]
    %v3177 = vld [vmem:[#allocation2 + $0x158] sm:$0xff]
    %v3178 = vld [vmem:[#allocation2 + $0x160] sm:$0xff]
    %v3179 = vld [vmem:[#allocation2 + $0x168] sm:$0xff]
    %v3180 = vld [vmem:[#allocation2 + $0x170] sm:$0xff]
    %v3181 = vld [vmem:[#allocation2 + $0x178] sm:$0xff]
    %v3182 = vld [vmem:[#allocation2 + $0x180] sm:$0xff]
    %v3183 = vld [vmem:[#allocation2 + $0x188] sm:$0xff]
    %v3184 = vld [vmem:[#allocation2 + $0x190] sm:$0xff]
    %v3185 = vld [vmem:[#allocation2 + $0x198] sm:$0xff]
    %v3186 = vld [vmem:[#allocation2 + $0x1a0] sm:$0xff]
    %v3187 = vld [vmem:[#allocation2 + $0x1a8] sm:$0xff]
    %v3188 = vld [vmem:[#allocation2 + $0x1b0] sm:$0xff]
    %v3189 = vld [vmem:[#allocation2 + $0x1b8] sm:$0xff]
    %v3190 = vld [vmem:[#allocation2 + $0x1c0] sm:$0xff]
    %v3191 = vld [vmem:[#allocation2 + $0x1c8] sm:$0xff]
    %v3192 = vld [vmem:[#allocation2 + $0x1d0] sm:$0xff]
    %v3193 = vld [vmem:[#allocation2 + $0x1d8] sm:$0xff]
    %v3194 = vld [vmem:[#allocation2 + $0x1e0] sm:$0xff]
    %v3195 = vld [vmem:[#allocation2 + $0x1e8] sm:$0xff]
    %v3196 = vld [vmem:[#allocation2 + $0x1f0] sm:$0xff]
    %v3197 = vld [vmem:[#allocation2 + $0x1f8] sm:$0xff]
    %v3214 = vunpack.c.l.b16 %v3118
    %v3215 = vunpack.c.h.b16 %v3118
    %v3216 = vunpack.c.l.b16 %v3119
    %v3217 = vunpack.c.h.b16 %v3119
    %v3218 = vunpack.c.l.b16 %v3120
    %v3219 = vunpack.c.h.b16 %v3120
    %v3220 = vunpack.c.l.b16 %v3121
    %v3221 = vunpack.c.h.b16 %v3121
    %v3222 = vunpack.c.l.b16 %v3122
    %v3223 = vunpack.c.h.b16 %v3122
    %v3224 = vunpack.c.l.b16 %v3123
    %v3225 = vunpack.c.h.b16 %v3123
    %v3226 = vunpack.c.l.b16 %v3124
    %v3227 = vunpack.c.h.b16 %v3124
    %v3228 = vunpack.c.l.b16 %v3125
    %v3229 = vunpack.c.h.b16 %v3125
    %v3230 = vunpack.c.l.b16 %v3126
    %v3231 = vunpack.c.h.b16 %v3126
    %v3232 = vunpack.c.l.b16 %v3127
    %v3233 = vunpack.c.h.b16 %v3127
    %v3234 = vunpack.c.l.b16 %v3128
    %v3235 = vunpack.c.h.b16 %v3128
    %v3236 = vunpack.c.l.b16 %v3129
    %v3237 = vunpack.c.h.b16 %v3129
    %v3238 = vunpack.c.l.b16 %v3130
    %v3239 = vunpack.c.h.b16 %v3130
    %v3240 = vunpack.c.l.b16 %v3131
    %v3241 = vunpack.c.h.b16 %v3131
    %v3242 = vunpack.c.l.b16 %v3132
    %v3243 = vunpack.c.h.b16 %v3132
    %v3244 = vunpack.c.l.b16 %v3133
    %v3245 = vunpack.c.h.b16 %v3133
    %v3246 = vpack.c.b16 %v3216, %v3214
    %v3247 = vpack.c.b16 %v3217, %v3215
    %v3248 = vpack.c.b16 %v3220, %v3218
    %v3249 = vpack.c.b16 %v3221, %v3219
    %v3250 = vpack.c.b16 %v3224, %v3222
    %v3251 = vpack.c.b16 %v3225, %v3223
    %v3252 = vpack.c.b16 %v3228, %v3226
    %v3253 = vpack.c.b16 %v3229, %v3227
    %v3254 = vpack.c.b16 %v3232, %v3230
    %v3255 = vpack.c.b16 %v3233, %v3231
    %v3256 = vpack.c.b16 %v3236, %v3234
    %v3257 = vpack.c.b16 %v3237, %v3235
    %v3258 = vpack.c.b16 %v3240, %v3238
    %v3259 = vpack.c.b16 %v3241, %v3239
    %v3260 = vpack.c.b16 %v3244, %v3242
    %v3261 = vpack.c.b16 %v3245, %v3243
    %3278 = vmatprep.subr.bf16.mxu0 %v3135
    %3279 = vmatpush1.bf16.msra.mxu0 %v3134
    %3280 = vmatprep.subr.bf16.mxu0 %v3139
    %3281 = vmatpush1.bf16.msra.mxu0 %v3138
    %3282 = vmatprep.subr.bf16.mxu0 %v3143
    %3283 = vmatpush1.bf16.msra.mxu0 %v3142
    %3284 = vmatprep.subr.bf16.mxu0 %v3147
    %3285 = vmatpush1.bf16.msra.mxu0 %v3146
    %3286 = vmatprep.subr.bf16.mxu0 %v3151
    %3287 = vmatpush1.bf16.msra.mxu0 %v3150
    %3288 = vmatprep.subr.bf16.mxu0 %v3155
    %3289 = vmatpush1.bf16.msra.mxu0 %v3154
    %3290 = vmatprep.subr.bf16.mxu0 %v3159
    %3291 = vmatpush1.bf16.msra.mxu0 %v3158
    %3292 = vmatprep.subr.bf16.mxu0 %v3163
    %3293 = vmatpush1.bf16.msra.mxu0 %v3162
    %3294 = vmatprep.subr.bf16.mxu0 %v3167
    %3295 = vmatpush1.bf16.msra.mxu0 %v3166
    %3296 = vmatprep.subr.bf16.mxu0 %v3171
    %3297 = vmatpush1.bf16.msra.mxu0 %v3170
    %3298 = vmatprep.subr.bf16.mxu0 %v3175
    %3299 = vmatpush1.bf16.msra.mxu0 %v3174
    %3300 = vmatprep.subr.bf16.mxu0 %v3179
    %3301 = vmatpush1.bf16.msra.mxu0 %v3178
    %3302 = vmatprep.subr.bf16.mxu0 %v3183
    %3303 = vmatpush1.bf16.msra.mxu0 %v3182
    %3304 = vmatprep.subr.bf16.mxu0 %v3187
    %3305 = vmatpush1.bf16.msra.mxu0 %v3186
    %3306 = vmatprep.subr.bf16.mxu0 %v3191
    %3307 = vmatpush1.bf16.msra.mxu0 %v3190
    %3308 = vmatprep.subr.bf16.mxu0 %v3195
    %3309 = vmatpush1.bf16.msra.mxu0 %v3194
    %3310 = vmatprep.mubr.bf16.mxu0 %v3247
    %3311 = vmatmul.mubr.bf16.gmra.mrb[0].mxu0 %v3246
    %v3312 = vpop.f32.mrb[0].mxu0
    %v3313 = vadd.f32 0.0, %v3312
    %v3314 = vpop.f32.mrb[0].mxu0
    %v3315 = vadd.f32 0.0, %v3314
    %v3316 = vpop.f32.mrb[0].mxu0
    %v3317 = vadd.f32 0.0, %v3316
    %v3318 = vpop.f32.mrb[0].mxu0
    %v3319 = vadd.f32 0.0, %v3318
    %3320 = vmatprep.mubr.bf16.mxu0 %v3249
    %3321 = vmatmul.mubr.bf16.gmra.mrb[0].mxu0 %v3248
    %v3322 = vpop.f32.mrb[0].mxu0
    %v3323 = vadd.f32 0.0, %v3322
    %v3324 = vpop.f32.mrb[0].mxu0
    %v3325 = vadd.f32 0.0, %v3324
    %v3326 = vpop.f32.mrb[0].mxu0
    %v3327 = vadd.f32 0.0, %v3326
    %v3328 = vpop.f32.mrb[0].mxu0
    %v3329 = vadd.f32 0.0, %v3328
    %3330 = vmatprep.mubr.bf16.mxu0 %v3251
    %3331 = vmatmul.mubr.bf16.gmra.mrb[0].mxu0 %v3250
    %v3332 = vpop.f32.mrb[0].mxu0
    %v3333 = vadd.f32 0.0, %v3332
    %v3334 = vpop.f32.mrb[0].mxu0
    %v3335 = vadd.f32 0.0, %v3334
    %v3336 = vpop.f32.mrb[0].mxu0
    %v3337 = vadd.f32 0.0, %v3336
    %v3338 = vpop.f32.mrb[0].mxu0
    %v3339 = vadd.f32 0.0, %v3338
    %3340 = vmatprep.mubr.bf16.mxu0 %v3253
    %3341 = vmatmul.mubr.bf16.gmra.mrb[0].mxu0 %v3252
    %v3342 = vpop.f32.mrb[0].mxu0
    %v3343 = vadd.f32 0.0, %v3342
    %v3344 = vpop.f32.mrb[0].mxu0
    %v3345 = vadd.f32 0.0, %v3344
    %v3346 = vpop.f32.mrb[0].mxu0
    %v3347 = vadd.f32 0.0, %v3346
    %v3348 = vpop.f32.mrb[0].mxu0
    %v3349 = vadd.f32 0.0, %v3348
    %3350 = vmatprep.mubr.bf16.mxu0 %v3255
    %3351 = vmatmul.mubr.bf16.gmra.mrb[0].mxu0 %v3254
    %v3352 = vpop.f32.mrb[0].mxu0
    %v3353 = vadd.f32 0.0, %v3352
    %v3354 = vpop.f32.mrb[0].mxu0
    %v3355 = vadd.f32 0.0, %v3354
    %v3356 = vpop.f32.mrb[0].mxu0
    %v3357 = vadd.f32 0.0, %v3356
    %v3358 = vpop.f32.mrb[0].mxu0
    %v3359 = vadd.f32 0.0, %v3358
    %3360 = vmatprep.mubr.bf16.mxu0 %v3257
    %3361 = vmatmul.mubr.bf16.gmra.mrb[0].mxu0 %v3256
    %v3362 = vpop.f32.mrb[0].mxu0
    %v3363 = vadd.f32 0.0, %v3362
    %v3364 = vpop.f32.mrb[0].mxu0
    %v3365 = vadd.f32 0.0, %v3364
    %v3366 = vpop.f32.mrb[0].mxu0
    %v3367 = vadd.f32 0.0, %v3366
    %v3368 = vpop.f32.mrb[0].mxu0
    %v3369 = vadd.f32 0.0, %v3368
    %3370 = vmatprep.mubr.bf16.mxu0 %v3259
    %3371 = vmatmul.mubr.bf16.gmra.mrb[0].mxu0 %v3258
    %v3372 = vpop.f32.mrb[0].mxu0
    %v3373 = vadd.f32 0.0, %v3372
    %v3374 = vpop.f32.mrb[0].mxu0
    %v3375 = vadd.f32 0.0, %v3374
    %v3376 = vpop.f32.mrb[0].mxu0
    %v3377 = vadd.f32 0.0, %v3376
    %v3378 = vpop.f32.mrb[0].mxu0
    %v3379 = vadd.f32 0.0, %v3378
    %3380 = vmatprep.mubr.bf16.mxu0 %v3261
    %3381 = vmatmul.mubr.bf16.gmra.mrb[0].mxu0 %v3260
    %v3382 = vpop.f32.mrb[0].mxu0
    %v3383 = vadd.f32 0.0, %v3382
    %v3384 = vpop.f32.mrb[0].mxu0
    %v3385 = vadd.f32 0.0, %v3384
    %v3386 = vpop.f32.mrb[0].mxu0
    %v3387 = vadd.f32 0.0, %v3386
    %v3388 = vpop.f32.mrb[0].mxu0
    %v3389 = vadd.f32 0.0, %v3388
    %3390 = vdwg.mxu0
    %3391 = vmatprep.subr.bf16.mxu0 %v3137
    %3392 = vmatpush1.bf16.msra.mxu0 %v3136
    %3393 = vmatprep.subr.bf16.mxu0 %v3141
    %3394 = vmatpush1.bf16.msra.mxu0 %v3140
    %3395 = vmatprep.subr.bf16.mxu0 %v3145
    %3396 = vmatpush1.bf16.msra.mxu0 %v3144
    %3397 = vmatprep.subr.bf16.mxu0 %v3149
    %3398 = vmatpush1.bf16.msra.mxu0 %v3148
    %3399 = vmatprep.subr.bf16.mxu0 %v3153
    %3400 = vmatpush1.bf16.msra.mxu0 %v3152
    %3401 = vmatprep.subr.bf16.mxu0 %v3157
    %3402 = vmatpush1.bf16.msra.mxu0 %v3156
    %3403 = vmatprep.subr.bf16.mxu0 %v3161
    %3404 = vmatpush1.bf16.msra.mxu0 %v3160
    %3405 = vmatprep.subr.bf16.mxu0 %v3165
    %3406 = vmatpush1.bf16.msra.mxu0 %v3164
    %3407 = vmatprep.subr.bf16.mxu0 %v3169
    %3408 = vmatpush1.bf16.msra.mxu0 %v3168
    %3409 = vmatprep.subr.bf16.mxu0 %v3173
    %3410 = vmatpush1.bf16.msra.mxu0 %v3172
    %3411 = vmatprep.subr.bf16.mxu0 %v3177
    %3412 = vmatpush1.bf16.msra.mxu0 %v3176
    %3413 = vmatprep.subr.bf16.mxu0 %v3181
    %3414 = vmatpush1.bf16.msra.mxu0 %v3180
    %3415 = vmatprep.subr.bf16.mxu0 %v3185
    %3416 = vmatpush1.bf16.msra.mxu0 %v3184
    %3417 = vmatprep.subr.bf16.mxu0 %v3189
    %3418 = vmatpush1.bf16.msra.mxu0 %v3188
    %3419 = vmatprep.subr.bf16.mxu0 %v3193
    %3420 = vmatpush1.bf16.msra.mxu0 %v3192
    %3421 = vmatprep.subr.bf16.mxu0 %v3197
    %3422 = vmatpush1.bf16.msra.mxu0 %v3196
    %3423 = vmatprep.mubr.bf16.mxu0 %v3247
    %3424 = vmatmul.mubr.bf16.gmra.mrb[0].mxu0 %v3246
    %v3425 = vpop.f32.mrb[0].mxu0
    %v3426 = vadd.f32 0.0, %v3425
    %v3427 = vpop.f32.mrb[0].mxu0
    %v3428 = vadd.f32 0.0, %v3427
    %v3429 = vpop.f32.mrb[0].mxu0
    %v3430 = vadd.f32 0.0, %v3429
    %v3431 = vpop.f32.mrb[0].mxu0
    %v3432 = vadd.f32 0.0, %v3431
    %3433 = vmatprep.mubr.bf16.mxu0 %v3249
    %3434 = vmatmul.mubr.bf16.gmra.mrb[0].mxu0 %v3248
    %v3435 = vpop.f32.mrb[0].mxu0
    %v3436 = vadd.f32 0.0, %v3435
    %v3437 = vpop.f32.mrb[0].mxu0
    %v3438 = vadd.f32 0.0, %v3437
    %v3439 = vpop.f32.mrb[0].mxu0
    %v3440 = vadd.f32 0.0, %v3439
    %v3441 = vpop.f32.mrb[0].mxu0
    %v3442 = vadd.f32 0.0, %v3441
    %3443 = vmatprep.mubr.bf16.mxu0 %v3251
    %3444 = vmatmul.mubr.bf16.gmra.mrb[0].mxu0 %v3250
    %v3445 = vpop.f32.mrb[0].mxu0
    %v3446 = vadd.f32 0.0, %v3445
    %v3447 = vpop.f32.mrb[0].mxu0
    %v3448 = vadd.f32 0.0, %v3447
    %v3449 = vpop.f32.mrb[0].mxu0
    %v3450 = vadd.f32 0.0, %v3449
    %v3451 = vpop.f32.mrb[0].mxu0
    %v3452 = vadd.f32 0.0, %v3451
    %3453 = vmatprep.mubr.bf16.mxu0 %v3253
    %3454 = vmatmul.mubr.bf16.gmra.mrb[0].mxu0 %v3252
    %v3455 = vpop.f32.mrb[0].mxu0
    %v3456 = vadd.f32 0.0, %v3455
    %v3457 = vpop.f32.mrb[0].mxu0
    %v3458 = vadd.f32 0.0, %v3457
    %v3459 = vpop.f32.mrb[0].mxu0
    %v3460 = vadd.f32 0.0, %v3459
    %v3461 = vpop.f32.mrb[0].mxu0
    %v3462 = vadd.f32 0.0, %v3461
    %3463 = vmatprep.mubr.bf16.mxu0 %v3255
    %3464 = vmatmul.mubr.bf16.gmra.mrb[0].mxu0 %v3254
    %v3465 = vpop.f32.mrb[0].mxu0
    %v3466 = vadd.f32 0.0, %v3465
    %v3467 = vpop.f32.mrb[0].mxu0
    %v3468 = vadd.f32 0.0, %v3467
    %v3469 = vpop.f32.mrb[0].mxu0
    %v3470 = vadd.f32 0.0, %v3469
    %v3471 = vpop.f32.mrb[0].mxu0
    %v3472 = vadd.f32 0.0, %v3471
    %3473 = vmatprep.mubr.bf16.mxu0 %v3257
    %3474 = vmatmul.mubr.bf16.gmra.mrb[0].mxu0 %v3256
    %v3475 = vpop.f32.mrb[0].mxu0
    %v3476 = vadd.f32 0.0, %v3475
    %v3477 = vpop.f32.mrb[0].mxu0
    %v3478 = vadd.f32 0.0, %v3477
    %v3479 = vpop.f32.mrb[0].mxu0
    %v3480 = vadd.f32 0.0, %v3479
    %v3481 = vpop.f32.mrb[0].mxu0
    %v3482 = vadd.f32 0.0, %v3481
    %3483 = vmatprep.mubr.bf16.mxu0 %v3259
    %3484 = vmatmul.mubr.bf16.gmra.mrb[0].mxu0 %v3258
    %v3485 = vpop.f32.mrb[0].mxu0
    %v3486 = vadd.f32 0.0, %v3485
    %v3487 = vpop.f32.mrb[0].mxu0
    %v3488 = vadd.f32 0.0, %v3487
    %v3489 = vpop.f32.mrb[0].mxu0
    %v3490 = vadd.f32 0.0, %v3489
    %v3491 = vpop.f32.mrb[0].mxu0
    %v3492 = vadd.f32 0.0, %v3491
    %3493 = vmatprep.mubr.bf16.mxu0 %v3261
    %3494 = vmatmul.mubr.bf16.gmra.mrb[0].mxu0 %v3260
    %v3495 = vpop.f32.mrb[0].mxu0
    %v3496 = vadd.f32 0.0, %v3495
    %v3497 = vpop.f32.mrb[0].mxu0
    %v3498 = vadd.f32 0.0, %v3497
    %v3499 = vpop.f32.mrb[0].mxu0
    %v3500 = vadd.f32 0.0, %v3499
    %v3501 = vpop.f32.mrb[0].mxu0
    %v3502 = vadd.f32 0.0, %v3501
    %3503 = vdwg.mxu0
    %v3504 = vld [vmem:[#allocation2 + $0x100] sm:$0xff]
    %v3505 = vld [vmem:[#allocation2 + $0x108] sm:$0xff]
    %v3506 = vld [vmem:[#allocation2 + $0x110] sm:$0xff]
    %v3507 = vld [vmem:[#allocation2 + $0x118] sm:$0xff]
    %v3508 = vld [vmem:[#allocation2 + $0x120] sm:$0xff]
    %v3509 = vld [vmem:[#allocation2 + $0x128] sm:$0xff]
    %v3510 = vld [vmem:[#allocation2 + $0x130] sm:$0xff]
    %v3511 = vld [vmem:[#allocation2 + $0x138] sm:$0xff]
    %v3512 = vld [vmem:[#allocation2 + $0x140] sm:$0xff]
    %v3513 = vld [vmem:[#allocation2 + $0x148] sm:$0xff]
    %v3514 = vld [vmem:[#allocation2 + $0x150] sm:$0xff]
    %v3515 = vld [vmem:[#allocation2 + $0x158] sm:$0xff]
    %v3516 = vld [vmem:[#allocation2 + $0x160] sm:$0xff]
    %v3517 = vld [vmem:[#allocation2 + $0x168] sm:$0xff]
    %v3518 = vld [vmem:[#allocation2 + $0x170] sm:$0xff]
    %v3519 = vld [vmem:[#allocation2 + $0x178] sm:$0xff]
    %v3520 = vld [vmem:[#allocation2 + $0x180] sm:$0xff]
    %v3521 = vld [vmem:[#allocation2 + $0x188] sm:$0xff]
    %v3522 = vld [vmem:[#allocation2 + $0x190] sm:$0xff]
    %v3523 = vld [vmem:[#allocation2 + $0x198] sm:$0xff]
    %v3524 = vld [vmem:[#allocation2 + $0x1a0] sm:$0xff]
    %v3525 = vld [vmem:[#allocation2 + $0x1a8] sm:$0xff]
    %v3526 = vld [vmem:[#allocation2 + $0x1b0] sm:$0xff]
    %v3527 = vld [vmem:[#allocation2 + $0x1b8] sm:$0xff]
    %v3528 = vld [vmem:[#allocation2 + $0x1c0] sm:$0xff]
    %v3529 = vld [vmem:[#allocation2 + $0x1c8] sm:$0xff]
    %v3530 = vld [vmem:[#allocation2 + $0x1d0] sm:$0xff]
    %v3531 = vld [vmem:[#allocation2 + $0x1d8] sm:$0xff]
    %v3532 = vld [vmem:[#allocation2 + $0x1e0] sm:$0xff]
    %v3533 = vld [vmem:[#allocation2 + $0x1e8] sm:$0xff]
    %v3534 = vld [vmem:[#allocation2 + $0x1f0] sm:$0xff]
    %v3535 = vld [vmem:[#allocation2 + $0x1f8] sm:$0xff]
    %v3536 = vld [vmem:[#allocation2 + $0x200] sm:$0xff]
    %v3537 = vld [vmem:[#allocation2 + $0x208] sm:$0xff]
    %v3538 = vld [vmem:[#allocation2 + $0x210] sm:$0xff]
    %v3539 = vld [vmem:[#allocation2 + $0x218] sm:$0xff]
    %v3540 = vld [vmem:[#allocation2 + $0x220] sm:$0xff]
    %v3541 = vld [vmem:[#allocation2 + $0x228] sm:$0xff]
    %v3542 = vld [vmem:[#allocation2 + $0x230] sm:$0xff]
    %v3543 = vld [vmem:[#allocation2 + $0x238] sm:$0xff]
    %v3544 = vld [vmem:[#allocation2 + $0x240] sm:$0xff]
    %v3545 = vld [vmem:[#allocation2 + $0x248] sm:$0xff]
    %v3546 = vld [vmem:[#allocation2 + $0x250] sm:$0xff]
    %v3547 = vld [vmem:[#allocation2 + $0x258] sm:$0xff]
    %v3548 = vld [vmem:[#allocation2 + $0x260] sm:$0xff]
    %v3549 = vld [vmem:[#allocation2 + $0x268] sm:$0xff]
    %v3550 = vld [vmem:[#allocation2 + $0x270] sm:$0xff]
    %v3551 = vld [vmem:[#allocation2 + $0x278] sm:$0xff]
    %v3552 = vld [vmem:[#allocation2 + $0x280] sm:$0xff]
    %v3553 = vld [vmem:[#allocation2 + $0x288] sm:$0xff]
    %v3554 = vld [vmem:[#allocation2 + $0x290] sm:$0xff]
    %v3555 = vld [vmem:[#allocation2 + $0x298] sm:$0xff]
    %v3556 = vld [vmem:[#allocation2 + $0x2a0] sm:$0xff]
    %v3557 = vld [vmem:[#allocation2 + $0x2a8] sm:$0xff]
    %v3558 = vld [vmem:[#allocation2 + $0x2b0] sm:$0xff]
    %v3559 = vld [vmem:[#allocation2 + $0x2b8] sm:$0xff]
    %v3560 = vld [vmem:[#allocation2 + $0x2c0] sm:$0xff]
    %v3561 = vld [vmem:[#allocation2 + $0x2c8] sm:$0xff]
    %v3562 = vld [vmem:[#allocation2 + $0x2d0] sm:$0xff]
    %v3563 = vld [vmem:[#allocation2 + $0x2d8] sm:$0xff]
    %v3564 = vld [vmem:[#allocation2 + $0x2e0] sm:$0xff]
    %v3565 = vld [vmem:[#allocation2 + $0x2e8] sm:$0xff]
    %v3566 = vld [vmem:[#allocation2 + $0x2f0] sm:$0xff]
    %v3567 = vld [vmem:[#allocation2 + $0x2f8] sm:$0xff]
    %3568 = vmatprep.subr.bf16.mxu0 %v3505
    %3569 = vmatpush1.bf16.msra.mxu0 %v3504
    %3570 = vmatprep.subr.bf16.mxu0 %v3509
    %3571 = vmatpush1.bf16.msra.mxu0 %v3508
    %3572 = vmatprep.subr.bf16.mxu0 %v3513
    %3573 = vmatpush1.bf16.msra.mxu0 %v3512
    %3574 = vmatprep.subr.bf16.mxu0 %v3517
    %3575 = vmatpush1.bf16.msra.mxu0 %v3516
    %3576 = vmatprep.subr.bf16.mxu0 %v3521
    %3577 = vmatpush1.bf16.msra.mxu0 %v3520
    %3578 = vmatprep.subr.bf16.mxu0 %v3525
    %3579 = vmatpush1.bf16.msra.mxu0 %v3524
    %3580 = vmatprep.subr.bf16.mxu0 %v3529
    %3581 = vmatpush1.bf16.msra.mxu0 %v3528
    %3582 = vmatprep.subr.bf16.mxu0 %v3533
    %3583 = vmatpush1.bf16.msra.mxu0 %v3532
    %3584 = vmatprep.subr.bf16.mxu0 %v3537
    %3585 = vmatpush1.bf16.msra.mxu0 %v3536
    %3586 = vmatprep.subr.bf16.mxu0 %v3541
    %3587 = vmatpush1.bf16.msra.mxu0 %v3540
    %3588 = vmatprep.subr.bf16.mxu0 %v3545
    %3589 = vmatpush1.bf16.msra.mxu0 %v3544
    %3590 = vmatprep.subr.bf16.mxu0 %v3549
    %3591 = vmatpush1.bf16.msra.mxu0 %v3548
    %3592 = vmatprep.subr.bf16.mxu0 %v3553
    %3593 = vmatpush1.bf16.msra.mxu0 %v3552
    %3594 = vmatprep.subr.bf16.mxu0 %v3557
    %3595 = vmatpush1.bf16.msra.mxu0 %v3556
    %3596 = vmatprep.subr.bf16.mxu0 %v3561
    %3597 = vmatpush1.bf16.msra.mxu0 %v3560
    %3598 = vmatprep.subr.bf16.mxu0 %v3565
    %3599 = vmatpush1.bf16.msra.mxu0 %v3564
    %3600 = vmatprep.mubr.bf16.mxu0 %v3247
    %3601 = vmatmul.mubr.bf16.gmra.mrb[0].mxu0 %v3246
    %v3602 = vpop.f32.mrb[0].mxu0
    %v3603 = vadd.f32 0.0, %v3602
    %v3604 = vpop.f32.mrb[0].mxu0
    %v3605 = vadd.f32 0.0, %v3604
    %v3606 = vpop.f32.mrb[0].mxu0
    %v3607 = vadd.f32 0.0, %v3606
    %v3608 = vpop.f32.mrb[0].mxu0
    %v3609 = vadd.f32 0.0, %v3608
    %3610 = vmatprep.mubr.bf16.mxu0 %v3249
    %3611 = vmatmul.mubr.bf16.gmra.mrb[0].mxu0 %v3248
    %v3612 = vpop.f32.mrb[0].mxu0
    %v3613 = vadd.f32 0.0, %v3612
    %v3614 = vpop.f32.mrb[0].mxu0
    %v3615 = vadd.f32 0.0, %v3614
    %v3616 = vpop.f32.mrb[0].mxu0
    %v3617 = vadd.f32 0.0, %v3616
    %v3618 = vpop.f32.mrb[0].mxu0
    %v3619 = vadd.f32 0.0, %v3618
    %3620 = vmatprep.mubr.bf16.mxu0 %v3251
    %3621 = vmatmul.mubr.bf16.gmra.mrb[0].mxu0 %v3250
    %v3622 = vpop.f32.mrb[0].mxu0
    %v3623 = vadd.f32 0.0, %v3622
    %v3624 = vpop.f32.mrb[0].mxu0
    %v3625 = vadd.f32 0.0, %v3624
    %v3626 = vpop.f32.mrb[0].mxu0
    %v3627 = vadd.f32 0.0, %v3626
    %v3628 = vpop.f32.mrb[0].mxu0
    %v3629 = vadd.f32 0.0, %v3628
    %3630 = vmatprep.mubr.bf16.mxu0 %v3253
    %3631 = vmatmul.mubr.bf16.gmra.mrb[0].mxu0 %v3252
    %v3632 = vpop.f32.mrb[0].mxu0
    %v3633 = vadd.f32 0.0, %v3632
    %v3634 = vpop.f32.mrb[0].mxu0
    %v3635 = vadd.f32 0.0, %v3634
    %v3636 = vpop.f32.mrb[0].mxu0
    %v3637 = vadd.f32 0.0, %v3636
    %v3638 = vpop.f32.mrb[0].mxu0
    %v3639 = vadd.f32 0.0, %v3638
    %3640 = vmatprep.mubr.bf16.mxu0 %v3255
    %3641 = vmatmul.mubr.bf16.gmra.mrb[0].mxu0 %v3254
    %v3642 = vpop.f32.mrb[0].mxu0
    %v3643 = vadd.f32 0.0, %v3642
    %v3644 = vpop.f32.mrb[0].mxu0
    %v3645 = vadd.f32 0.0, %v3644
    %v3646 = vpop.f32.mrb[0].mxu0
    %v3647 = vadd.f32 0.0, %v3646
    %v3648 = vpop.f32.mrb[0].mxu0
    %v3649 = vadd.f32 0.0, %v3648
    %3650 = vmatprep.mubr.bf16.mxu0 %v3257
    %3651 = vmatmul.mubr.bf16.gmra.mrb[0].mxu0 %v3256
    %v3652 = vpop.f32.mrb[0].mxu0
    %v3653 = vadd.f32 0.0, %v3652
    %v3654 = vpop.f32.mrb[0].mxu0
    %v3655 = vadd.f32 0.0, %v3654
    %v3656 = vpop.f32.mrb[0].mxu0
    %v3657 = vadd.f32 0.0, %v3656
    %v3658 = vpop.f32.mrb[0].mxu0
    %v3659 = vadd.f32 0.0, %v3658
    %3660 = vmatprep.mubr.bf16.mxu0 %v3259
    %3661 = vmatmul.mubr.bf16.gmra.mrb[0].mxu0 %v3258
    %v3662 = vpop.f32.mrb[0].mxu0
    %v3663 = vadd.f32 0.0, %v3662
    %v3664 = vpop.f32.mrb[0].mxu0
    %v3665 = vadd.f32 0.0, %v3664
    %v3666 = vpop.f32.mrb[0].mxu0
    %v3667 = vadd.f32 0.0, %v3666
    %v3668 = vpop.f32.mrb[0].mxu0
    %v3669 = vadd.f32 0.0, %v3668
    %3670 = vmatprep.mubr.bf16.mxu0 %v3261
    %3671 = vmatmul.mubr.bf16.gmra.mrb[0].mxu0 %v3260
    %v3672 = vpop.f32.mrb[0].mxu0
    %v3673 = vadd.f32 0.0, %v3672
    %v3674 = vpop.f32.mrb[0].mxu0
    %v3675 = vadd.f32 0.0, %v3674
    %v3676 = vpop.f32.mrb[0].mxu0
    %v3677 = vadd.f32 0.0, %v3676
    %v3678 = vpop.f32.mrb[0].mxu0
    %v3679 = vadd.f32 0.0, %v3678
    %3680 = vdwg.mxu0
    %3681 = vmatprep.subr.bf16.mxu0 %v3507
    %3682 = vmatpush1.bf16.msra.mxu0 %v3506
    %3683 = vmatprep.subr.bf16.mxu0 %v3511
    %3684 = vmatpush1.bf16.msra.mxu0 %v3510
    %3685 = vmatprep.subr.bf16.mxu0 %v3515
    %3686 = vmatpush1.bf16.msra.mxu0 %v3514
    %3687 = vmatprep.subr.bf16.mxu0 %v3519
    %3688 = vmatpush1.bf16.msra.mxu0 %v3518
    %3689 = vmatprep.subr.bf16.mxu0 %v3523
    %3690 = vmatpush1.bf16.msra.mxu0 %v3522
    %3691 = vmatprep.subr.bf16.mxu0 %v3527
    %3692 = vmatpush1.bf16.msra.mxu0 %v3526
    %3693 = vmatprep.subr.bf16.mxu0 %v3531
    %3694 = vmatpush1.bf16.msra.mxu0 %v3530
    %3695 = vmatprep.subr.bf16.mxu0 %v3535
    %3696 = vmatpush1.bf16.msra.mxu0 %v3534
    %3697 = vmatprep.subr.bf16.mxu0 %v3539
    %3698 = vmatpush1.bf16.msra.mxu0 %v3538
    %3699 = vmatprep.subr.bf16.mxu0 %v3543
    %3700 = vmatpush1.bf16.msra.mxu0 %v3542
    %3701 = vmatprep.subr.bf16.mxu0 %v3547
    %3702 = vmatpush1.bf16.msra.mxu0 %v3546
    %3703 = vmatprep.subr.bf16.mxu0 %v3551
    %3704 = vmatpush1.bf16.msra.mxu0 %v3550
    %3705 = vmatprep.subr.bf16.mxu0 %v3555
    %3706 = vmatpush1.bf16.msra.mxu0 %v3554
    %3707 = vmatprep.subr.bf16.mxu0 %v3559
    %3708 = vmatpush1.bf16.msra.mxu0 %v3558
    %3709 = vmatprep.subr.bf16.mxu0 %v3563
    %3710 = vmatpush1.bf16.msra.mxu0 %v3562
    %3711 = vmatprep.subr.bf16.mxu0 %v3567
    %3712 = vmatpush1.bf16.msra.mxu0 %v3566
    %3713 = vmatprep.mubr.bf16.mxu0 %v3247
    %3714 = vmatmul.mubr.bf16.gmra.mrb[0].mxu0 %v3246
    %v3715 = vpop.f32.mrb[0].mxu0
    %v3716 = vadd.f32 0.0, %v3715
    %v3717 = vpop.f32.mrb[0].mxu0
    %v3718 = vadd.f32 0.0, %v3717
    %v3719 = vpop.f32.mrb[0].mxu0
    %v3720 = vadd.f32 0.0, %v3719
    %v3721 = vpop.f32.mrb[0].mxu0
    %v3722 = vadd.f32 0.0, %v3721
    %3723 = vmatprep.mubr.bf16.mxu0 %v3249
    %3724 = vmatmul.mubr.bf16.gmra.mrb[0].mxu0 %v3248
    %v3725 = vpop.f32.mrb[0].mxu0
    %v3726 = vadd.f32 0.0, %v3725
    %v3727 = vpop.f32.mrb[0].mxu0
    %v3728 = vadd.f32 0.0, %v3727
    %v3729 = vpop.f32.mrb[0].mxu0
    %v3730 = vadd.f32 0.0, %v3729
    %v3731 = vpop.f32.mrb[0].mxu0
    %v3732 = vadd.f32 0.0, %v3731
    %3733 = vmatprep.mubr.bf16.mxu0 %v3251
    %3734 = vmatmul.mubr.bf16.gmra.mrb[0].mxu0 %v3250
    %v3735 = vpop.f32.mrb[0].mxu0
    %v3736 = vadd.f32 0.0, %v3735
    %v3737 = vpop.f32.mrb[0].mxu0
    %v3738 = vadd.f32 0.0, %v3737
    %v3739 = vpop.f32.mrb[0].mxu0
    %v3740 = vadd.f32 0.0, %v3739
    %v3741 = vpop.f32.mrb[0].mxu0
    %v3742 = vadd.f32 0.0, %v3741
    %3743 = vmatprep.mubr.bf16.mxu0 %v3253
    %3744 = vmatmul.mubr.bf16.gmra.mrb[0].mxu0 %v3252
    %v3745 = vpop.f32.mrb[0].mxu0
    %v3746 = vadd.f32 0.0, %v3745
    %v3747 = vpop.f32.mrb[0].mxu0
    %v3748 = vadd.f32 0.0, %v3747
    %v3749 = vpop.f32.mrb[0].mxu0
    %v3750 = vadd.f32 0.0, %v3749
    %v3751 = vpop.f32.mrb[0].mxu0
    %v3752 = vadd.f32 0.0, %v3751
    %3753 = vmatprep.mubr.bf16.mxu0 %v3255
    %3754 = vmatmul.mubr.bf16.gmra.mrb[0].mxu0 %v3254
    %v3755 = vpop.f32.mrb[0].mxu0
    %v3756 = vadd.f32 0.0, %v3755
    %v3757 = vpop.f32.mrb[0].mxu0
    %v3758 = vadd.f32 0.0, %v3757
    %v3759 = vpop.f32.mrb[0].mxu0
    %v3760 = vadd.f32 0.0, %v3759
    %v3761 = vpop.f32.mrb[0].mxu0
    %v3762 = vadd.f32 0.0, %v3761
    %3763 = vmatprep.mubr.bf16.mxu0 %v3257
    %3764 = vmatmul.mubr.bf16.gmra.mrb[0].mxu0 %v3256
    %v3765 = vpop.f32.mrb[0].mxu0
    %v3766 = vadd.f32 0.0, %v3765
    %v3767 = vpop.f32.mrb[0].mxu0
    %v3768 = vadd.f32 0.0, %v3767
    %v3769 = vpop.f32.mrb[0].mxu0
    %v3770 = vadd.f32 0.0, %v3769
    %v3771 = vpop.f32.mrb[0].mxu0
    %v3772 = vadd.f32 0.0, %v3771
    %3773 = vmatprep.mubr.bf16.mxu0 %v3259
    %3774 = vmatmul.mubr.bf16.gmra.mrb[0].mxu0 %v3258
    %v3775 = vpop.f32.mrb[0].mxu0
    %v3776 = vadd.f32 0.0, %v3775
    %v3777 = vpop.f32.mrb[0].mxu0
    %v3778 = vadd.f32 0.0, %v3777
    %v3779 = vpop.f32.mrb[0].mxu0
    %v3780 = vadd.f32 0.0, %v3779
    %v3781 = vpop.f32.mrb[0].mxu0
    %v3782 = vadd.f32 0.0, %v3781
    %3783 = vmatprep.mubr.bf16.mxu0 %v3261
    %3784 = vmatmul.mubr.bf16.gmra.mrb[0].mxu0 %v3260
    %v3785 = vpop.f32.mrb[0].mxu0
    %v3786 = vadd.f32 0.0, %v3785
    %v3787 = vpop.f32.mrb[0].mxu0
    %v3788 = vadd.f32 0.0, %v3787
    %v3789 = vpop.f32.mrb[0].mxu0
    %v3790 = vadd.f32 0.0, %v3789
    %v3791 = vpop.f32.mrb[0].mxu0
    %v3792 = vadd.f32 0.0, %v3791
    %3793 = vdwg.mxu0
    %v3794 = vmax.f32 %v3313, %v3603
    %v3795 = vmax.f32 %v3315, %v3605
    %v3796 = vmax.f32 %v3426, %v3716
    %v3797 = vmax.f32 %v3428, %v3718
    %v3798 = vmax.f32 %v3317, %v3607
    %v3799 = vmax.f32 %v3319, %v3609
    %v3800 = vmax.f32 %v3430, %v3720
    %v3801 = vmax.f32 %v3432, %v3722
    %v3802 = vmax.f32 %v3323, %v3613
    %v3803 = vmax.f32 %v3325, %v3615
    %v3804 = vmax.f32 %v3436, %v3726
    %v3805 = vmax.f32 %v3438, %v3728
    %v3806 = vmax.f32 %v3327, %v3617
    %v3807 = vmax.f32 %v3329, %v3619
    %v3808 = vmax.f32 %v3440, %v3730
    %v3809 = vmax.f32 %v3442, %v3732
    %v3810 = vmax.f32 %v3333, %v3623
    %v3811 = vmax.f32 %v3335, %v3625
    %v3812 = vmax.f32 %v3446, %v3736
    %v3813 = vmax.f32 %v3448, %v3738
    %v3814 = vmax.f32 %v3337, %v3627
    %v3815 = vmax.f32 %v3339, %v3629
    %v3816 = vmax.f32 %v3450, %v3740
    %v3817 = vmax.f32 %v3452, %v3742
    %v3818 = vmax.f32 %v3343, %v3633
    %v3819 = vmax.f32 %v3345, %v3635
    %v3820 = vmax.f32 %v3456, %v3746
    %v3821 = vmax.f32 %v3458, %v3748
    %v3822 = vmax.f32 %v3347, %v3637
    %v3823 = vmax.f32 %v3349, %v3639
    %v3824 = vmax.f32 %v3460, %v3750
    %v3825 = vmax.f32 %v3462, %v3752
    %v3826 = vmax.f32 %v3353, %v3643
    %v3827 = vmax.f32 %v3355, %v3645
    %v3828 = vmax.f32 %v3466, %v3756
    %v3829 = vmax.f32 %v3468, %v3758
    %v3830 = vmax.f32 %v3357, %v3647
    %v3831 = vmax.f32 %v3359, %v3649
    %v3832 = vmax.f32 %v3470, %v3760
    %v3833 = vmax.f32 %v3472, %v3762
    %v3834 = vmax.f32 %v3363, %v3653
    %v3835 = vmax.f32 %v3365, %v3655
    %v3836 = vmax.f32 %v3476, %v3766
    %v3837 = vmax.f32 %v3478, %v3768
    %v3838 = vmax.f32 %v3367, %v3657
    %v3839 = vmax.f32 %v3369, %v3659
    %v3840 = vmax.f32 %v3480, %v3770
    %v3841 = vmax.f32 %v3482, %v3772
    %v3842 = vmax.f32 %v3373, %v3663
    %v3843 = vmax.f32 %v3375, %v3665
    %v3844 = vmax.f32 %v3486, %v3776
    %v3845 = vmax.f32 %v3488, %v3778
    %v3846 = vmax.f32 %v3377, %v3667
    %v3847 = vmax.f32 %v3379, %v3669
    %v3848 = vmax.f32 %v3490, %v3780
    %v3849 = vmax.f32 %v3492, %v3782
    %v3850 = vmax.f32 %v3383, %v3673
    %v3851 = vmax.f32 %v3385, %v3675
    %v3852 = vmax.f32 %v3496, %v3786
    %v3853 = vmax.f32 %v3498, %v3788
    %v3854 = vmax.f32 %v3387, %v3677
    %v3855 = vmax.f32 %v3389, %v3679
    %v3856 = vmax.f32 %v3500, %v3790
    %v3857 = vmax.f32 %v3502, %v3792
    %v3858 = vld [vmem:[%s4] sm:$0xff]
    %v3859 = vld [vmem:[%s4 + $0x8] sm:$0xff]
    %v3860 = vld [vmem:[%s4 + $0x10] sm:$0xff]
    %v3861 = vld [vmem:[%s4 + $0x18] sm:$0xff]
    %v3862 = vld [vmem:[%s4 + $0x20] sm:$0xff]
    %v3863 = vld [vmem:[%s4 + $0x28] sm:$0xff]
    %v3864 = vld [vmem:[%s4 + $0x30] sm:$0xff]
    %v3865 = vld [vmem:[%s4 + $0x38] sm:$0xff]
    %v3866 = vld [vmem:[%s4 + $0x40] sm:$0xff]
    %v3867 = vld [vmem:[%s4 + $0x48] sm:$0xff]
    %v3868 = vld [vmem:[%s4 + $0x50] sm:$0xff]
    %v3869 = vld [vmem:[%s4 + $0x58] sm:$0xff]
    %v3870 = vld [vmem:[%s4 + $0x60] sm:$0xff]
    %v3871 = vld [vmem:[%s4 + $0x68] sm:$0xff]
    %v3872 = vld [vmem:[%s4 + $0x70] sm:$0xff]
    %v3873 = vld [vmem:[%s4 + $0x78] sm:$0xff]
    %3875 = vset.pattern.permute.xlu0 0
    %3876 = vperm.xlu0 %3875, %v3858
    %v3877 = vpop.permute.xlu0 %3876
    %3880 = vset.pattern.permute.xlu0 0
    %3881 = vperm.xlu0 %3880, %v3859
    %v3882 = vpop.permute.xlu0 %3881
    %3885 = vset.pattern.permute.xlu0 0
    %3886 = vperm.xlu0 %3885, %v3860
    %v3887 = vpop.permute.xlu0 %3886
    %3890 = vset.pattern.permute.xlu0 0
    %3891 = vperm.xlu0 %3890, %v3861
    %v3892 = vpop.permute.xlu0 %3891
    %3895 = vset.pattern.permute.xlu0 0
    %3896 = vperm.xlu0 %3895, %v3862
    %v3897 = vpop.permute.xlu0 %3896
    %3900 = vset.pattern.permute.xlu0 0
    %3901 = vperm.xlu0 %3900, %v3863
    %v3902 = vpop.permute.xlu0 %3901
    %3905 = vset.pattern.permute.xlu0 0
    %3906 = vperm.xlu0 %3905, %v3864
    %v3907 = vpop.permute.xlu0 %3906
    %3910 = vset.pattern.permute.xlu0 0
    %3911 = vperm.xlu0 %3910, %v3865
    %v3912 = vpop.permute.xlu0 %3911
    %3915 = vset.pattern.permute.xlu0 0
    %3916 = vperm.xlu0 %3915, %v3866
    %v3917 = vpop.permute.xlu0 %3916
    %3920 = vset.pattern.permute.xlu0 0
    %3921 = vperm.xlu0 %3920, %v3867
    %v3922 = vpop.permute.xlu0 %3921
    %3925 = vset.pattern.permute.xlu0 0
    %3926 = vperm.xlu0 %3925, %v3868
    %v3927 = vpop.permute.xlu0 %3926
    %3930 = vset.pattern.permute.xlu0 0
    %3931 = vperm.xlu0 %3930, %v3869
    %v3932 = vpop.permute.xlu0 %3931
    %3935 = vset.pattern.permute.xlu0 0
    %3936 = vperm.xlu0 %3935, %v3870
    %v3937 = vpop.permute.xlu0 %3936
    %3940 = vset.pattern.permute.xlu0 0
    %3941 = vperm.xlu0 %3940, %v3871
    %v3942 = vpop.permute.xlu0 %3941
    %3945 = vset.pattern.permute.xlu0 0
    %3946 = vperm.xlu0 %3945, %v3872
    %v3947 = vpop.permute.xlu0 %3946
    %3950 = vset.pattern.permute.xlu0 0
    %3951 = vperm.xlu0 %3950, %v3873
    %v3952 = vpop.permute.xlu0 %3951
    %v3954 = vadd.f32 %v3794, %v3877
    %v3955 = vadd.f32 %v3795, %v3877
    %v3956 = vadd.f32 %v3796, %v3877
    %v3957 = vadd.f32 %v3797, %v3877
    %v3958 = vadd.f32 %v3798, %v3882
    %v3959 = vadd.f32 %v3799, %v3882
    %v3960 = vadd.f32 %v3800, %v3882
    %v3961 = vadd.f32 %v3801, %v3882
    %v3962 = vadd.f32 %v3802, %v3887
    %v3963 = vadd.f32 %v3803, %v3887
    %v3964 = vadd.f32 %v3804, %v3887
    %v3965 = vadd.f32 %v3805, %v3887
    %v3966 = vadd.f32 %v3806, %v3892
    %v3967 = vadd.f32 %v3807, %v3892
    %v3968 = vadd.f32 %v3808, %v3892
    %v3969 = vadd.f32 %v3809, %v3892
    %v3970 = vadd.f32 %v3810, %v3897
    %v3971 = vadd.f32 %v3811, %v3897
    %v3972 = vadd.f32 %v3812, %v3897
    %v3973 = vadd.f32 %v3813, %v3897
    %v3974 = vadd.f32 %v3814, %v3902
    %v3975 = vadd.f32 %v3815, %v3902
    %v3976 = vadd.f32 %v3816, %v3902
    %v3977 = vadd.f32 %v3817, %v3902
    %v3978 = vadd.f32 %v3818, %v3907
    %v3979 = vadd.f32 %v3819, %v3907
    %v3980 = vadd.f32 %v3820, %v3907
    %v3981 = vadd.f32 %v3821, %v3907
    %v3982 = vadd.f32 %v3822, %v3912
    %v3983 = vadd.f32 %v3823, %v3912
    %v3984 = vadd.f32 %v3824, %v3912
    %v3985 = vadd.f32 %v3825, %v3912
    %v3986 = vadd.f32 %v3826, %v3917
    %v3987 = vadd.f32 %v3827, %v3917
    %v3988 = vadd.f32 %v3828, %v3917
    %v3989 = vadd.f32 %v3829, %v3917
    %v3990 = vadd.f32 %v3830, %v3922
    %v3991 = vadd.f32 %v3831, %v3922
    %v3992 = vadd.f32 %v3832, %v3922
    %v3993 = vadd.f32 %v3833, %v3922
    %v3994 = vadd.f32 %v3834, %v3927
    %v3995 = vadd.f32 %v3835, %v3927
    %v3996 = vadd.f32 %v3836, %v3927
    %v3997 = vadd.f32 %v3837, %v3927
    %v3998 = vadd.f32 %v3838, %v3932
    %v3999 = vadd.f32 %v3839, %v3932
    %v4000 = vadd.f32 %v3840, %v3932
    %v4001 = vadd.f32 %v3841, %v3932
    %v4002 = vadd.f32 %v3842, %v3937
    %v4003 = vadd.f32 %v3843, %v3937
    %v4004 = vadd.f32 %v3844, %v3937
    %v4005 = vadd.f32 %v3845, %v3937
    %v4006 = vadd.f32 %v3846, %v3942
    %v4007 = vadd.f32 %v3847, %v3942
    %v4008 = vadd.f32 %v3848, %v3942
    %v4009 = vadd.f32 %v3849, %v3942
    %v4010 = vadd.f32 %v3850, %v3947
    %v4011 = vadd.f32 %v3851, %v3947
    %v4012 = vadd.f32 %v3852, %v3947
    %v4013 = vadd.f32 %v3853, %v3947
    %v4014 = vadd.f32 %v3854, %v3952
    %v4015 = vadd.f32 %v3855, %v3952
    %v4016 = vadd.f32 %v3856, %v3952
    %v4017 = vadd.f32 %v3857, %v3952
    %v4018 = vmax.f32 %v3954, 0.0
    %v4019 = vmax.f32 %v3955, 0.0
    %v4020 = vmax.f32 %v3956, 0.0
    %v4021 = vmax.f32 %v3957, 0.0
    %v4022 = vmax.f32 %v3958, 0.0
    %v4023 = vmax.f32 %v3959, 0.0
    %v4024 = vmax.f32 %v3960, 0.0
    %v4025 = vmax.f32 %v3961, 0.0
    %v4026 = vmax.f32 %v3962, 0.0
    %v4027 = vmax.f32 %v3963, 0.0
    %v4028 = vmax.f32 %v3964, 0.0
    %v4029 = vmax.f32 %v3965, 0.0
    %v4030 = vmax.f32 %v3966, 0.0
    %v4031 = vmax.f32 %v3967, 0.0
    %v4032 = vmax.f32 %v3968, 0.0
    %v4033 = vmax.f32 %v3969, 0.0
    %v4034 = vmax.f32 %v3970, 0.0
    %v4035 = vmax.f32 %v3971, 0.0
    %v4036 = vmax.f32 %v3972, 0.0
    %v4037 = vmax.f32 %v3973, 0.0
    %v4038 = vmax.f32 %v3974, 0.0
    %v4039 = vmax.f32 %v3975, 0.0
    %v4040 = vmax.f32 %v3976, 0.0
    %v4041 = vmax.f32 %v3977, 0.0
    %v4042 = vmax.f32 %v3978, 0.0
    %v4043 = vmax.f32 %v3979, 0.0
    %v4044 = vmax.f32 %v3980, 0.0
    %v4045 = vmax.f32 %v3981, 0.0
    %v4046 = vmax.f32 %v3982, 0.0
    %v4047 = vmax.f32 %v3983, 0.0
    %v4048 = vmax.f32 %v3984, 0.0
    %v4049 = vmax.f32 %v3985, 0.0
    %v4050 = vmax.f32 %v3986, 0.0
    %v4051 = vmax.f32 %v3987, 0.0
    %v4052 = vmax.f32 %v3988, 0.0
    %v4053 = vmax.f32 %v3989, 0.0
    %v4054 = vmax.f32 %v3990, 0.0
    %v4055 = vmax.f32 %v3991, 0.0
    %v4056 = vmax.f32 %v3992, 0.0
    %v4057 = vmax.f32 %v3993, 0.0
    %v4058 = vmax.f32 %v3994, 0.0
    %v4059 = vmax.f32 %v3995, 0.0
    %v4060 = vmax.f32 %v3996, 0.0
    %v4061 = vmax.f32 %v3997, 0.0
    %v4062 = vmax.f32 %v3998, 0.0
    %v4063 = vmax.f32 %v3999, 0.0
    %v4064 = vmax.f32 %v4000, 0.0
    %v4065 = vmax.f32 %v4001, 0.0
    %v4066 = vmax.f32 %v4002, 0.0
    %v4067 = vmax.f32 %v4003, 0.0
    %v4068 = vmax.f32 %v4004, 0.0
    %v4069 = vmax.f32 %v4005, 0.0
    %v4070 = vmax.f32 %v4006, 0.0
    %v4071 = vmax.f32 %v4007, 0.0
    %v4072 = vmax.f32 %v4008, 0.0
    %v4073 = vmax.f32 %v4009, 0.0
    %v4074 = vmax.f32 %v4010, 0.0
    %v4075 = vmax.f32 %v4011, 0.0
    %v4076 = vmax.f32 %v4012, 0.0
    %v4077 = vmax.f32 %v4013, 0.0
    %v4078 = vmax.f32 %v4014, 0.0
    %v4079 = vmax.f32 %v4015, 0.0
    %v4080 = vmax.f32 %v4016, 0.0
    %v4081 = vmax.f32 %v4017, 0.0
    %v4082 = vld [vmem:[#allocation7] sm:$0xff]
    %v4083 = vld [vmem:[#allocation7 + $0x8] sm:$0xff]
    %v4084 = vld [vmem:[#allocation7 + $0x10] sm:$0xff]
    %v4085 = vld [vmem:[#allocation7 + $0x18] sm:$0xff]
    %v4086 = vld [vmem:[#allocation7 + $0x20] sm:$0xff]
    %v4087 = vld [vmem:[#allocation7 + $0x28] sm:$0xff]
    %v4088 = vld [vmem:[#allocation7 + $0x30] sm:$0xff]
    %v4089 = vld [vmem:[#allocation7 + $0x38] sm:$0xff]
    %v4090 = vld [vmem:[#allocation7 + $0x40] sm:$0xff]
    %v4091 = vld [vmem:[#allocation7 + $0x48] sm:$0xff]
    %v4092 = vld [vmem:[#allocation7 + $0x50] sm:$0xff]
    %v4093 = vld [vmem:[#allocation7 + $0x58] sm:$0xff]
    %v4094 = vld [vmem:[#allocation7 + $0x60] sm:$0xff]
    %v4095 = vld [vmem:[#allocation7 + $0x68] sm:$0xff]
    %v4096 = vld [vmem:[#allocation7 + $0x70] sm:$0xff]
    %v4097 = vld [vmem:[#allocation7 + $0x78] sm:$0xff]
    %v4098 = vld [vmem:[#allocation7 + $0x80] sm:$0xff]
    %v4099 = vld [vmem:[#allocation7 + $0x88] sm:$0xff]
    %v4100 = vld [vmem:[#allocation7 + $0x90] sm:$0xff]
    %v4101 = vld [vmem:[#allocation7 + $0x98] sm:$0xff]
    %v4102 = vld [vmem:[#allocation7 + $0xa0] sm:$0xff]
    %v4103 = vld [vmem:[#allocation7 + $0xa8] sm:$0xff]
    %v4104 = vld [vmem:[#allocation7 + $0xb0] sm:$0xff]
    %v4105 = vld [vmem:[#allocation7 + $0xb8] sm:$0xff]
    %v4106 = vld [vmem:[#allocation7 + $0xc0] sm:$0xff]
    %v4107 = vld [vmem:[#allocation7 + $0xc8] sm:$0xff]
    %v4108 = vld [vmem:[#allocation7 + $0xd0] sm:$0xff]
    %v4109 = vld [vmem:[#allocation7 + $0xd8] sm:$0xff]
    %v4110 = vld [vmem:[#allocation7 + $0xe0] sm:$0xff]
    %v4111 = vld [vmem:[#allocation7 + $0xe8] sm:$0xff]
    %v4112 = vld [vmem:[#allocation7 + $0xf0] sm:$0xff]
    %v4113 = vld [vmem:[#allocation7 + $0xf8] sm:$0xff]
    %v4114 = vld [vmem:[#allocation7 + $0x100] sm:$0xff]
    %v4115 = vld [vmem:[#allocation7 + $0x108] sm:$0xff]
    %v4116 = vld [vmem:[#allocation7 + $0x110] sm:$0xff]
    %v4117 = vld [vmem:[#allocation7 + $0x118] sm:$0xff]
    %v4118 = vld [vmem:[#allocation7 + $0x120] sm:$0xff]
    %v4119 = vld [vmem:[#allocation7 + $0x128] sm:$0xff]
    %v4120 = vld [vmem:[#allocation7 + $0x130] sm:$0xff]
    %v4121 = vld [vmem:[#allocation7 + $0x138] sm:$0xff]
    %v4122 = vld [vmem:[#allocation7 + $0x140] sm:$0xff]
    %v4123 = vld [vmem:[#allocation7 + $0x148] sm:$0xff]
    %v4124 = vld [vmem:[#allocation7 + $0x150] sm:$0xff]
    %v4125 = vld [vmem:[#allocation7 + $0x158] sm:$0xff]
    %v4126 = vld [vmem:[#allocation7 + $0x160] sm:$0xff]
    %v4127 = vld [vmem:[#allocation7 + $0x168] sm:$0xff]
    %v4128 = vld [vmem:[#allocation7 + $0x170] sm:$0xff]
    %v4129 = vld [vmem:[#allocation7 + $0x178] sm:$0xff]
    %v4130 = vld [vmem:[#allocation7 + $0x180] sm:$0xff]
    %v4131 = vld [vmem:[#allocation7 + $0x188] sm:$0xff]
    %v4132 = vld [vmem:[#allocation7 + $0x190] sm:$0xff]
    %v4133 = vld [vmem:[#allocation7 + $0x198] sm:$0xff]
    %v4134 = vld [vmem:[#allocation7 + $0x1a0] sm:$0xff]
    %v4135 = vld [vmem:[#allocation7 + $0x1a8] sm:$0xff]
    %v4136 = vld [vmem:[#allocation7 + $0x1b0] sm:$0xff]
    %v4137 = vld [vmem:[#allocation7 + $0x1b8] sm:$0xff]
    %v4138 = vld [vmem:[#allocation7 + $0x1c0] sm:$0xff]
    %v4139 = vld [vmem:[#allocation7 + $0x1c8] sm:$0xff]
    %v4140 = vld [vmem:[#allocation7 + $0x1d0] sm:$0xff]
    %v4141 = vld [vmem:[#allocation7 + $0x1d8] sm:$0xff]
    %v4142 = vld [vmem:[#allocation7 + $0x1e0] sm:$0xff]
    %v4143 = vld [vmem:[#allocation7 + $0x1e8] sm:$0xff]
    %v4144 = vld [vmem:[#allocation7 + $0x1f0] sm:$0xff]
    %v4145 = vld [vmem:[#allocation7 + $0x1f8] sm:$0xff]
    %v4146 = vmul.f32 %v4018, %v4082
    %v4147 = vmul.f32 %v4019, %v4083
    %v4148 = vmul.f32 %v4020, %v4084
    %v4149 = vmul.f32 %v4021, %v4085
    %v4150 = vmul.f32 %v4022, %v4086
    %v4151 = vmul.f32 %v4023, %v4087
    %v4152 = vmul.f32 %v4024, %v4088
    %v4153 = vmul.f32 %v4025, %v4089
    %v4154 = vmul.f32 %v4026, %v4090
    %v4155 = vmul.f32 %v4027, %v4091
    %v4156 = vmul.f32 %v4028, %v4092
    %v4157 = vmul.f32 %v4029, %v4093
    %v4158 = vmul.f32 %v4030, %v4094
    %v4159 = vmul.f32 %v4031, %v4095
    %v4160 = vmul.f32 %v4032, %v4096
    %v4161 = vmul.f32 %v4033, %v4097
    %v4162 = vmul.f32 %v4034, %v4098
    %v4163 = vmul.f32 %v4035, %v4099
    %v4164 = vmul.f32 %v4036, %v4100
    %v4165 = vmul.f32 %v4037, %v4101
    %v4166 = vmul.f32 %v4038, %v4102
    %v4167 = vmul.f32 %v4039, %v4103
    %v4168 = vmul.f32 %v4040, %v4104
    %v4169 = vmul.f32 %v4041, %v4105
    %v4170 = vmul.f32 %v4042, %v4106
    %v4171 = vmul.f32 %v4043, %v4107
    %v4172 = vmul.f32 %v4044, %v4108
    %v4173 = vmul.f32 %v4045, %v4109
    %v4174 = vmul.f32 %v4046, %v4110
    %v4175 = vmul.f32 %v4047, %v4111
    %v4176 = vmul.f32 %v4048, %v4112
    %v4177 = vmul.f32 %v4049, %v4113
    %v4178 = vmul.f32 %v4050, %v4114
    %v4179 = vmul.f32 %v4051, %v4115
    %v4180 = vmul.f32 %v4052, %v4116
    %v4181 = vmul.f32 %v4053, %v4117
    %v4182 = vmul.f32 %v4054, %v4118
    %v4183 = vmul.f32 %v4055, %v4119
    %v4184 = vmul.f32 %v4056, %v4120
    %v4185 = vmul.f32 %v4057, %v4121
    %v4186 = vmul.f32 %v4058, %v4122
    %v4187 = vmul.f32 %v4059, %v4123
    %v4188 = vmul.f32 %v4060, %v4124
    %v4189 = vmul.f32 %v4061, %v4125
    %v4190 = vmul.f32 %v4062, %v4126
    %v4191 = vmul.f32 %v4063, %v4127
    %v4192 = vmul.f32 %v4064, %v4128
    %v4193 = vmul.f32 %v4065, %v4129
    %v4194 = vmul.f32 %v4066, %v4130
    %v4195 = vmul.f32 %v4067, %v4131
    %v4196 = vmul.f32 %v4068, %v4132
    %v4197 = vmul.f32 %v4069, %v4133
    %v4198 = vmul.f32 %v4070, %v4134
    %v4199 = vmul.f32 %v4071, %v4135
    %v4200 = vmul.f32 %v4072, %v4136
    %v4201 = vmul.f32 %v4073, %v4137
    %v4202 = vmul.f32 %v4074, %v4138
    %v4203 = vmul.f32 %v4075, %v4139
    %v4204 = vmul.f32 %v4076, %v4140
    %v4205 = vmul.f32 %v4077, %v4141
    %v4206 = vmul.f32 %v4078, %v4142
    %v4207 = vmul.f32 %v4079, %v4143
    %v4208 = vmul.f32 %v4080, %v4144
    %v4209 = vmul.f32 %v4081, %v4145
    %v4210 = vadd.f32 %v4146, %v4150
    %v4211 = vadd.f32 %v4210, %v4154
    %v4212 = vadd.f32 %v4211, %v4158
    %v4213 = vadd.f32 %v4212, %v4162
    %v4214 = vadd.f32 %v4213, %v4166
    %v4215 = vadd.f32 %v4214, %v4170
    %v4216 = vadd.f32 %v4215, %v4174
    %v4217 = vadd.f32 %v4216, %v4178
    %v4218 = vadd.f32 %v4217, %v4182
    %v4219 = vadd.f32 %v4218, %v4186
    %v4220 = vadd.f32 %v4219, %v4190
    %v4221 = vadd.f32 %v4220, %v4194
    %v4222 = vadd.f32 %v4221, %v4198
    %v4223 = vadd.f32 %v4222, %v4202
    %v4224 = vadd.f32 %v4223, %v4206
    %v4225 = vrot.slane %v4224, 4
    %v4226 = vadd.f32 %v4224, %v4225
    %v4227 = vrot.slane %v4226, 2
    %v4228 = vadd.f32 %v4226, %v4227
    %v4229 = vrot.slane %v4228, 1
    %v4230 = vadd.f32 %v4228, %v4229
    %v4231 = vadd.f32 %v4147, %v4151
    %v4232 = vadd.f32 %v4231, %v4155
    %v4233 = vadd.f32 %v4232, %v4159
    %v4234 = vadd.f32 %v4233, %v4163
    %v4235 = vadd.f32 %v4234, %v4167
    %v4236 = vadd.f32 %v4235, %v4171
    %v4237 = vadd.f32 %v4236, %v4175
    %v4238 = vadd.f32 %v4237, %v4179
    %v4239 = vadd.f32 %v4238, %v4183
    %v4240 = vadd.f32 %v4239, %v4187
    %v4241 = vadd.f32 %v4240, %v4191
    %v4242 = vadd.f32 %v4241, %v4195
    %v4243 = vadd.f32 %v4242, %v4199
    %v4244 = vadd.f32 %v4243, %v4203
    %v4245 = vadd.f32 %v4244, %v4207
    %v4246 = vrot.slane %v4245, 4
    %v4247 = vadd.f32 %v4245, %v4246
    %v4248 = vrot.slane %v4247, 2
    %v4249 = vadd.f32 %v4247, %v4248
    %v4250 = vrot.slane %v4249, 1
    %v4251 = vadd.f32 %v4249, %v4250
    %v4252 = vadd.f32 %v4148, %v4152
    %v4253 = vadd.f32 %v4252, %v4156
    %v4254 = vadd.f32 %v4253, %v4160
    %v4255 = vadd.f32 %v4254, %v4164
    %v4256 = vadd.f32 %v4255, %v4168
    %v4257 = vadd.f32 %v4256, %v4172
    %v4258 = vadd.f32 %v4257, %v4176
    %v4259 = vadd.f32 %v4258, %v4180
    %v4260 = vadd.f32 %v4259, %v4184
    %v4261 = vadd.f32 %v4260, %v4188
    %v4262 = vadd.f32 %v4261, %v4192
    %v4263 = vadd.f32 %v4262, %v4196
    %v4264 = vadd.f32 %v4263, %v4200
    %v4265 = vadd.f32 %v4264, %v4204
    %v4266 = vadd.f32 %v4265, %v4208
    %v4267 = vrot.slane %v4266, 4
    %v4268 = vadd.f32 %v4266, %v4267
    %v4269 = vrot.slane %v4268, 2
    %v4270 = vadd.f32 %v4268, %v4269
    %v4271 = vrot.slane %v4270, 1
    %v4272 = vadd.f32 %v4270, %v4271
    %v4273 = vadd.f32 %v4149, %v4153
    %v4274 = vadd.f32 %v4273, %v4157
    %v4275 = vadd.f32 %v4274, %v4161
    %v4276 = vadd.f32 %v4275, %v4165
    %v4277 = vadd.f32 %v4276, %v4169
    %v4278 = vadd.f32 %v4277, %v4173
    %v4279 = vadd.f32 %v4278, %v4177
    %v4280 = vadd.f32 %v4279, %v4181
    %v4281 = vadd.f32 %v4280, %v4185
    %v4282 = vadd.f32 %v4281, %v4189
    %v4283 = vadd.f32 %v4282, %v4193
    %v4284 = vadd.f32 %v4283, %v4197
    %v4285 = vadd.f32 %v4284, %v4201
    %v4286 = vadd.f32 %v4285, %v4205
    %v4287 = vadd.f32 %v4286, %v4209
    %v4288 = vrot.slane %v4287, 4
    %v4289 = vadd.f32 %v4287, %v4288
    %v4290 = vrot.slane %v4289, 2
    %v4291 = vadd.f32 %v4289, %v4290
    %v4292 = vrot.slane %v4291, 1
    %v4293 = vadd.f32 %v4291, %v4292
    %v4294 = vld [vmem:[#allocation9] sm:$0xff]
    %v4295 = vld [vmem:[#allocation9 + $0x8] sm:$0xff]
    %v4296 = vld [vmem:[#allocation9 + $0x10] sm:$0xff]
    %v4297 = vld [vmem:[#allocation9 + $0x18] sm:$0xff]
    %v4298 = vld [vmem:[#allocation9 + $0x20] sm:$0xff]
    %v4299 = vld [vmem:[#allocation9 + $0x28] sm:$0xff]
    %v4300 = vld [vmem:[#allocation9 + $0x30] sm:$0xff]
    %v4301 = vld [vmem:[#allocation9 + $0x38] sm:$0xff]
    %v4302 = vld [vmem:[#allocation9 + $0x40] sm:$0xff]
    %v4303 = vld [vmem:[#allocation9 + $0x48] sm:$0xff]
    %v4304 = vld [vmem:[#allocation9 + $0x50] sm:$0xff]
    %v4305 = vld [vmem:[#allocation9 + $0x58] sm:$0xff]
    %v4306 = vld [vmem:[#allocation9 + $0x60] sm:$0xff]
    %v4307 = vld [vmem:[#allocation9 + $0x68] sm:$0xff]
    %v4308 = vld [vmem:[#allocation9 + $0x70] sm:$0xff]
    %v4309 = vld [vmem:[#allocation9 + $0x78] sm:$0xff]
    %v4310 = vld [vmem:[#allocation9 + $0x80] sm:$0xff]
    %v4311 = vld [vmem:[#allocation9 + $0x88] sm:$0xff]
    %v4312 = vld [vmem:[#allocation9 + $0x90] sm:$0xff]
    %v4313 = vld [vmem:[#allocation9 + $0x98] sm:$0xff]
    %v4314 = vld [vmem:[#allocation9 + $0xa0] sm:$0xff]
    %v4315 = vld [vmem:[#allocation9 + $0xa8] sm:$0xff]
    %v4316 = vld [vmem:[#allocation9 + $0xb0] sm:$0xff]
    %v4317 = vld [vmem:[#allocation9 + $0xb8] sm:$0xff]
    %v4318 = vld [vmem:[#allocation9 + $0xc0] sm:$0xff]
    %v4319 = vld [vmem:[#allocation9 + $0xc8] sm:$0xff]
    %v4320 = vld [vmem:[#allocation9 + $0xd0] sm:$0xff]
    %v4321 = vld [vmem:[#allocation9 + $0xd8] sm:$0xff]
    %v4322 = vld [vmem:[#allocation9 + $0xe0] sm:$0xff]
    %v4323 = vld [vmem:[#allocation9 + $0xe8] sm:$0xff]
    %v4324 = vld [vmem:[#allocation9 + $0xf0] sm:$0xff]
    %v4325 = vld [vmem:[#allocation9 + $0xf8] sm:$0xff]
    %v4326 = vld [vmem:[#allocation9 + $0x100] sm:$0xff]
    %v4327 = vld [vmem:[#allocation9 + $0x108] sm:$0xff]
    %v4328 = vld [vmem:[#allocation9 + $0x110] sm:$0xff]
    %v4329 = vld [vmem:[#allocation9 + $0x118] sm:$0xff]
    %v4330 = vld [vmem:[#allocation9 + $0x120] sm:$0xff]
    %v4331 = vld [vmem:[#allocation9 + $0x128] sm:$0xff]
    %v4332 = vld [vmem:[#allocation9 + $0x130] sm:$0xff]
    %v4333 = vld [vmem:[#allocation9 + $0x138] sm:$0xff]
    %v4334 = vld [vmem:[#allocation9 + $0x140] sm:$0xff]
    %v4335 = vld [vmem:[#allocation9 + $0x148] sm:$0xff]
    %v4336 = vld [vmem:[#allocation9 + $0x150] sm:$0xff]
    %v4337 = vld [vmem:[#allocation9 + $0x158] sm:$0xff]
    %v4338 = vld [vmem:[#allocation9 + $0x160] sm:$0xff]
    %v4339 = vld [vmem:[#allocation9 + $0x168] sm:$0xff]
    %v4340 = vld [vmem:[#allocation9 + $0x170] sm:$0xff]
    %v4341 = vld [vmem:[#allocation9 + $0x178] sm:$0xff]
    %v4342 = vld [vmem:[#allocation9 + $0x180] sm:$0xff]
    %v4343 = vld [vmem:[#allocation9 + $0x188] sm:$0xff]
    %v4344 = vld [vmem:[#allocation9 + $0x190] sm:$0xff]
    %v4345 = vld [vmem:[#allocation9 + $0x198] sm:$0xff]
    %v4346 = vld [vmem:[#allocation9 + $0x1a0] sm:$0xff]
    %v4347 = vld [vmem:[#allocation9 + $0x1a8] sm:$0xff]
    %v4348 = vld [vmem:[#allocation9 + $0x1b0] sm:$0xff]
    %v4349 = vld [vmem:[#allocation9 + $0x1b8] sm:$0xff]
    %v4350 = vld [vmem:[#allocation9 + $0x1c0] sm:$0xff]
    %v4351 = vld [vmem:[#allocation9 + $0x1c8] sm:$0xff]
    %v4352 = vld [vmem:[#allocation9 + $0x1d0] sm:$0xff]
    %v4353 = vld [vmem:[#allocation9 + $0x1d8] sm:$0xff]
    %v4354 = vld [vmem:[#allocation9 + $0x1e0] sm:$0xff]
    %v4355 = vld [vmem:[#allocation9 + $0x1e8] sm:$0xff]
    %v4356 = vld [vmem:[#allocation9 + $0x1f0] sm:$0xff]
    %v4357 = vld [vmem:[#allocation9 + $0x1f8] sm:$0xff]
    %v4358 = vld [vmem:[#allocation3] sm:$0x1]
    %s4359 = vtos %v4358
    %v4360 = vstv %s4359
    %4361 = vmatprep.subr.mxu0 0.0
    %4362 = vmatpush1.msra.mxu0 %v4294
    %4363 = vmatprep.subr.mxu0 0.0
    %4364 = vmatpush1.msra.mxu0 %v4295
    %4365 = vmatprep.subr.mxu0 0.0
    %4366 = vmatpush1.msra.mxu0 %v4296
    %4367 = vmatprep.subr.mxu0 0.0
    %4368 = vmatpush1.msra.mxu0 %v4297
    %4369 = vmatprep.subr.mxu0 0.0
    %4370 = vmatpush1.msra.mxu0 %v4298
    %4371 = vmatprep.subr.mxu0 0.0
    %4372 = vmatpush1.msra.mxu0 %v4299
    %4373 = vmatprep.subr.mxu0 0.0
    %4374 = vmatpush1.msra.mxu0 %v4300
    %4375 = vmatprep.subr.mxu0 0.0
    %4376 = vmatpush1.msra.mxu0 %v4301
    %4377 = vmatprep.subr.mxu0 0.0
    %4378 = vmatpush1.msra.mxu0 %v4302
    %4379 = vmatprep.subr.mxu0 0.0
    %4380 = vmatpush1.msra.mxu0 %v4303
    %4381 = vmatprep.subr.mxu0 0.0
    %4382 = vmatpush1.msra.mxu0 %v4304
    %4383 = vmatprep.subr.mxu0 0.0
    %4384 = vmatpush1.msra.mxu0 %v4305
    %4385 = vmatprep.subr.mxu0 0.0
    %4386 = vmatpush1.msra.mxu0 %v4306
    %4387 = vmatprep.subr.mxu0 0.0
    %4388 = vmatpush1.msra.mxu0 %v4307
    %4389 = vmatprep.subr.mxu0 0.0
    %4390 = vmatpush1.msra.mxu0 %v4308
    %4391 = vmatprep.subr.mxu0 0.0
    %4392 = vmatpush1.msra.mxu0 %v4309
    %4393 = vmatprep.subr.mxu0 0.0
    %4394 = vmatpush1.msra.mxu0 %v4310
    %4395 = vmatprep.subr.mxu0 0.0
    %4396 = vmatpush1.msra.mxu0 %v4311
    %4397 = vmatprep.subr.mxu0 0.0
    %4398 = vmatpush1.msra.mxu0 %v4312
    %4399 = vmatprep.subr.mxu0 0.0
    %4400 = vmatpush1.msra.mxu0 %v4313
    %4401 = vmatprep.subr.mxu0 0.0
    %4402 = vmatpush1.msra.mxu0 %v4314
    %4403 = vmatprep.subr.mxu0 0.0
    %4404 = vmatpush1.msra.mxu0 %v4315
    %4405 = vmatprep.subr.mxu0 0.0
    %4406 = vmatpush1.msra.mxu0 %v4316
    %4407 = vmatprep.subr.mxu0 0.0
    %4408 = vmatpush1.msra.mxu0 %v4317
    %4409 = vmatprep.subr.mxu0 0.0
    %4410 = vmatpush1.msra.mxu0 %v4318
    %4411 = vmatprep.subr.mxu0 0.0
    %4412 = vmatpush1.msra.mxu0 %v4319
    %4413 = vmatprep.subr.mxu0 0.0
    %4414 = vmatpush1.msra.mxu0 %v4320
    %4415 = vmatprep.subr.mxu0 0.0
    %4416 = vmatpush1.msra.mxu0 %v4321
    %4417 = vmatprep.subr.mxu0 0.0
    %4418 = vmatpush1.msra.mxu0 %v4322
    %4419 = vmatprep.subr.mxu0 0.0
    %4420 = vmatpush1.msra.mxu0 %v4323
    %4421 = vmatprep.subr.mxu0 0.0
    %4422 = vmatpush1.msra.mxu0 %v4324
    %4423 = vmatprep.subr.mxu0 0.0
    %4424 = vmatpush1.msra.mxu0 %v4325
    %4425 = vmatprep.mubr.f32.mxu0 %v4251
    %4426 = vmatmul.mubr.f32.gmra.mrb[0].mxu0 %v4230
    %v4427 = vpop.f32.mrb[0].mxu0
    %v4428 = vadd.f32 %v4360, %v4427
    %v4429 = vpop.f32.mrb[0].mxu0
    %4430 = vdwg.mxu0
    %4431 = vmatprep.subr.mxu0 0.0
    %4432 = vmatpush1.msra.mxu0 %v4326
    %4433 = vmatprep.subr.mxu0 0.0
    %4434 = vmatpush1.msra.mxu0 %v4327
    %4435 = vmatprep.subr.mxu0 0.0
    %4436 = vmatpush1.msra.mxu0 %v4328
    %4437 = vmatprep.subr.mxu0 0.0
    %4438 = vmatpush1.msra.mxu0 %v4329
    %4439 = vmatprep.subr.mxu0 0.0
    %4440 = vmatpush1.msra.mxu0 %v4330
    %4441 = vmatprep.subr.mxu0 0.0
    %4442 = vmatpush1.msra.mxu0 %v4331
    %4443 = vmatprep.subr.mxu0 0.0
    %4444 = vmatpush1.msra.mxu0 %v4332
    %4445 = vmatprep.subr.mxu0 0.0
    %4446 = vmatpush1.msra.mxu0 %v4333
    %4447 = vmatprep.subr.mxu0 0.0
    %4448 = vmatpush1.msra.mxu0 %v4334
    %4449 = vmatprep.subr.mxu0 0.0
    %4450 = vmatpush1.msra.mxu0 %v4335
    %4451 = vmatprep.subr.mxu0 0.0
    %4452 = vmatpush1.msra.mxu0 %v4336
    %4453 = vmatprep.subr.mxu0 0.0
    %4454 = vmatpush1.msra.mxu0 %v4337
    %4455 = vmatprep.subr.mxu0 0.0
    %4456 = vmatpush1.msra.mxu0 %v4338
    %4457 = vmatprep.subr.mxu0 0.0
    %4458 = vmatpush1.msra.mxu0 %v4339
    %4459 = vmatprep.subr.mxu0 0.0
    %4460 = vmatpush1.msra.mxu0 %v4340
    %4461 = vmatprep.subr.mxu0 0.0
    %4462 = vmatpush1.msra.mxu0 %v4341
    %4463 = vmatprep.subr.mxu0 0.0
    %4464 = vmatpush1.msra.mxu0 %v4342
    %4465 = vmatprep.subr.mxu0 0.0
    %4466 = vmatpush1.msra.mxu0 %v4343
    %4467 = vmatprep.subr.mxu0 0.0
    %4468 = vmatpush1.msra.mxu0 %v4344
    %4469 = vmatprep.subr.mxu0 0.0
    %4470 = vmatpush1.msra.mxu0 %v4345
    %4471 = vmatprep.subr.mxu0 0.0
    %4472 = vmatpush1.msra.mxu0 %v4346
    %4473 = vmatprep.subr.mxu0 0.0
    %4474 = vmatpush1.msra.mxu0 %v4347
    %4475 = vmatprep.subr.mxu0 0.0
    %4476 = vmatpush1.msra.mxu0 %v4348
    %4477 = vmatprep.subr.mxu0 0.0
    %4478 = vmatpush1.msra.mxu0 %v4349
    %4479 = vmatprep.subr.mxu0 0.0
    %4480 = vmatpush1.msra.mxu0 %v4350
    %4481 = vmatprep.subr.mxu0 0.0
    %4482 = vmatpush1.msra.mxu0 %v4351
    %4483 = vmatprep.subr.mxu0 0.0
    %4484 = vmatpush1.msra.mxu0 %v4352
    %4485 = vmatprep.subr.mxu0 0.0
    %4486 = vmatpush1.msra.mxu0 %v4353
    %4487 = vmatprep.subr.mxu0 0.0
    %4488 = vmatpush1.msra.mxu0 %v4354
    %4489 = vmatprep.subr.mxu0 0.0
    %4490 = vmatpush1.msra.mxu0 %v4355
    %4491 = vmatprep.subr.mxu0 0.0
    %4492 = vmatpush1.msra.mxu0 %v4356
    %4493 = vmatprep.subr.mxu0 0.0
    %4494 = vmatpush1.msra.mxu0 %v4357
    %4495 = vmatprep.mubr.f32.mxu0 %v4293
    %4496 = vmatmul.mubr.f32.gmra.mrb[0].mxu0 %v4272
    %v4497 = vpop.f32.mrb[0].mxu0
    %v4498 = vadd.f32 %v4428, %v4497
    %v4499 = vpop.f32.mrb[0].mxu0
    %4500 = vdwg.mxu0
    %v4501 = vlaneseq
    %v4502 = vshrl.u32 %v4501, 7
    %v4503 = vsub.s32 0, %v4502
    %v4504 = vrot.slane %v4498, %v4503
    %4505 = vst [vmem:[#allocation10] sm:$0xff] %v4504
    // Predicated region
    $region46: #{tpu_custom_call.1} parent=1 // pred_check
      _
    $region47: #{tpu_custom_call.1} parent=1 // pred_check_branch
      %4507 = sbr.rel (0) target = $region49
    $region48: #{tpu_custom_call.1} parent=1 // pred_region
      %s4509 = ssub.s32 128, 128
      %4510 = vsyncadd [#allocation6], %s4509
      %s4512 = sshll.u32 [#allocation10], 4
      %s4513 = int_to_ptr.vmem [resolvable:$true] %s4512
      %4515 = dma.vmem_to_hbm [thread:$0]  %s4513, 128, %s8, [#allocation6]
    $region49: #{tpu_custom_call.1} parent=1 // pred_fallthru
      _
    // Predicated region
    $region50: #{tpu_custom_call.1} parent=1 // pred_check
      _
    $region51: #{tpu_custom_call.1} parent=1 // pred_check_branch
      %4517 = sbr.rel (0) target = $region53
    $region52: #{tpu_custom_call.1} parent=1 // pred_region
      %4518 = dma.done [#allocation6], 128
    $region53: #{tpu_custom_call.1} parent=1 // pred_fallthru
      _
    %4519 = vsyncpa [#allocation5], 1
    %4520 = vsyncpa [#allocation8], 1
    %4521 = vsyncpa [#allocation6], 1

</llo_original>
